<compile_context>
chip_gen: v6e
topology: v6e:2x2x1
jax: 0.10.0
libtpu: 0.0.40
codegen_flags: <defaults>
</compile_context>

<pallas_src>
import functools
import math

import jax
import jax.numpy as jnp
from jax.experimental import pallas as pl
from jax.experimental.pallas import tpu as pltpu


# ----------------------------------------------------------------------------- #
# Row-tiled linear projection kernel (y = x @ Wt + b, Wt pre-transposed (Din, Dout))
# ----------------------------------------------------------------------------- #
def _linear_kernel(x_ref, w_ref, b_ref, o_ref):
    o_ref[...] = (
        jnp.dot(x_ref[...].astype(jnp.bfloat16), w_ref[...],
                preferred_element_type=jnp.float32)
        + b_ref[...]
    )


def linear(x, w_t, b, *, block_rows=256):
    """PyTorch nn.Linear semantics with a pre-transposed weight (Din, Dout)."""
    din, dout = w_t.shape
    x2 = x.reshape(-1, din).astype(jnp.float32)
    n = x2.shape[0]
    bn = min(block_rows, n)
    grid = (pl.cdiv(n, bn),)
    out = pl.pallas_call(
        _linear_kernel,
        out_shape=jax.ShapeDtypeStruct((n, dout), jnp.float32),
        grid=grid,
        in_specs=[
            pl.BlockSpec((bn, din), lambda i: (i, 0)),
            pl.BlockSpec((din, dout), lambda i: (0, 0)),   # weight stays resident
            pl.BlockSpec((1, dout), lambda i: (0, 0)),
        ],
        out_specs=pl.BlockSpec((bn, dout), lambda i: (i, 0)),
        compiler_params=pltpu.CompilerParams(dimension_semantics=("parallel",)),
    )(x2, w_t.astype(jnp.bfloat16), b.reshape(1, dout).astype(jnp.float32))
    return out.reshape(x.shape[:-1] + (dout,))


# ----------------------------------------------------------------------------- #
# Fused KG_MHA_FF / MHA_FF block kernel (one grid step per batch element)
#   x  <- x + MHA(LN0(x), feats, feats, bias)
#   x  <- x + W2 @ relu(W1 @ LN1(x))
# ----------------------------------------------------------------------------- #
def _kg_block_kernel(x_ref, f_ref, bias_ref,
                     ln0g_ref, ln0b_ref,
                     wq_ref, bq_ref, wkv_ref, bkv_ref, wo_ref, bo_ref,
                     ln1g_ref, ln1b_ref,
                     w1_ref, b1_ref, w2_ref, b2_ref,
                     o_ref, *, num_heads, d_k, d_model):
    x = x_ref[0]                                     # (Lq, D) f32
    feats = f_ref[0]                                 # (Lk, D) f32
    lq = x.shape[0]
    lk = feats.shape[0]

    # --- LayerNorm(x) (query side only; feats enter the attention un-normed) ---
    mu0 = jnp.mean(x, axis=-1, keepdims=True)
    var0 = jnp.mean(jnp.square(x - mu0), axis=-1, keepdims=True)
    ln0 = (x - mu0) * jax.lax.rsqrt(var0 + 1e-6) * ln0g_ref[...] + ln0b_ref[...]

    # --- Q projection (wide, D-out) and fused K|V projection (2D-out) on the MXU ---
    scale = 1.0 / math.sqrt(d_k)
    q_full = (jnp.dot(ln0.astype(jnp.bfloat16), wq_ref[...],
                      preferred_element_type=jnp.float32) + bq_ref[...]) * scale
    kv = jnp.dot(feats.astype(jnp.bfloat16), wkv_ref[...],
                 preferred_element_type=jnp.float32) + bkv_ref[...]
    q_bf = q_full.astype(jnp.bfloat16)
    k_bf = kv[:, :d_model].astype(jnp.bfloat16)
    v_bf = kv[:, d_model:].astype(jnp.bfloat16)

    bias_full = jnp.broadcast_to(bias_ref[...], (lq, lk))   # hoisted out of head loop
    wo = wo_ref[...]                                         # (D, D) bf16

    # --- per-head attention (static unroll); accumulate straight into the out-proj ---
    attn = jnp.zeros((lq, d_model), jnp.float32)
    for h in range(num_heads):
        lo = h * d_k
        qh = q_bf[:, lo:lo + d_k]
        kh = k_bf[:, lo:lo + d_k]
        vh = v_bf[:, lo:lo + d_k]
        s = jax.lax.dot_general(qh, kh, (((1,), (1,)), ((), ())),
                                preferred_element_type=jnp.float32) + bias_full
        s = s - jnp.max(s, axis=-1, keepdims=True)
        p = jnp.exp(s)
        p = p * pl.reciprocal(jnp.sum(p, axis=-1, keepdims=True), approx=True)
        ctx = jnp.dot(p.astype(jnp.bfloat16), vh,
                      preferred_element_type=jnp.float32)           # (Lq, d_k)
        attn = attn + jnp.dot(ctx.astype(jnp.bfloat16), wo[lo:lo + d_k, :],
                              preferred_element_type=jnp.float32)   # (Lq, D)

    x1 = x + attn + bo_ref[...]                      # residual 1 (dropout = identity)

    # --- LN1 + PositionwiseFeedForward + residual 2 ---
    mu1 = jnp.mean(x1, axis=-1, keepdims=True)
    var1 = jnp.mean(jnp.square(x1 - mu1), axis=-1, keepdims=True)
    ln1 = (x1 - mu1) * jax.lax.rsqrt(var1 + 1e-6) * ln1g_ref[...] + ln1b_ref[...]
    hmid = jnp.maximum(
        jnp.dot(ln1.astype(jnp.bfloat16), w1_ref[...],
                preferred_element_type=jnp.float32) + b1_ref[...], 0.0)
    out = x1 + jnp.dot(hmid.astype(jnp.bfloat16), w2_ref[...],
                       preferred_element_type=jnp.float32) + b2_ref[...]
    o_ref[0] = out


def kg_mha_ff_block(x, feats, bias, p, num_heads):
    """KG_MHA_FF / MHA_FF block, fully fused in one pallas_call.

    feats may be (B, Lk, D) (per-batch) or (Lk, D) (shared across the batch, e.g. the
    projected chest-KG entity embeddings) — the shared case is NOT broadcast in HBM,
    the BlockSpec index_map simply reuses block 0 for every grid step.
    """
    B, Lq, D = x.shape
    if feats.ndim == 2:
        feats = feats[None]                          # (1, Lk, D), shared
    Lk = feats.shape[1]
    d_k = D // num_heads
    d_ff = p["w1_t"].shape[1]
    if bias is None:
        bias = jnp.zeros((Lk,), jnp.float32)

    shared_feats = feats.shape[0] == 1
    f_index = (lambda b: (0, 0, 0)) if shared_feats else (lambda b: (b, 0, 0))

    kernel = functools.partial(_kg_block_kernel,
                               num_heads=num_heads, d_k=d_k, d_model=D)
    bf16 = jnp.bfloat16
    return pl.pallas_call(
        kernel,
        out_shape=jax.ShapeDtypeStruct((B, Lq, D), jnp.float32),
        grid=(B,),
        in_specs=[
            pl.BlockSpec((1, Lq, D), lambda b: (b, 0, 0)),       # x
            pl.BlockSpec((1, Lk, D), f_index),                   # feats
            pl.BlockSpec((1, Lk), lambda b: (0, 0)),             # relation bias
            pl.BlockSpec((1, D), lambda b: (0, 0)),              # ln0 gamma
            pl.BlockSpec((1, D), lambda b: (0, 0)),              # ln0 beta
            pl.BlockSpec((D, D), lambda b: (0, 0)),              # Wq^T
            pl.BlockSpec((1, D), lambda b: (0, 0)),              # bq
            pl.BlockSpec((D, 2 * D), lambda b: (0, 0)),          # [Wk^T | Wv^T]
            pl.BlockSpec((1, 2 * D), lambda b: (0, 0)),          # [bk | bv]
            pl.BlockSpec((D, D), lambda b: (0, 0)),              # Wo^T
            pl.BlockSpec((1, D), lambda b: (0, 0)),              # bo
            pl.BlockSpec((1, D), lambda b: (0, 0)),              # ln1 gamma
            pl.BlockSpec((1, D), lambda b: (0, 0)),              # ln1 beta
            pl.BlockSpec((D, d_ff), lambda b: (0, 0)),           # W1^T
            pl.BlockSpec((1, d_ff), lambda b: (0, 0)),           # b1
            pl.BlockSpec((d_ff, D), lambda b: (0, 0)),           # W2^T
            pl.BlockSpec((1, D), lambda b: (0, 0)),              # b2
        ],
        out_specs=pl.BlockSpec((1, Lq, D), lambda b: (b, 0, 0)),
        compiler_params=pltpu.CompilerParams(dimension_semantics=("parallel",)),
    )(x.astype(jnp.float32), feats.astype(jnp.float32),
      bias.reshape(1, Lk).astype(jnp.float32),
      p["ln0_g"].reshape(1, D), p["ln0_b"].reshape(1, D),
      p["wq_t"].astype(bf16), p["bq"].reshape(1, D),
      p["wkv_t"].astype(bf16), p["bkv"].reshape(1, 2 * D),
      p["wo_t"].astype(bf16), p["bo"].reshape(1, D),
      p["ln1_g"].reshape(1, D), p["ln1_b"].reshape(1, D),
      p["w1_t"].astype(bf16), p["b1"].reshape(1, d_ff),
      p["w2_t"].astype(bf16), p["b2"].reshape(1, D))


# ----------------------------------------------------------------------------- #
# Module-level composition (glue in plain JAX, compute in Pallas)
# ----------------------------------------------------------------------------- #
def kgmodel_vwmha_forward(params, att_feats_raw, fc_feats_raw, knowledges, num_heads):
    # TODO(synk): visual_extractor (ResNet) omitted — att_feats_raw / fc_feats_raw are its outputs.
    att_feats = linear(att_feats_raw, params["proj_v2_w_t"], params["proj_v2_b"])   # (B, La, Dm)
    fc_feats = linear(fc_feats_raw, params["proj_v1_w_t"], params["proj_v1_b"])     # (B, Lq, Dm)

    # entity / relation knowledge-graph projections
    entity_embedding = linear(params["chest_embedding"],
                              params["proj_entity_w_t"], params["proj_entity_b"])   # (Ne, Dm)
    # proj_relation has Dout=1: masked-store-only as a Pallas output, so do it in plain JAX.
    bias = (jnp.dot(params["relation_embedding"], params["proj_relation_w_t"])
            + params["proj_relation_b"]).squeeze(-1)                                # (Ne,)

    # clinic_embed = self.attention(fc_feats, entity_embedding, bias=bias)
    clinic_embed = kg_mha_ff_block(fc_feats, entity_embedding, bias,
                                   params["attention"], num_heads)                  # (B, Lq, Dm)

    # knowledges -> embedding lookup -> bert projection
    # TODO(synk): at real vocab sizes gather rows inside the proj_bert kernel via scalar prefetch.
    know = jnp.take(params["know_ent_embeddings"], knowledges, axis=0)              # (B, Nk, 768)
    know = linear(know, params["proj_bert_w_t"], params["proj_bert_b"])             # (B, Nk, Dm)

    # know_embed = self.know_att(att_feats, knowledges)
    know_embed = kg_mha_ff_block(att_feats, know, None,
                                 params["know_att"], num_heads)                     # (B, La, Dm)

    att_feats_fused = jnp.concatenate([att_feats, clinic_embed, know_embed], axis=1)
    # TODO(synk): TransformerModel generator (encoder-decoder) not implemented; return fused features.
    return att_feats_fused, fc_feats


# ----------------------------------------------------------------------------- #
# Deterministic parameter construction (PyTorch-convention init, host-side pre-transpose)
# ----------------------------------------------------------------------------- #
def _kaiming(key, dout, din):
    return jax.random.normal(key, (dout, din), jnp.float32) * math.sqrt(2.0 / din)


def make_attn_block_params(key, d_model, d_ff):
    ks = jax.random.split(key, 6)
    wq = _kaiming(ks[0], d_model, d_model)
    wk = _kaiming(ks[1], d_model, d_model)
    wv = _kaiming(ks[2], d_model, d_model)
    wo = _kaiming(ks[3], d_model, d_model)
    w1 = _kaiming(ks[4], d_ff, d_model)
    w2 = _kaiming(ks[5], d_model, d_ff)
    return {
        "ln0_g": jnp.ones((d_model,), jnp.float32),
        "ln0_b": jnp.zeros((d_model,), jnp.float32),
        "wq_t": wq.T,                                              # (D, D)
        "bq": jnp.zeros((d_model,), jnp.float32),
        "wkv_t": jnp.concatenate([wk.T, wv.T], axis=1),            # (D, 2D) fused K|V
        "bkv": jnp.zeros((2 * d_model,), jnp.float32),
        "wo_t": wo.T,                                              # (D, D)
        "bo": jnp.zeros((d_model,), jnp.float32),
        "ln1_g": jnp.ones((d_model,), jnp.float32),
        "ln1_b": jnp.zeros((d_model,), jnp.float32),
        "w1_t": w1.T,                                              # (D, d_ff)
        "b1": jnp.zeros((d_ff,), jnp.float32),
        "w2_t": w2.T,                                              # (d_ff, D)
        "b2": jnp.zeros((d_model,), jnp.float32),
    }


def make_params(key, *, d_model, d_ff, d_vf, kg_dim, n_entities, vocab_know, bert_dim):
    ks = jax.random.split(key, 12)
    return {
        "proj_v1_w_t": _kaiming(ks[0], d_model, d_vf).T,
        "proj_v1_b": jnp.zeros((d_model,), jnp.float32),
        "proj_v2_w_t": _kaiming(ks[1], d_model, d_vf).T,
        "proj_v2_b": jnp.zeros((d_model,), jnp.float32),
        "proj_entity_w_t": _kaiming(ks[2], d_model, kg_dim).T,
        "proj_entity_b": jnp.zeros((d_model,), jnp.float32),
        "proj_relation_w_t": _kaiming(ks[3], 1, kg_dim).T,          # (kg_dim, 1)
        "proj_relation_b": jnp.zeros((1,), jnp.float32),
        "proj_bert_w_t": _kaiming(ks[4], d_model, bert_dim).T,
        "proj_bert_b": jnp.zeros((d_model,), jnp.float32),
        "chest_embedding": jax.random.normal(ks[5], (n_entities, kg_dim), jnp.float32) * 0.1,
        "relation_embedding": jax.random.normal(ks[6], (n_entities, kg_dim), jnp.float32) * 0.1,
        "know_ent_embeddings": jax.random.normal(ks[7], (vocab_know, bert_dim), jnp.float32) * 0.1,
        "attention": make_attn_block_params(ks[8], d_model, d_ff),
        "know_att": make_attn_block_params(ks[9], d_model, d_ff),
    }


# ----------------------------------------------------------------------------- #
if __name__ == "__main__":
    # small shapes consistent with the module's forward (lane-dense D_MODEL = 128)
    B = 2            # batch
    P = 4            # patches per view (iu_xray: two views -> att seq = 2*P)
    L_att = 2 * P    # att_feats sequence length
    L_fc = 2         # fc_feats sequence length (two stacked view-level features)
    D_VF = 128       # visual feature dim
    D_MODEL = 128
    D_FF = 256
    HEADS = 4
    N_ENT = 16       # chest KG entities
    KG_DIM = 400     # KGModel_v1.KG_ENTITY_DIM
    BERT_DIM = 768   # pretrained knowledge-entity embedding dim
    VOCAB_KNOW = 64
    N_KNOW = 8

    root = jax.random.PRNGKey(0)
    k_param, k_att, k_fc, k_know = jax.random.split(root, 4)

    params = make_params(k_param, d_model=D_MODEL, d_ff=D_FF, d_vf=D_VF, kg_dim=KG_DIM,
                         n_entities=N_ENT, vocab_know=VOCAB_KNOW, bert_dim=BERT_DIM)

    # synthetic visual-extractor outputs and knowledge indices
    att_feats_raw = jax.random.normal(k_att, (B, L_att, D_VF), jnp.float32)
    fc_feats_raw = jax.random.normal(k_fc, (B, L_fc, D_VF), jnp.float32)
    knowledges = jax.random.randint(k_know, (B, N_KNOW), 1, VOCAB_KNOW)

    fwd = jax.jit(functools.partial(kgmodel_vwmha_forward, num_heads=HEADS))
    att_fused, fc_feats = fwd(params, att_feats_raw, fc_feats_raw, knowledges)
    jax.block_until_ready((att_fused, fc_feats))

    assert att_fused.shape == (B, L_att + L_fc + L_att, D_MODEL), att_fused.shape
    assert fc_feats.shape == (B, L_fc, D_MODEL), fc_feats.shape
    assert bool(jnp.all(jnp.isfinite(att_fused)))
    assert bool(jnp.all(jnp.isfinite(fc_feats)))
    print("KERNEL_OK")
</pallas_src>

<mosaic_0001>
module attributes {stable_mosaic.version = 11 : i64} {
  func.func @_linear_kernel(%arg0: i32, %arg1: memref<16x128xf32, #tpu.memory_space<vmem>>, %arg2: memref<128x128xbf16, #tpu.memory_space<vmem>>, %arg3: memref<1x128xf32, #tpu.memory_space<vmem>>, %arg4: memref<16x128xf32, #tpu.memory_space<vmem>>) attributes {dimension_semantics = [#tpu.dimension_semantics<parallel>], iteration_bounds = array<i64: 1>, scalar_prefetch = 0 : i64, scratch_operands = 0 : i64, tpu.core_type = #tpu.core_type<tc>, window_params = [{transform_indices = @transform_0, window_bounds = array<i64: 16, 128>}, {pipeline_mode = #tpu.pipeline_mode<synchronous>, transform_indices = @transform_1, window_bounds = array<i64: 128, 128>}, {pipeline_mode = #tpu.pipeline_mode<synchronous>, transform_indices = @transform_2, window_bounds = array<i64: 1, 128>}, {transform_indices = @transform_3, window_bounds = array<i64: 16, 128>}]} {
    %c0 = arith.constant 0 : index
    %c0_0 = arith.constant 0 : index
    %0 = vector.load %arg1[%c0, %c0_0] : memref<16x128xf32, #tpu.memory_space<vmem>>, vector<16x128xf32>
    %1 = arith.truncf %0 : vector<16x128xf32> to vector<16x128xbf16>
    %c0_1 = arith.constant 0 : index
    %c0_2 = arith.constant 0 : index
    %2 = vector.load %arg2[%c0_1, %c0_2] : memref<128x128xbf16, #tpu.memory_space<vmem>>, vector<128x128xbf16>
    %cst = arith.constant dense<0.000000e+00> : vector<16x128xf32>
    %3 = tpu.matmul %1, %2, %cst {dimension_numbers = #tpu.dot_dimension_numbers<[1], [0], [0], [1], [0, 0, 1, 1], [], []>} : vector<16x128xbf16>, vector<128x128xbf16>, vector<16x128xf32> -> vector<16x128xf32>
    %c0_3 = arith.constant 0 : index
    %c0_4 = arith.constant 0 : index
    %4 = vector.load %arg3[%c0_3, %c0_4] : memref<1x128xf32, #tpu.memory_space<vmem>>, vector<1x128xf32>
    %5 = vector.broadcast %4 : vector<1x128xf32> to vector<16x128xf32>
    %6 = arith.addf %3, %5 : vector<16x128xf32>
    %c0_5 = arith.constant 0 : index
    %c0_6 = arith.constant 0 : index
    %7 = vector.load %arg4[%c0_5, %c0_6] : memref<16x128xf32, #tpu.memory_space<vmem>>, vector<16x128xf32>
    tpu.vector_store %arg4[%c0_5, %c0_6], %6 {strides = array<i32>} : memref<16x128xf32, #tpu.memory_space<vmem>>, vector<16x128xf32>,
    return
  }
  func.func @transform_0(%arg0: i32) -> (i32, i32) {
    %c0_i32 = arith.constant 0 : i32
    %c0_i32_0 = arith.constant 0 : i32
    return %arg0, %c0_i32 : i32, i32
  }
  func.func @transform_1(%arg0: i32) -> (i32, i32) {
    %c0_i32 = arith.constant 0 : i32
    %c0_i32_0 = arith.constant 0 : i32
    %c0_i32_1 = arith.constant 0 : i32
    return %c0_i32, %c0_i32_0 : i32, i32
  }
  func.func @transform_2(%arg0: i32) -> (i32, i32) {
    %c0_i32 = arith.constant 0 : i32
    %c0_i32_0 = arith.constant 0 : i32
    %c0_i32_1 = arith.constant 0 : i32
    return %c0_i32, %c0_i32_0 : i32, i32
  }
  func.func @transform_3(%arg0: i32) -> (i32, i32) {
    %c0_i32 = arith.constant 0 : i32
    %c0_i32_0 = arith.constant 0 : i32
    return %arg0, %c0_i32 : i32, i32
  }
}

module attributes {stable_mosaic.version = 11 : i64} {
  func.func @_linear_kernel(%arg0: i32, %arg1: memref<16x768xf32, #tpu.memory_space<vmem>>, %arg2: memref<768x128xbf16, #tpu.memory_space<vmem>>, %arg3: memref<1x128xf32, #tpu.memory_space<vmem>>, %arg4: memref<16x128xf32, #tpu.memory_space<vmem>>) attributes {dimension_semantics = [#tpu.dimension_semantics<parallel>], iteration_bounds = array<i64: 1>, scalar_prefetch = 0 : i64, scratch_operands = 0 : i64, tpu.core_type = #tpu.core_type<tc>, window_params = [{transform_indices = @transform_0, window_bounds = array<i64: 16, 768>}, {pipeline_mode = #tpu.pipeline_mode<synchronous>, transform_indices = @transform_1, window_bounds = array<i64: 768, 128>}, {pipeline_mode = #tpu.pipeline_mode<synchronous>, transform_indices = @transform_2, window_bounds = array<i64: 1, 128>}, {transform_indices = @transform_3, window_bounds = array<i64: 16, 128>}]} {
    %c0 = arith.constant 0 : index
    %c0_0 = arith.constant 0 : index
    %0 = vector.load %arg1[%c0, %c0_0] : memref<16x768xf32, #tpu.memory_space<vmem>>, vector<16x768xf32>
    %1 = arith.truncf %0 : vector<16x768xf32> to vector<16x768xbf16>
    %c0_1 = arith.constant 0 : index
    %c0_2 = arith.constant 0 : index
    %2 = vector.load %arg2[%c0_1, %c0_2] : memref<768x128xbf16, #tpu.memory_space<vmem>>, vector<768x128xbf16>
    %cst = arith.constant dense<0.000000e+00> : vector<16x128xf32>
    %3 = tpu.matmul %1, %2, %cst {dimension_numbers = #tpu.dot_dimension_numbers<[1], [0], [0], [1], [0, 0, 1, 1], [], []>} : vector<16x768xbf16>, vector<768x128xbf16>, vector<16x128xf32> -> vector<16x128xf32>
    %c0_3 = arith.constant 0 : index
    %c0_4 = arith.constant 0 : index
    %4 = vector.load %arg3[%c0_3, %c0_4] : memref<1x128xf32, #tpu.memory_space<vmem>>, vector<1x128xf32>
    %5 = vector.broadcast %4 : vector<1x128xf32> to vector<16x128xf32>
    %6 = arith.addf %3, %5 : vector<16x128xf32>
    %c0_5 = arith.constant 0 : index
    %c0_6 = arith.constant 0 : index
    %7 = vector.load %arg4[%c0_5, %c0_6] : memref<16x128xf32, #tpu.memory_space<vmem>>, vector<16x128xf32>
    tpu.vector_store %arg4[%c0_5, %c0_6], %6 {strides = array<i32>} : memref<16x128xf32, #tpu.memory_space<vmem>>, vector<16x128xf32>,
    return
  }
  func.func @transform_0(%arg0: i32) -> (i32, i32) {
    %c0_i32 = arith.constant 0 : i32
    %c0_i32_0 = arith.constant 0 : i32
    return %arg0, %c0_i32 : i32, i32
  }
  func.func @transform_1(%arg0: i32) -> (i32, i32) {
    %c0_i32 = arith.constant 0 : i32
    %c0_i32_0 = arith.constant 0 : i32
    %c0_i32_1 = arith.constant 0 : i32
    return %c0_i32, %c0_i32_0 : i32, i32
  }
  func.func @transform_2(%arg0: i32) -> (i32, i32) {
    %c0_i32 = arith.constant 0 : i32
    %c0_i32_0 = arith.constant 0 : i32
    %c0_i32_1 = arith.constant 0 : i32
    return %c0_i32, %c0_i32_0 : i32, i32
  }
  func.func @transform_3(%arg0: i32) -> (i32, i32) {
    %c0_i32 = arith.constant 0 : i32
    %c0_i32_0 = arith.constant 0 : i32
    return %arg0, %c0_i32 : i32, i32
  }
}

module attributes {stable_mosaic.version = 11 : i64} {
  func.func @_kg_block_kernel(%arg0: i32, %arg1: memref<1x8x128xf32, #tpu.memory_space<vmem>>, %arg2: memref<1x8x128xf32, #tpu.memory_space<vmem>>, %arg3: memref<1x8xf32, #tpu.memory_space<vmem>>, %arg4: memref<1x128xf32, #tpu.memory_space<vmem>>, %arg5: memref<1x128xf32, #tpu.memory_space<vmem>>, %arg6: memref<128x128xbf16, #tpu.memory_space<vmem>>, %arg7: memref<1x128xf32, #tpu.memory_space<vmem>>, %arg8: memref<128x256xbf16, #tpu.memory_space<vmem>>, %arg9: memref<1x256xf32, #tpu.memory_space<vmem>>, %arg10: memref<128x128xbf16, #tpu.memory_space<vmem>>, %arg11: memref<1x128xf32, #tpu.memory_space<vmem>>, %arg12: memref<1x128xf32, #tpu.memory_space<vmem>>, %arg13: memref<1x128xf32, #tpu.memory_space<vmem>>, %arg14: memref<128x256xbf16, #tpu.memory_space<vmem>>, %arg15: memref<1x256xf32, #tpu.memory_space<vmem>>, %arg16: memref<256x128xbf16, #tpu.memory_space<vmem>>, %arg17: memref<1x128xf32, #tpu.memory_space<vmem>>, %arg18: memref<1x8x128xf32, #tpu.memory_space<vmem>>) attributes {dimension_semantics = [#tpu.dimension_semantics<parallel>], iteration_bounds = array<i64: 2>, scalar_prefetch = 0 : i64, scratch_operands = 0 : i64, tpu.core_type = #tpu.core_type<tc>, window_params = [{transform_indices = @transform_0, window_bounds = array<i64: 1, 8, 128>}, {transform_indices = @transform_1, window_bounds = array<i64: 1, 8, 128>}, {pipeline_mode = #tpu.pipeline_mode<synchronous>, transform_indices = @transform_2, window_bounds = array<i64: 1, 8>}, {pipeline_mode = #tpu.pipeline_mode<synchronous>, transform_indices = @transform_3, window_bounds = array<i64: 1, 128>}, {pipeline_mode = #tpu.pipeline_mode<synchronous>, transform_indices = @transform_4, window_bounds = array<i64: 1, 128>}, {pipeline_mode = #tpu.pipeline_mode<synchronous>, transform_indices = @transform_5, window_bounds = array<i64: 128, 128>}, {pipeline_mode = #tpu.pipeline_mode<synchronous>, transform_indices = @transform_6, window_bounds = array<i64: 1, 128>}, {pipeline_mode = #tpu.pipeline_mode<synchronous>, transform_indices = @transform_7, window_bounds = array<i64: 128, 256>}, {pipeline_mode = #tpu.pipeline_mode<synchronous>, transform_indices = @transform_8, window_bounds = array<i64: 1, 256>}, {pipeline_mode = #tpu.pipeline_mode<synchronous>, transform_indices = @transform_9, window_bounds = array<i64: 128, 128>}, {pipeline_mode = #tpu.pipeline_mode<synchronous>, transform_indices = @transform_10, window_bounds = array<i64: 1, 128>}, {pipeline_mode = #tpu.pipeline_mode<synchronous>, transform_indices = @transform_11, window_bounds = array<i64: 1, 128>}, {pipeline_mode = #tpu.pipeline_mode<synchronous>, transform_indices = @transform_12, window_bounds = array<i64: 1, 128>}, {pipeline_mode = #tpu.pipeline_mode<synchronous>, transform_indices = @transform_13, window_bounds = array<i64: 128, 256>}, {pipeline_mode = #tpu.pipeline_mode<synchronous>, transform_indices = @transform_14, window_bounds = array<i64: 1, 256>}, {pipeline_mode = #tpu.pipeline_mode<synchronous>, transform_indices = @transform_15, window_bounds = array<i64: 256, 128>}, {pipeline_mode = #tpu.pipeline_mode<synchronous>, transform_indices = @transform_16, window_bounds = array<i64: 1, 128>}, {transform_indices = @transform_17, window_bounds = array<i64: 1, 8, 128>}]} {
    %c0 = arith.constant 0 : index
    %c0_0 = arith.constant 0 : index
    %c0_1 = arith.constant 0 : index
    %0 = vector.load %arg1[%c0, %c0_0, %c0_1] : memref<1x8x128xf32, #tpu.memory_space<vmem>>, vector<1x8x128xf32>
    %1 = vector.shape_cast %0 : vector<1x8x128xf32> to vector<8x128xf32>
    %c0_2 = arith.constant 0 : index
    %c0_3 = arith.constant 0 : index
    %c0_4 = arith.constant 0 : index
    %2 = vector.load %arg2[%c0_2, %c0_3, %c0_4] : memref<1x8x128xf32, #tpu.memory_space<vmem>>, vector<1x8x128xf32>
    %3 = vector.shape_cast %2 : vector<1x8x128xf32> to vector<8x128xf32>
    %cst = arith.constant dense<0.000000e+00> : vector<8xf32>
    %4 = vector.multi_reduction <add>, %1, %cst [1] : vector<8x128xf32> to vector<8xf32>
    %5 = vector.shape_cast %4 : vector<8xf32> to vector<8x1xf32>
    %cst_5 = arith.constant 1.280000e+02 : f32
    %6 = vector.broadcast %cst_5 : f32 to vector<8x1xf32>
    %7 = arith.divf %5, %6 : vector<8x1xf32>
    %8 = vector.broadcast %7 : vector<8x1xf32> to vector<8x128xf32>
    %9 = arith.subf %1, %8 : vector<8x128xf32>
    %10 = arith.mulf %9, %9 : vector<8x128xf32>
    %cst_6 = arith.constant dense<0.000000e+00> : vector<8xf32>
    %11 = vector.multi_reduction <add>, %10, %cst_6 [1] : vector<8x128xf32> to vector<8xf32>
    %12 = vector.shape_cast %11 : vector<8xf32> to vector<8x1xf32>
    %cst_7 = arith.constant 1.280000e+02 : f32
    %13 = vector.broadcast %cst_7 : f32 to vector<8x1xf32>
    %14 = arith.divf %12, %13 : vector<8x1xf32>
    %15 = vector.broadcast %7 : vector<8x1xf32> to vector<8x128xf32>
    %16 = arith.subf %1, %15 : vector<8x128xf32>
    %cst_8 = arith.constant 9.99999997E-7 : f32
    %17 = vector.broadcast %cst_8 : f32 to vector<8x1xf32>
    %18 = arith.addf %14, %17 : vector<8x1xf32>
    %19 = math.rsqrt %18 : vector<8x1xf32>
    %20 = vector.broadcast %19 : vector<8x1xf32> to vector<8x128xf32>
    %21 = arith.mulf %16, %20 : vector<8x128xf32>
    %c0_9 = arith.constant 0 : index
    %c0_10 = arith.constant 0 : index
    %22 = vector.load %arg4[%c0_9, %c0_10] : memref<1x128xf32, #tpu.memory_space<vmem>>, vector<1x128xf32>
    %23 = vector.broadcast %22 : vector<1x128xf32> to vector<8x128xf32>
    %24 = arith.mulf %21, %23 : vector<8x128xf32>
    %c0_11 = arith.constant 0 : index
    %c0_12 = arith.constant 0 : index
    %25 = vector.load %arg5[%c0_11, %c0_12] : memref<1x128xf32, #tpu.memory_space<vmem>>, vector<1x128xf32>
    %26 = vector.broadcast %25 : vector<1x128xf32> to vector<8x128xf32>
    %27 = arith.addf %24, %26 : vector<8x128xf32>
    %28 = arith.truncf %27 : vector<8x128xf32> to vector<8x128xbf16>
    %c0_13 = arith.constant 0 : index
    %c0_14 = arith.constant 0 : index
    %29 = vector.load %arg6[%c0_13, %c0_14] : memref<128x128xbf16, #tpu.memory_space<vmem>>, vector<128x128xbf16>
    %cst_15 = arith.constant dense<0.000000e+00> : vector<8x128xf32>
    %30 = tpu.matmul %28, %29, %cst_15 {dimension_numbers = #tpu.dot_dimension_numbers<[1], [0], [0], [1], [0, 0, 1, 1], [], []>} : vector<8x128xbf16>, vector<128x128xbf16>, vector<8x128xf32> -> vector<8x128xf32>
    %c0_16 = arith.constant 0 : index
    %c0_17 = arith.constant 0 : index
    %31 = vector.load %arg7[%c0_16, %c0_17] : memref<1x128xf32, #tpu.memory_space<vmem>>, vector<1x128xf32>
    %32 = vector.broadcast %31 : vector<1x128xf32> to vector<8x128xf32>
    %33 = arith.addf %30, %32 : vector<8x128xf32>
    %cst_18 = arith.constant 0.176776692 : f32
    %34 = vector.broadcast %cst_18 : f32 to vector<8x128xf32>
    %35 = arith.mulf %33, %34 : vector<8x128xf32>
    %36 = arith.truncf %3 : vector<8x128xf32> to vector<8x128xbf16>
    %c0_19 = arith.constant 0 : index
    %c0_20 = arith.constant 0 : index
    %37 = vector.load %arg8[%c0_19, %c0_20] : memref<128x256xbf16, #tpu.memory_space<vmem>>, vector<128x256xbf16>
    %cst_21 = arith.constant dense<0.000000e+00> : vector<8x256xf32>
    %38 = tpu.matmul %36, %37, %cst_21 {dimension_numbers = #tpu.dot_dimension_numbers<[1], [0], [0], [1], [0, 0, 1, 1], [], []>} : vector<8x128xbf16>, vector<128x256xbf16>, vector<8x256xf32> -> vector<8x256xf32>
    %c0_22 = arith.constant 0 : index
    %c0_23 = arith.constant 0 : index
    %39 = vector.load %arg9[%c0_22, %c0_23] : memref<1x256xf32, #tpu.memory_space<vmem>>, vector<1x256xf32>
    %40 = vector.broadcast %39 : vector<1x256xf32> to vector<8x256xf32>
    %41 = arith.addf %38, %40 : vector<8x256xf32>
    %42 = arith.truncf %35 : vector<8x128xf32> to vector<8x128xbf16>
    %43 = vector.extract_strided_slice %41 {offsets = [0, 0], sizes = [8, 128], strides = [1, 1]} : vector<8x256xf32> to vector<8x128xf32>
    %44 = arith.truncf %43 : vector<8x128xf32> to vector<8x128xbf16>
    %45 = vector.extract_strided_slice %41 {offsets = [0, 128], sizes = [8, 128], strides = [1, 1]} : vector<8x256xf32> to vector<8x128xf32>
    %46 = arith.truncf %45 : vector<8x128xf32> to vector<8x128xbf16>
    %c0_24 = arith.constant 0 : index
    %c0_25 = arith.constant 0 : index
    %47 = vector.load %arg3[%c0_24, %c0_25] : memref<1x8xf32, #tpu.memory_space<vmem>>, vector<1x8xf32>
    %48 = vector.shape_cast %47 : vector<1x8xf32> to vector<1x8xf32>
    %49 = vector.broadcast %48 : vector<1x8xf32> to vector<8x8xf32>
    %c0_26 = arith.constant 0 : index
    %c0_27 = arith.constant 0 : index
    %50 = vector.load %arg10[%c0_26, %c0_27] : memref<128x128xbf16, #tpu.memory_space<vmem>>, vector<128x128xbf16>
    %cst_28 = arith.constant 0.000000e+00 : f32
    %51 = vector.broadcast %cst_28 : f32 to vector<8x128xf32>
    %52 = vector.extract_strided_slice %42 {offsets = [0, 0], sizes = [8, 32], strides = [1, 1]} : vector<8x128xbf16> to vector<8x32xbf16>
    %53 = vector.extract_strided_slice %44 {offsets = [0, 0], sizes = [8, 32], strides = [1, 1]} : vector<8x128xbf16> to vector<8x32xbf16>
    %54 = vector.extract_strided_slice %46 {offsets = [0, 0], sizes = [8, 32], strides = [1, 1]} : vector<8x128xbf16> to vector<8x32xbf16>
    %cst_29 = arith.constant dense<0.000000e+00> : vector<8x8xf32>
    %55 = tpu.matmul %52, %53, %cst_29 {dimension_numbers = #tpu.dot_dimension_numbers<[1], [1], [0], [0], [0, 0, 1, 0], [], []>} : vector<8x32xbf16>, vector<8x32xbf16>, vector<8x8xf32> -> vector<8x8xf32>
    %56 = arith.addf %55, %49 : vector<8x8xf32>
    %cst_30 = arith.constant dense<0xFF800000> : vector<8xf32>
    %57 = vector.multi_reduction <maximumf>, %56, %cst_30 [1] : vector<8x8xf32> to vector<8xf32>
    %58 = vector.shape_cast %57 : vector<8xf32> to vector<8x1xf32>
    %59 = vector.broadcast %58 : vector<8x1xf32> to vector<8x8xf32>
    %60 = arith.subf %56, %59 : vector<8x8xf32>
    %61 = math.exp %60 : vector<8x8xf32>
    %cst_31 = arith.constant dense<0.000000e+00> : vector<8xf32>
    %62 = vector.multi_reduction <add>, %61, %cst_31 [1] : vector<8x8xf32> to vector<8xf32>
    %63 = vector.shape_cast %62 : vector<8xf32> to vector<8x1xf32>
    %64 = tpu.reciprocal %63 {approx = true} : vector<8x1xf32> -> vector<8x1xf32>
    %65 = vector.broadcast %64 : vector<8x1xf32> to vector<8x8xf32>
    %66 = arith.mulf %61, %65 : vector<8x8xf32>
    %67 = arith.truncf %66 : vector<8x8xf32> to vector<8x8xbf16>
    %cst_32 = arith.constant dense<0.000000e+00> : vector<8x32xf32>
    %68 = tpu.matmul %67, %54, %cst_32 {dimension_numbers = #tpu.dot_dimension_numbers<[1], [0], [0], [1], [0, 0, 1, 1], [], []>} : vector<8x8xbf16>, vector<8x32xbf16>, vector<8x32xf32> -> vector<8x32xf32>
    %69 = arith.truncf %68 : vector<8x32xf32> to vector<8x32xbf16>
    %70 = vector.extract_strided_slice %50 {offsets = [0, 0], sizes = [32, 128], strides = [1, 1]} : vector<128x128xbf16> to vector<32x128xbf16>
    %cst_33 = arith.constant dense<0.000000e+00> : vector<8x128xf32>
    %71 = tpu.matmul %69, %70, %cst_33 {dimension_numbers = #tpu.dot_dimension_numbers<[1], [0], [0], [1], [0, 0, 1, 1], [], []>} : vector<8x32xbf16>, vector<32x128xbf16>, vector<8x128xf32> -> vector<8x128xf32>
    %72 = arith.addf %51, %71 : vector<8x128xf32>
    %73 = vector.extract_strided_slice %42 {offsets = [0, 32], sizes = [8, 32], strides = [1, 1]} : vector<8x128xbf16> to vector<8x32xbf16>
    %74 = vector.extract_strided_slice %44 {offsets = [0, 32], sizes = [8, 32], strides = [1, 1]} : vector<8x128xbf16> to vector<8x32xbf16>
    %75 = vector.extract_strided_slice %46 {offsets = [0, 32], sizes = [8, 32], strides = [1, 1]} : vector<8x128xbf16> to vector<8x32xbf16>
    %cst_34 = arith.constant dense<0.000000e+00> : vector<8x8xf32>
    %76 = tpu.matmul %73, %74, %cst_34 {dimension_numbers = #tpu.dot_dimension_numbers<[1], [1], [0], [0], [0, 0, 1, 0], [], []>} : vector<8x32xbf16>, vector<8x32xbf16>, vector<8x8xf32> -> vector<8x8xf32>
    %77 = arith.addf %76, %49 : vector<8x8xf32>
    %cst_35 = arith.constant dense<0xFF800000> : vector<8xf32>
    %78 = vector.multi_reduction <maximumf>, %77, %cst_35 [1] : vector<8x8xf32> to vector<8xf32>
    %79 = vector.shape_cast %78 : vector<8xf32> to vector<8x1xf32>
    %80 = vector.broadcast %79 : vector<8x1xf32> to vector<8x8xf32>
    %81 = arith.subf %77, %80 : vector<8x8xf32>
    %82 = math.exp %81 : vector<8x8xf32>
    %cst_36 = arith.constant dense<0.000000e+00> : vector<8xf32>
    %83 = vector.multi_reduction <add>, %82, %cst_36 [1] : vector<8x8xf32> to vector<8xf32>
    %84 = vector.shape_cast %83 : vector<8xf32> to vector<8x1xf32>
    %85 = tpu.reciprocal %84 {approx = true} : vector<8x1xf32> -> vector<8x1xf32>
    %86 = vector.broadcast %85 : vector<8x1xf32> to vector<8x8xf32>
    %87 = arith.mulf %82, %86 : vector<8x8xf32>
    %88 = arith.truncf %87 : vector<8x8xf32> to vector<8x8xbf16>
    %cst_37 = arith.constant dense<0.000000e+00> : vector<8x32xf32>
    %89 = tpu.matmul %88, %75, %cst_37 {dimension_numbers = #tpu.dot_dimension_numbers<[1], [0], [0], [1], [0, 0, 1, 1], [], []>} : vector<8x8xbf16>, vector<8x32xbf16>, vector<8x32xf32> -> vector<8x32xf32>
    %90 = arith.truncf %89 : vector<8x32xf32> to vector<8x32xbf16>
    %91 = vector.extract_strided_slice %50 {offsets = [32, 0], sizes = [32, 128], strides = [1, 1]} : vector<128x128xbf16> to vector<32x128xbf16>
    %cst_38 = arith.constant dense<0.000000e+00> : vector<8x128xf32>
    %92 = tpu.matmul %90, %91, %cst_38 {dimension_numbers = #tpu.dot_dimension_numbers<[1], [0], [0], [1], [0, 0, 1, 1], [], []>} : vector<8x32xbf16>, vector<32x128xbf16>, vector<8x128xf32> -> vector<8x128xf32>
    %93 = arith.addf %72, %92 : vector<8x128xf32>
    %94 = vector.extract_strided_slice %42 {offsets = [0, 64], sizes = [8, 32], strides = [1, 1]} : vector<8x128xbf16> to vector<8x32xbf16>
    %95 = vector.extract_strided_slice %44 {offsets = [0, 64], sizes = [8, 32], strides = [1, 1]} : vector<8x128xbf16> to vector<8x32xbf16>
    %96 = vector.extract_strided_slice %46 {offsets = [0, 64], sizes = [8, 32], strides = [1, 1]} : vector<8x128xbf16> to vector<8x32xbf16>
    %cst_39 = arith.constant dense<0.000000e+00> : vector<8x8xf32>
    %97 = tpu.matmul %94, %95, %cst_39 {dimension_numbers = #tpu.dot_dimension_numbers<[1], [1], [0], [0], [0, 0, 1, 0], [], []>} : vector<8x32xbf16>, vector<8x32xbf16>, vector<8x8xf32> -> vector<8x8xf32>
    %98 = arith.addf %97, %49 : vector<8x8xf32>
    %cst_40 = arith.constant dense<0xFF800000> : vector<8xf32>
    %99 = vector.multi_reduction <maximumf>, %98, %cst_40 [1] : vector<8x8xf32> to vector<8xf32>
    %100 = vector.shape_cast %99 : vector<8xf32> to vector<8x1xf32>
    %101 = vector.broadcast %100 : vector<8x1xf32> to vector<8x8xf32>
    %102 = arith.subf %98, %101 : vector<8x8xf32>
    %103 = math.exp %102 : vector<8x8xf32>
    %cst_41 = arith.constant dense<0.000000e+00> : vector<8xf32>
    %104 = vector.multi_reduction <add>, %103, %cst_41 [1] : vector<8x8xf32> to vector<8xf32>
    %105 = vector.shape_cast %104 : vector<8xf32> to vector<8x1xf32>
    %106 = tpu.reciprocal %105 {approx = true} : vector<8x1xf32> -> vector<8x1xf32>
    %107 = vector.broadcast %106 : vector<8x1xf32> to vector<8x8xf32>
    %108 = arith.mulf %103, %107 : vector<8x8xf32>
    %109 = arith.truncf %108 : vector<8x8xf32> to vector<8x8xbf16>
    %cst_42 = arith.constant dense<0.000000e+00> : vector<8x32xf32>
    %110 = tpu.matmul %109, %96, %cst_42 {dimension_numbers = #tpu.dot_dimension_numbers<[1], [0], [0], [1], [0, 0, 1, 1], [], []>} : vector<8x8xbf16>, vector<8x32xbf16>, vector<8x32xf32> -> vector<8x32xf32>
    %111 = arith.truncf %110 : vector<8x32xf32> to vector<8x32xbf16>
    %112 = vector.extract_strided_slice %50 {offsets = [64, 0], sizes = [32, 128], strides = [1, 1]} : vector<128x128xbf16> to vector<32x128xbf16>
    %cst_43 = arith.constant dense<0.000000e+00> : vector<8x128xf32>
    %113 = tpu.matmul %111, %112, %cst_43 {dimension_numbers = #tpu.dot_dimension_numbers<[1], [0], [0], [1], [0, 0, 1, 1], [], []>} : vector<8x32xbf16>, vector<32x128xbf16>, vector<8x128xf32> -> vector<8x128xf32>
    %114 = arith.addf %93, %113 : vector<8x128xf32>
    %115 = vector.extract_strided_slice %42 {offsets = [0, 96], sizes = [8, 32], strides = [1, 1]} : vector<8x128xbf16> to vector<8x32xbf16>
    %116 = vector.extract_strided_slice %44 {offsets = [0, 96], sizes = [8, 32], strides = [1, 1]} : vector<8x128xbf16> to vector<8x32xbf16>
    %117 = vector.extract_strided_slice %46 {offsets = [0, 96], sizes = [8, 32], strides = [1, 1]} : vector<8x128xbf16> to vector<8x32xbf16>
    %cst_44 = arith.constant dense<0.000000e+00> : vector<8x8xf32>
    %118 = tpu.matmul %115, %116, %cst_44 {dimension_numbers = #tpu.dot_dimension_numbers<[1], [1], [0], [0], [0, 0, 1, 0], [], []>} : vector<8x32xbf16>, vector<8x32xbf16>, vector<8x8xf32> -> vector<8x8xf32>
    %119 = arith.addf %118, %49 : vector<8x8xf32>
    %cst_45 = arith.constant dense<0xFF800000> : vector<8xf32>
    %120 = vector.multi_reduction <maximumf>, %119, %cst_45 [1] : vector<8x8xf32> to vector<8xf32>
    %121 = vector.shape_cast %120 : vector<8xf32> to vector<8x1xf32>
    %122 = vector.broadcast %121 : vector<8x1xf32> to vector<8x8xf32>
    %123 = arith.subf %119, %122 : vector<8x8xf32>
    %124 = math.exp %123 : vector<8x8xf32>
    %cst_46 = arith.constant dense<0.000000e+00> : vector<8xf32>
    %125 = vector.multi_reduction <add>, %124, %cst_46 [1] : vector<8x8xf32> to vector<8xf32>
    %126 = vector.shape_cast %125 : vector<8xf32> to vector<8x1xf32>
    %127 = tpu.reciprocal %126 {approx = true} : vector<8x1xf32> -> vector<8x1xf32>
    %128 = vector.broadcast %127 : vector<8x1xf32> to vector<8x8xf32>
    %129 = arith.mulf %124, %128 : vector<8x8xf32>
    %130 = arith.truncf %129 : vector<8x8xf32> to vector<8x8xbf16>
    %cst_47 = arith.constant dense<0.000000e+00> : vector<8x32xf32>
    %131 = tpu.matmul %130, %117, %cst_47 {dimension_numbers = #tpu.dot_dimension_numbers<[1], [0], [0], [1], [0, 0, 1, 1], [], []>} : vector<8x8xbf16>, vector<8x32xbf16>, vector<8x32xf32> -> vector<8x32xf32>
    %132 = arith.truncf %131 : vector<8x32xf32> to vector<8x32xbf16>
    %133 = vector.extract_strided_slice %50 {offsets = [96, 0], sizes = [32, 128], strides = [1, 1]} : vector<128x128xbf16> to vector<32x128xbf16>
    %cst_48 = arith.constant dense<0.000000e+00> : vector<8x128xf32>
    %134 = tpu.matmul %132, %133, %cst_48 {dimension_numbers = #tpu.dot_dimension_numbers<[1], [0], [0], [1], [0, 0, 1, 1], [], []>} : vector<8x32xbf16>, vector<32x128xbf16>, vector<8x128xf32> -> vector<8x128xf32>
    %135 = arith.addf %114, %134 : vector<8x128xf32>
    %136 = arith.addf %1, %135 : vector<8x128xf32>
    %c0_49 = arith.constant 0 : index
    %c0_50 = arith.constant 0 : index
    %137 = vector.load %arg11[%c0_49, %c0_50] : memref<1x128xf32, #tpu.memory_space<vmem>>, vector<1x128xf32>
    %138 = vector.broadcast %137 : vector<1x128xf32> to vector<8x128xf32>
    %139 = arith.addf %136, %138 : vector<8x128xf32>
    %cst_51 = arith.constant dense<0.000000e+00> : vector<8xf32>
    %140 = vector.multi_reduction <add>, %139, %cst_51 [1] : vector<8x128xf32> to vector<8xf32>
    %141 = vector.shape_cast %140 : vector<8xf32> to vector<8x1xf32>
    %cst_52 = arith.constant 1.280000e+02 : f32
    %142 = vector.broadcast %cst_52 : f32 to vector<8x1xf32>
    %143 = arith.divf %141, %142 : vector<8x1xf32>
    %144 = vector.broadcast %143 : vector<8x1xf32> to vector<8x128xf32>
    %145 = arith.subf %139, %144 : vector<8x128xf32>
    %146 = arith.mulf %145, %145 : vector<8x128xf32>
    %cst_53 = arith.constant dense<0.000000e+00> : vector<8xf32>
    %147 = vector.multi_reduction <add>, %146, %cst_53 [1] : vector<8x128xf32> to vector<8xf32>
    %148 = vector.shape_cast %147 : vector<8xf32> to vector<8x1xf32>
    %cst_54 = arith.constant 1.280000e+02 : f32
    %149 = vector.broadcast %cst_54 : f32 to vector<8x1xf32>
    %150 = arith.divf %148, %149 : vector<8x1xf32>
    %151 = vector.broadcast %143 : vector<8x1xf32> to vector<8x128xf32>
    %152 = arith.subf %139, %151 : vector<8x128xf32>
    %cst_55 = arith.constant 9.99999997E-7 : f32
    %153 = vector.broadcast %cst_55 : f32 to vector<8x1xf32>
    %154 = arith.addf %150, %153 : vector<8x1xf32>
    %155 = math.rsqrt %154 : vector<8x1xf32>
    %156 = vector.broadcast %155 : vector<8x1xf32> to vector<8x128xf32>
    %157 = arith.mulf %152, %156 : vector<8x128xf32>
    %c0_56 = arith.constant 0 : index
    %c0_57 = arith.constant 0 : index
    %158 = vector.load %arg12[%c0_56, %c0_57] : memref<1x128xf32, #tpu.memory_space<vmem>>, vector<1x128xf32>
    %159 = vector.broadcast %158 : vector<1x128xf32> to vector<8x128xf32>
    %160 = arith.mulf %157, %159 : vector<8x128xf32>
    %c0_58 = arith.constant 0 : index
    %c0_59 = arith.constant 0 : index
    %161 = vector.load %arg13[%c0_58, %c0_59] : memref<1x128xf32, #tpu.memory_space<vmem>>, vector<1x128xf32>
    %162 = vector.broadcast %161 : vector<1x128xf32> to vector<8x128xf32>
    %163 = arith.addf %160, %162 : vector<8x128xf32>
    %164 = arith.truncf %163 : vector<8x128xf32> to vector<8x128xbf16>
    %c0_60 = arith.constant 0 : index
    %c0_61 = arith.constant 0 : index
    %165 = vector.load %arg14[%c0_60, %c0_61] : memref<128x256xbf16, #tpu.memory_space<vmem>>, vector<128x256xbf16>
    %cst_62 = arith.constant dense<0.000000e+00> : vector<8x256xf32>
    %166 = tpu.matmul %164, %165, %cst_62 {dimension_numbers = #tpu.dot_dimension_numbers<[1], [0], [0], [1], [0, 0, 1, 1], [], []>} : vector<8x128xbf16>, vector<128x256xbf16>, vector<8x256xf32> -> vector<8x256xf32>
    %c0_63 = arith.constant 0 : index
    %c0_64 = arith.constant 0 : index
    %167 = vector.load %arg15[%c0_63, %c0_64] : memref<1x256xf32, #tpu.memory_space<vmem>>, vector<1x256xf32>
    %168 = vector.broadcast %167 : vector<1x256xf32> to vector<8x256xf32>
    %169 = arith.addf %166, %168 : vector<8x256xf32>
    %cst_65 = arith.constant 0.000000e+00 : f32
    %170 = vector.broadcast %cst_65 : f32 to vector<8x256xf32>
    %171 = arith.maximumf %169, %170 : vector<8x256xf32>
    %172 = arith.truncf %171 : vector<8x256xf32> to vector<8x256xbf16>
    %c0_66 = arith.constant 0 : index
    %c0_67 = arith.constant 0 : index
    %173 = vector.load %arg16[%c0_66, %c0_67] : memref<256x128xbf16, #tpu.memory_space<vmem>>, vector<256x128xbf16>
    %cst_68 = arith.constant dense<0.000000e+00> : vector<8x128xf32>
    %174 = tpu.matmul %172, %173, %cst_68 {dimension_numbers = #tpu.dot_dimension_numbers<[1], [0], [0], [1], [0, 0, 1, 1], [], []>} : vector<8x256xbf16>, vector<256x128xbf16>, vector<8x128xf32> -> vector<8x128xf32>
    %175 = arith.addf %139, %174 : vector<8x128xf32>
    %c0_69 = arith.constant 0 : index
    %c0_70 = arith.constant 0 : index
    %176 = vector.load %arg17[%c0_69, %c0_70] : memref<1x128xf32, #tpu.memory_space<vmem>>, vector<1x128xf32>
    %177 = vector.broadcast %176 : vector<1x128xf32> to vector<8x128xf32>
    %178 = arith.addf %175, %177 : vector<8x128xf32>
    %c0_71 = arith.constant 0 : index
    %c0_72 = arith.constant 0 : index
    %c0_73 = arith.constant 0 : index
    %179 = vector.load %arg18[%c0_71, %c0_72, %c0_73] : memref<1x8x128xf32, #tpu.memory_space<vmem>>, vector<1x8x128xf32>
    %180 = vector.shape_cast %179 : vector<1x8x128xf32> to vector<8x128xf32>
    %181 = vector.shape_cast %178 : vector<8x128xf32> to vector<1x8x128xf32>
    tpu.vector_store %arg18[%c0_71, %c0_72, %c0_73], %181 {strides = array<i32>} : memref<1x8x128xf32, #tpu.memory_space<vmem>>, vector<1x8x128xf32>,
    return
  }
  func.func @transform_0(%arg0: i32) -> (i32, i32, i32) {
    %c0_i32 = arith.constant 0 : i32
    %c0_i32_0 = arith.constant 0 : i32
    %c0_i32_1 = arith.constant 0 : i32
    return %arg0, %c0_i32, %c0_i32_0 : i32, i32, i32
  }
  func.func @transform_1(%arg0: i32) -> (i32, i32, i32) {
    %c0_i32 = arith.constant 0 : i32
    %c0_i32_0 = arith.constant 0 : i32
    %c0_i32_1 = arith.constant 0 : i32
    return %arg0, %c0_i32, %c0_i32_0 : i32, i32, i32
  }
  func.func @transform_2(%arg0: i32) -> (i32, i32) {
    %c0_i32 = arith.constant 0 : i32
    %c0_i32_0 = arith.constant 0 : i32
    %c0_i32_1 = arith.constant 0 : i32
    return %c0_i32, %c0_i32_0 : i32, i32
  }
  func.func @transform_3(%arg0: i32) -> (i32, i32) {
    %c0_i32 = arith.constant 0 : i32
    %c0_i32_0 = arith.constant 0 : i32
    %c0_i32_1 = arith.constant 0 : i32
    return %c0_i32, %c0_i32_0 : i32, i32
  }
  func.func @transform_4(%arg0: i32) -> (i32, i32) {
    %c0_i32 = arith.constant 0 : i32
    %c0_i32_0 = arith.constant 0 : i32
    %c0_i32_1 = arith.constant 0 : i32
    return %c0_i32, %c0_i32_0 : i32, i32
  }
  func.func @transform_5(%arg0: i32) -> (i32, i32) {
    %c0_i32 = arith.constant 0 : i32
    %c0_i32_0 = arith.constant 0 : i32
    %c0_i32_1 = arith.constant 0 : i32
    return %c0_i32, %c0_i32_0 : i32, i32
  }
  func.func @transform_6(%arg0: i32) -> (i32, i32) {
    %c0_i32 = arith.constant 0 : i32
    %c0_i32_0 = arith.constant 0 : i32
    %c0_i32_1 = arith.constant 0 : i32
    return %c0_i32, %c0_i32_0 : i32, i32
  }
  func.func @transform_7(%arg0: i32) -> (i32, i32) {
    %c0_i32 = arith.constant 0 : i32
    %c0_i32_0 = arith.constant 0 : i32
    %c0_i32_1 = arith.constant 0 : i32
    return %c0_i32, %c0_i32_0 : i32, i32
  }
  func.func @transform_8(%arg0: i32) -> (i32, i32) {
    %c0_i32 = arith.constant 0 : i32
    %c0_i32_0 = arith.constant 0 : i32
    %c0_i32_1 = arith.constant 0 : i32
    return %c0_i32, %c0_i32_0 : i32, i32
  }
  func.func @transform_9(%arg0: i32) -> (i32, i32) {
    %c0_i32 = arith.constant 0 : i32
    %c0_i32_0 = arith.constant 0 : i32
    %c0_i32_1 = arith.constant 0 : i32
    return %c0_i32, %c0_i32_0 : i32, i32
  }
  func.func @transform_10(%arg0: i32) -> (i32, i32) {
    %c0_i32 = arith.constant 0 : i32
    %c0_i32_0 = arith.constant 0 : i32
    %c0_i32_1 = arith.constant 0 : i32
    return %c0_i32, %c0_i32_0 : i32, i32
  }
  func.func @transform_11(%arg0: i32) -> (i32, i32) {
    %c0_i32 = arith.constant 0 : i32
    %c0_i32_0 = arith.constant 0 : i32
    %c0_i32_1 = arith.constant 0 : i32
    return %c0_i32, %c0_i32_0 : i32, i32
  }
  func.func @transform_12(%arg0: i32) -> (i32, i32) {
    %c0_i32 = arith.constant 0 : i32
    %c0_i32_0 = arith.constant 0 : i32
    %c0_i32_1 = arith.constant 0 : i32
    return %c0_i32, %c0_i32_0 : i32, i32
  }
  func.func @transform_13(%arg0: i32) -> (i32, i32) {
    %c0_i32 = arith.constant 0 : i32
    %c0_i32_0 = arith.constant 0 : i32
    %c0_i32_1 = arith.constant 0 : i32
    return %c0_i32, %c0_i32_0 : i32, i32
  }
  func.func @transform_14(%arg0: i32) -> (i32, i32) {
    %c0_i32 = arith.constant 0 : i32
    %c0_i32_0 = arith.constant 0 : i32
    %c0_i32_1 = arith.constant 0 : i32
    return %c0_i32, %c0_i32_0 : i32, i32
  }
  func.func @transform_15(%arg0: i32) -> (i32, i32) {
    %c0_i32 = arith.constant 0 : i32
    %c0_i32_0 = arith.constant 0 : i32
    %c0_i32_1 = arith.constant 0 : i32
    return %c0_i32, %c0_i32_0 : i32, i32
  }
  func.func @transform_16(%arg0: i32) -> (i32, i32) {
    %c0_i32 = arith.constant 0 : i32
    %c0_i32_0 = arith.constant 0 : i32
    %c0_i32_1 = arith.constant 0 : i32
    return %c0_i32, %c0_i32_0 : i32, i32
  }
  func.func @transform_17(%arg0: i32) -> (i32, i32, i32) {
    %c0_i32 = arith.constant 0 : i32
    %c0_i32_0 = arith.constant 0 : i32
    %c0_i32_1 = arith.constant 0 : i32
    return %arg0, %c0_i32, %c0_i32_0 : i32, i32, i32
  }
}

module attributes {stable_mosaic.version = 11 : i64} {
  func.func @_linear_kernel(%arg0: i32, %arg1: memref<4x128xf32, #tpu.memory_space<vmem>>, %arg2: memref<128x128xbf16, #tpu.memory_space<vmem>>, %arg3: memref<1x128xf32, #tpu.memory_space<vmem>>, %arg4: memref<4x128xf32, #tpu.memory_space<vmem>>) attributes {dimension_semantics = [#tpu.dimension_semantics<parallel>], iteration_bounds = array<i64: 1>, scalar_prefetch = 0 : i64, scratch_operands = 0 : i64, tpu.core_type = #tpu.core_type<tc>, window_params = [{transform_indices = @transform_0, window_bounds = array<i64: 4, 128>}, {pipeline_mode = #tpu.pipeline_mode<synchronous>, transform_indices = @transform_1, window_bounds = array<i64: 128, 128>}, {pipeline_mode = #tpu.pipeline_mode<synchronous>, transform_indices = @transform_2, window_bounds = array<i64: 1, 128>}, {transform_indices = @transform_3, window_bounds = array<i64: 4, 128>}]} {
    %c0 = arith.constant 0 : index
    %c0_0 = arith.constant 0 : index
    %0 = vector.load %arg1[%c0, %c0_0] : memref<4x128xf32, #tpu.memory_space<vmem>>, vector<4x128xf32>
    %1 = arith.truncf %0 : vector<4x128xf32> to vector<4x128xbf16>
    %c0_1 = arith.constant 0 : index
    %c0_2 = arith.constant 0 : index
    %2 = vector.load %arg2[%c0_1, %c0_2] : memref<128x128xbf16, #tpu.memory_space<vmem>>, vector<128x128xbf16>
    %cst = arith.constant dense<0.000000e+00> : vector<4x128xf32>
    %3 = tpu.matmul %1, %2, %cst {dimension_numbers = #tpu.dot_dimension_numbers<[1], [0], [0], [1], [0, 0, 1, 1], [], []>} : vector<4x128xbf16>, vector<128x128xbf16>, vector<4x128xf32> -> vector<4x128xf32>
    %c0_3 = arith.constant 0 : index
    %c0_4 = arith.constant 0 : index
    %4 = vector.load %arg3[%c0_3, %c0_4] : memref<1x128xf32, #tpu.memory_space<vmem>>, vector<1x128xf32>
    %5 = vector.broadcast %4 : vector<1x128xf32> to vector<4x128xf32>
    %6 = arith.addf %3, %5 : vector<4x128xf32>
    %c0_5 = arith.constant 0 : index
    %c0_6 = arith.constant 0 : index
    %7 = vector.load %arg4[%c0_5, %c0_6] : memref<4x128xf32, #tpu.memory_space<vmem>>, vector<4x128xf32>
    tpu.vector_store %arg4[%c0_5, %c0_6], %6 {strides = array<i32>} : memref<4x128xf32, #tpu.memory_space<vmem>>, vector<4x128xf32>,
    return
  }
  func.func @transform_0(%arg0: i32) -> (i32, i32) {
    %c0_i32 = arith.constant 0 : i32
    %c0_i32_0 = arith.constant 0 : i32
    return %arg0, %c0_i32 : i32, i32
  }
  func.func @transform_1(%arg0: i32) -> (i32, i32) {
    %c0_i32 = arith.constant 0 : i32
    %c0_i32_0 = arith.constant 0 : i32
    %c0_i32_1 = arith.constant 0 : i32
    return %c0_i32, %c0_i32_0 : i32, i32
  }
  func.func @transform_2(%arg0: i32) -> (i32, i32) {
    %c0_i32 = arith.constant 0 : i32
    %c0_i32_0 = arith.constant 0 : i32
    %c0_i32_1 = arith.constant 0 : i32
    return %c0_i32, %c0_i32_0 : i32, i32
  }
  func.func @transform_3(%arg0: i32) -> (i32, i32) {
    %c0_i32 = arith.constant 0 : i32
    %c0_i32_0 = arith.constant 0 : i32
    return %arg0, %c0_i32 : i32, i32
  }
}

module attributes {stable_mosaic.version = 11 : i64} {
  func.func @_linear_kernel(%arg0: i32, %arg1: memref<16x400xf32, #tpu.memory_space<vmem>>, %arg2: memref<400x128xbf16, #tpu.memory_space<vmem>>, %arg3: memref<1x128xf32, #tpu.memory_space<vmem>>, %arg4: memref<16x128xf32, #tpu.memory_space<vmem>>) attributes {dimension_semantics = [#tpu.dimension_semantics<parallel>], iteration_bounds = array<i64: 1>, scalar_prefetch = 0 : i64, scratch_operands = 0 : i64, tpu.core_type = #tpu.core_type<tc>, window_params = [{transform_indices = @transform_0, window_bounds = array<i64: 16, 400>}, {pipeline_mode = #tpu.pipeline_mode<synchronous>, transform_indices = @transform_1, window_bounds = array<i64: 400, 128>}, {pipeline_mode = #tpu.pipeline_mode<synchronous>, transform_indices = @transform_2, window_bounds = array<i64: 1, 128>}, {transform_indices = @transform_3, window_bounds = array<i64: 16, 128>}]} {
    %c0 = arith.constant 0 : index
    %c0_0 = arith.constant 0 : index
    %0 = vector.load %arg1[%c0, %c0_0] : memref<16x400xf32, #tpu.memory_space<vmem>>, vector<16x400xf32>
    %1 = arith.truncf %0 : vector<16x400xf32> to vector<16x400xbf16>
    %c0_1 = arith.constant 0 : index
    %c0_2 = arith.constant 0 : index
    %2 = vector.load %arg2[%c0_1, %c0_2] : memref<400x128xbf16, #tpu.memory_space<vmem>>, vector<400x128xbf16>
    %cst = arith.constant dense<0.000000e+00> : vector<16x128xf32>
    %3 = tpu.matmul %1, %2, %cst {dimension_numbers = #tpu.dot_dimension_numbers<[1], [0], [0], [1], [0, 0, 1, 1], [], []>} : vector<16x400xbf16>, vector<400x128xbf16>, vector<16x128xf32> -> vector<16x128xf32>
    %c0_3 = arith.constant 0 : index
    %c0_4 = arith.constant 0 : index
    %4 = vector.load %arg3[%c0_3, %c0_4] : memref<1x128xf32, #tpu.memory_space<vmem>>, vector<1x128xf32>
    %5 = vector.broadcast %4 : vector<1x128xf32> to vector<16x128xf32>
    %6 = arith.addf %3, %5 : vector<16x128xf32>
    %c0_5 = arith.constant 0 : index
    %c0_6 = arith.constant 0 : index
    %7 = vector.load %arg4[%c0_5, %c0_6] : memref<16x128xf32, #tpu.memory_space<vmem>>, vector<16x128xf32>
    tpu.vector_store %arg4[%c0_5, %c0_6], %6 {strides = array<i32>} : memref<16x128xf32, #tpu.memory_space<vmem>>, vector<16x128xf32>,
    return
  }
  func.func @transform_0(%arg0: i32) -> (i32, i32) {
    %c0_i32 = arith.constant 0 : i32
    %c0_i32_0 = arith.constant 0 : i32
    return %arg0, %c0_i32 : i32, i32
  }
  func.func @transform_1(%arg0: i32) -> (i32, i32) {
    %c0_i32 = arith.constant 0 : i32
    %c0_i32_0 = arith.constant 0 : i32
    %c0_i32_1 = arith.constant 0 : i32
    return %c0_i32, %c0_i32_0 : i32, i32
  }
  func.func @transform_2(%arg0: i32) -> (i32, i32) {
    %c0_i32 = arith.constant 0 : i32
    %c0_i32_0 = arith.constant 0 : i32
    %c0_i32_1 = arith.constant 0 : i32
    return %c0_i32, %c0_i32_0 : i32, i32
  }
  func.func @transform_3(%arg0: i32) -> (i32, i32) {
    %c0_i32 = arith.constant 0 : i32
    %c0_i32_0 = arith.constant 0 : i32
    return %arg0, %c0_i32 : i32, i32
  }
}

module attributes {stable_mosaic.version = 11 : i64} {
  func.func @_kg_block_kernel(%arg0: i32, %arg1: memref<1x2x128xf32, #tpu.memory_space<vmem>>, %arg2: memref<1x16x128xf32, #tpu.memory_space<vmem>>, %arg3: memref<1x16xf32, #tpu.memory_space<vmem>>, %arg4: memref<1x128xf32, #tpu.memory_space<vmem>>, %arg5: memref<1x128xf32, #tpu.memory_space<vmem>>, %arg6: memref<128x128xbf16, #tpu.memory_space<vmem>>, %arg7: memref<1x128xf32, #tpu.memory_space<vmem>>, %arg8: memref<128x256xbf16, #tpu.memory_space<vmem>>, %arg9: memref<1x256xf32, #tpu.memory_space<vmem>>, %arg10: memref<128x128xbf16, #tpu.memory_space<vmem>>, %arg11: memref<1x128xf32, #tpu.memory_space<vmem>>, %arg12: memref<1x128xf32, #tpu.memory_space<vmem>>, %arg13: memref<1x128xf32, #tpu.memory_space<vmem>>, %arg14: memref<128x256xbf16, #tpu.memory_space<vmem>>, %arg15: memref<1x256xf32, #tpu.memory_space<vmem>>, %arg16: memref<256x128xbf16, #tpu.memory_space<vmem>>, %arg17: memref<1x128xf32, #tpu.memory_space<vmem>>, %arg18: memref<1x2x128xf32, #tpu.memory_space<vmem>>) attributes {dimension_semantics = [#tpu.dimension_semantics<parallel>], iteration_bounds = array<i64: 2>, scalar_prefetch = 0 : i64, scratch_operands = 0 : i64, tpu.core_type = #tpu.core_type<tc>, window_params = [{transform_indices = @transform_0, window_bounds = array<i64: 1, 2, 128>}, {pipeline_mode = #tpu.pipeline_mode<synchronous>, transform_indices = @transform_1, window_bounds = array<i64: 1, 16, 128>}, {pipeline_mode = #tpu.pipeline_mode<synchronous>, transform_indices = @transform_2, window_bounds = array<i64: 1, 16>}, {pipeline_mode = #tpu.pipeline_mode<synchronous>, transform_indices = @transform_3, window_bounds = array<i64: 1, 128>}, {pipeline_mode = #tpu.pipeline_mode<synchronous>, transform_indices = @transform_4, window_bounds = array<i64: 1, 128>}, {pipeline_mode = #tpu.pipeline_mode<synchronous>, transform_indices = @transform_5, window_bounds = array<i64: 128, 128>}, {pipeline_mode = #tpu.pipeline_mode<synchronous>, transform_indices = @transform_6, window_bounds = array<i64: 1, 128>}, {pipeline_mode = #tpu.pipeline_mode<synchronous>, transform_indices = @transform_7, window_bounds = array<i64: 128, 256>}, {pipeline_mode = #tpu.pipeline_mode<synchronous>, transform_indices = @transform_8, window_bounds = array<i64: 1, 256>}, {pipeline_mode = #tpu.pipeline_mode<synchronous>, transform_indices = @transform_9, window_bounds = array<i64: 128, 128>}, {pipeline_mode = #tpu.pipeline_mode<synchronous>, transform_indices = @transform_10, window_bounds = array<i64: 1, 128>}, {pipeline_mode = #tpu.pipeline_mode<synchronous>, transform_indices = @transform_11, window_bounds = array<i64: 1, 128>}, {pipeline_mode = #tpu.pipeline_mode<synchronous>, transform_indices = @transform_12, window_bounds = array<i64: 1, 128>}, {pipeline_mode = #tpu.pipeline_mode<synchronous>, transform_indices = @transform_13, window_bounds = array<i64: 128, 256>}, {pipeline_mode = #tpu.pipeline_mode<synchronous>, transform_indices = @transform_14, window_bounds = array<i64: 1, 256>}, {pipeline_mode = #tpu.pipeline_mode<synchronous>, transform_indices = @transform_15, window_bounds = array<i64: 256, 128>}, {pipeline_mode = #tpu.pipeline_mode<synchronous>, transform_indices = @transform_16, window_bounds = array<i64: 1, 128>}, {transform_indices = @transform_17, window_bounds = array<i64: 1, 2, 128>}]} {
    %c0 = arith.constant 0 : index
    %c0_0 = arith.constant 0 : index
    %c0_1 = arith.constant 0 : index
    %0 = vector.load %arg1[%c0, %c0_0, %c0_1] : memref<1x2x128xf32, #tpu.memory_space<vmem>>, vector<1x2x128xf32>
    %1 = vector.shape_cast %0 : vector<1x2x128xf32> to vector<2x128xf32>
    %c0_2 = arith.constant 0 : index
    %c0_3 = arith.constant 0 : index
    %c0_4 = arith.constant 0 : index
    %2 = vector.load %arg2[%c0_2, %c0_3, %c0_4] : memref<1x16x128xf32, #tpu.memory_space<vmem>>, vector<1x16x128xf32>
    %3 = vector.shape_cast %2 : vector<1x16x128xf32> to vector<16x128xf32>
    %cst = arith.constant dense<0.000000e+00> : vector<2xf32>
    %4 = vector.multi_reduction <add>, %1, %cst [1] : vector<2x128xf32> to vector<2xf32>
    %5 = vector.shape_cast %4 : vector<2xf32> to vector<2x1xf32>
    %cst_5 = arith.constant 1.280000e+02 : f32
    %6 = vector.broadcast %cst_5 : f32 to vector<2x1xf32>
    %7 = arith.divf %5, %6 : vector<2x1xf32>
    %8 = vector.broadcast %7 : vector<2x1xf32> to vector<2x128xf32>
    %9 = arith.subf %1, %8 : vector<2x128xf32>
    %10 = arith.mulf %9, %9 : vector<2x128xf32>
    %cst_6 = arith.constant dense<0.000000e+00> : vector<2xf32>
    %11 = vector.multi_reduction <add>, %10, %cst_6 [1] : vector<2x128xf32> to vector<2xf32>
    %12 = vector.shape_cast %11 : vector<2xf32> to vector<2x1xf32>
    %cst_7 = arith.constant 1.280000e+02 : f32
    %13 = vector.broadcast %cst_7 : f32 to vector<2x1xf32>
    %14 = arith.divf %12, %13 : vector<2x1xf32>
    %15 = vector.broadcast %7 : vector<2x1xf32> to vector<2x128xf32>
    %16 = arith.subf %1, %15 : vector<2x128xf32>
    %cst_8 = arith.constant 9.99999997E-7 : f32
    %17 = vector.broadcast %cst_8 : f32 to vector<2x1xf32>
    %18 = arith.addf %14, %17 : vector<2x1xf32>
    %19 = math.rsqrt %18 : vector<2x1xf32>
    %20 = vector.broadcast %19 : vector<2x1xf32> to vector<2x128xf32>
    %21 = arith.mulf %16, %20 : vector<2x128xf32>
    %c0_9 = arith.constant 0 : index
    %c0_10 = arith.constant 0 : index
    %22 = vector.load %arg4[%c0_9, %c0_10] : memref<1x128xf32, #tpu.memory_space<vmem>>, vector<1x128xf32>
    %23 = vector.broadcast %22 : vector<1x128xf32> to vector<2x128xf32>
    %24 = arith.mulf %21, %23 : vector<2x128xf32>
    %c0_11 = arith.constant 0 : index
    %c0_12 = arith.constant 0 : index
    %25 = vector.load %arg5[%c0_11, %c0_12] : memref<1x128xf32, #tpu.memory_space<vmem>>, vector<1x128xf32>
    %26 = vector.broadcast %25 : vector<1x128xf32> to vector<2x128xf32>
    %27 = arith.addf %24, %26 : vector<2x128xf32>
    %28 = arith.truncf %27 : vector<2x128xf32> to vector<2x128xbf16>
    %c0_13 = arith.constant 0 : index
    %c0_14 = arith.constant 0 : index
    %29 = vector.load %arg6[%c0_13, %c0_14] : memref<128x128xbf16, #tpu.memory_space<vmem>>, vector<128x128xbf16>
    %cst_15 = arith.constant dense<0.000000e+00> : vector<2x128xf32>
    %30 = tpu.matmul %28, %29, %cst_15 {dimension_numbers = #tpu.dot_dimension_numbers<[1], [0], [0], [1], [0, 0, 1, 1], [], []>} : vector<2x128xbf16>, vector<128x128xbf16>, vector<2x128xf32> -> vector<2x128xf32>
    %c0_16 = arith.constant 0 : index
    %c0_17 = arith.constant 0 : index
    %31 = vector.load %arg7[%c0_16, %c0_17] : memref<1x128xf32, #tpu.memory_space<vmem>>, vector<1x128xf32>
    %32 = vector.broadcast %31 : vector<1x128xf32> to vector<2x128xf32>
    %33 = arith.addf %30, %32 : vector<2x128xf32>
    %cst_18 = arith.constant 0.176776692 : f32
    %34 = vector.broadcast %cst_18 : f32 to vector<2x128xf32>
    %35 = arith.mulf %33, %34 : vector<2x128xf32>
    %36 = arith.truncf %3 : vector<16x128xf32> to vector<16x128xbf16>
    %c0_19 = arith.constant 0 : index
    %c0_20 = arith.constant 0 : index
    %37 = vector.load %arg8[%c0_19, %c0_20] : memref<128x256xbf16, #tpu.memory_space<vmem>>, vector<128x256xbf16>
    %cst_21 = arith.constant dense<0.000000e+00> : vector<16x256xf32>
    %38 = tpu.matmul %36, %37, %cst_21 {dimension_numbers = #tpu.dot_dimension_numbers<[1], [0], [0], [1], [0, 0, 1, 1], [], []>} : vector<16x128xbf16>, vector<128x256xbf16>, vector<16x256xf32> -> vector<16x256xf32>
    %c0_22 = arith.constant 0 : index
    %c0_23 = arith.constant 0 : index
    %39 = vector.load %arg9[%c0_22, %c0_23] : memref<1x256xf32, #tpu.memory_space<vmem>>, vector<1x256xf32>
    %40 = vector.broadcast %39 : vector<1x256xf32> to vector<16x256xf32>
    %41 = arith.addf %38, %40 : vector<16x256xf32>
    %42 = arith.truncf %35 : vector<2x128xf32> to vector<2x128xbf16>
    %43 = vector.extract_strided_slice %41 {offsets = [0, 0], sizes = [16, 128], strides = [1, 1]} : vector<16x256xf32> to vector<16x128xf32>
    %44 = arith.truncf %43 : vector<16x128xf32> to vector<16x128xbf16>
    %45 = vector.extract_strided_slice %41 {offsets = [0, 128], sizes = [16, 128], strides = [1, 1]} : vector<16x256xf32> to vector<16x128xf32>
    %46 = arith.truncf %45 : vector<16x128xf32> to vector<16x128xbf16>
    %c0_24 = arith.constant 0 : index
    %c0_25 = arith.constant 0 : index
    %47 = vector.load %arg3[%c0_24, %c0_25] : memref<1x16xf32, #tpu.memory_space<vmem>>, vector<1x16xf32>
    %48 = vector.shape_cast %47 : vector<1x16xf32> to vector<1x16xf32>
    %49 = vector.broadcast %48 : vector<1x16xf32> to vector<2x16xf32>
    %c0_26 = arith.constant 0 : index
    %c0_27 = arith.constant 0 : index
    %50 = vector.load %arg10[%c0_26, %c0_27] : memref<128x128xbf16, #tpu.memory_space<vmem>>, vector<128x128xbf16>
    %cst_28 = arith.constant 0.000000e+00 : f32
    %51 = vector.broadcast %cst_28 : f32 to vector<2x128xf32>
    %52 = vector.extract_strided_slice %42 {offsets = [0, 0], sizes = [2, 32], strides = [1, 1]} : vector<2x128xbf16> to vector<2x32xbf16>
    %53 = vector.extract_strided_slice %44 {offsets = [0, 0], sizes = [16, 32], strides = [1, 1]} : vector<16x128xbf16> to vector<16x32xbf16>
    %54 = vector.extract_strided_slice %46 {offsets = [0, 0], sizes = [16, 32], strides = [1, 1]} : vector<16x128xbf16> to vector<16x32xbf16>
    %cst_29 = arith.constant dense<0.000000e+00> : vector<2x16xf32>
    %55 = tpu.matmul %52, %53, %cst_29 {dimension_numbers = #tpu.dot_dimension_numbers<[1], [1], [0], [0], [0, 0, 1, 0], [], []>} : vector<2x32xbf16>, vector<16x32xbf16>, vector<2x16xf32> -> vector<2x16xf32>
    %56 = arith.addf %55, %49 : vector<2x16xf32>
    %cst_30 = arith.constant dense<0xFF800000> : vector<2xf32>
    %57 = vector.multi_reduction <maximumf>, %56, %cst_30 [1] : vector<2x16xf32> to vector<2xf32>
    %58 = vector.shape_cast %57 : vector<2xf32> to vector<2x1xf32>
    %59 = vector.broadcast %58 : vector<2x1xf32> to vector<2x16xf32>
    %60 = arith.subf %56, %59 : vector<2x16xf32>
    %61 = math.exp %60 : vector<2x16xf32>
    %cst_31 = arith.constant dense<0.000000e+00> : vector<2xf32>
    %62 = vector.multi_reduction <add>, %61, %cst_31 [1] : vector<2x16xf32> to vector<2xf32>
    %63 = vector.shape_cast %62 : vector<2xf32> to vector<2x1xf32>
    %64 = tpu.reciprocal %63 {approx = true} : vector<2x1xf32> -> vector<2x1xf32>
    %65 = vector.broadcast %64 : vector<2x1xf32> to vector<2x16xf32>
    %66 = arith.mulf %61, %65 : vector<2x16xf32>
    %67 = arith.truncf %66 : vector<2x16xf32> to vector<2x16xbf16>
    %cst_32 = arith.constant dense<0.000000e+00> : vector<2x32xf32>
    %68 = tpu.matmul %67, %54, %cst_32 {dimension_numbers = #tpu.dot_dimension_numbers<[1], [0], [0], [1], [0, 0, 1, 1], [], []>} : vector<2x16xbf16>, vector<16x32xbf16>, vector<2x32xf32> -> vector<2x32xf32>
    %69 = arith.truncf %68 : vector<2x32xf32> to vector<2x32xbf16>
    %70 = vector.extract_strided_slice %50 {offsets = [0, 0], sizes = [32, 128], strides = [1, 1]} : vector<128x128xbf16> to vector<32x128xbf16>
    %cst_33 = arith.constant dense<0.000000e+00> : vector<2x128xf32>
    %71 = tpu.matmul %69, %70, %cst_33 {dimension_numbers = #tpu.dot_dimension_numbers<[1], [0], [0], [1], [0, 0, 1, 1], [], []>} : vector<2x32xbf16>, vector<32x128xbf16>, vector<2x128xf32> -> vector<2x128xf32>
    %72 = arith.addf %51, %71 : vector<2x128xf32>
    %73 = vector.extract_strided_slice %42 {offsets = [0, 32], sizes = [2, 32], strides = [1, 1]} : vector<2x128xbf16> to vector<2x32xbf16>
    %74 = vector.extract_strided_slice %44 {offsets = [0, 32], sizes = [16, 32], strides = [1, 1]} : vector<16x128xbf16> to vector<16x32xbf16>
    %75 = vector.extract_strided_slice %46 {offsets = [0, 32], sizes = [16, 32], strides = [1, 1]} : vector<16x128xbf16> to vector<16x32xbf16>
    %cst_34 = arith.constant dense<0.000000e+00> : vector<2x16xf32>
    %76 = tpu.matmul %73, %74, %cst_34 {dimension_numbers = #tpu.dot_dimension_numbers<[1], [1], [0], [0], [0, 0, 1, 0], [], []>} : vector<2x32xbf16>, vector<16x32xbf16>, vector<2x16xf32> -> vector<2x16xf32>
    %77 = arith.addf %76, %49 : vector<2x16xf32>
    %cst_35 = arith.constant dense<0xFF800000> : vector<2xf32>
    %78 = vector.multi_reduction <maximumf>, %77, %cst_35 [1] : vector<2x16xf32> to vector<2xf32>
    %79 = vector.shape_cast %78 : vector<2xf32> to vector<2x1xf32>
    %80 = vector.broadcast %79 : vector<2x1xf32> to vector<2x16xf32>
    %81 = arith.subf %77, %80 : vector<2x16xf32>
    %82 = math.exp %81 : vector<2x16xf32>
    %cst_36 = arith.constant dense<0.000000e+00> : vector<2xf32>
    %83 = vector.multi_reduction <add>, %82, %cst_36 [1] : vector<2x16xf32> to vector<2xf32>
    %84 = vector.shape_cast %83 : vector<2xf32> to vector<2x1xf32>
    %85 = tpu.reciprocal %84 {approx = true} : vector<2x1xf32> -> vector<2x1xf32>
    %86 = vector.broadcast %85 : vector<2x1xf32> to vector<2x16xf32>
    %87 = arith.mulf %82, %86 : vector<2x16xf32>
    %88 = arith.truncf %87 : vector<2x16xf32> to vector<2x16xbf16>
    %cst_37 = arith.constant dense<0.000000e+00> : vector<2x32xf32>
    %89 = tpu.matmul %88, %75, %cst_37 {dimension_numbers = #tpu.dot_dimension_numbers<[1], [0], [0], [1], [0, 0, 1, 1], [], []>} : vector<2x16xbf16>, vector<16x32xbf16>, vector<2x32xf32> -> vector<2x32xf32>
    %90 = arith.truncf %89 : vector<2x32xf32> to vector<2x32xbf16>
    %91 = vector.extract_strided_slice %50 {offsets = [32, 0], sizes = [32, 128], strides = [1, 1]} : vector<128x128xbf16> to vector<32x128xbf16>
    %cst_38 = arith.constant dense<0.000000e+00> : vector<2x128xf32>
    %92 = tpu.matmul %90, %91, %cst_38 {dimension_numbers = #tpu.dot_dimension_numbers<[1], [0], [0], [1], [0, 0, 1, 1], [], []>} : vector<2x32xbf16>, vector<32x128xbf16>, vector<2x128xf32> -> vector<2x128xf32>
    %93 = arith.addf %72, %92 : vector<2x128xf32>
    %94 = vector.extract_strided_slice %42 {offsets = [0, 64], sizes = [2, 32], strides = [1, 1]} : vector<2x128xbf16> to vector<2x32xbf16>
    %95 = vector.extract_strided_slice %44 {offsets = [0, 64], sizes = [16, 32], strides = [1, 1]} : vector<16x128xbf16> to vector<16x32xbf16>
    %96 = vector.extract_strided_slice %46 {offsets = [0, 64], sizes = [16, 32], strides = [1, 1]} : vector<16x128xbf16> to vector<16x32xbf16>
    %cst_39 = arith.constant dense<0.000000e+00> : vector<2x16xf32>
    %97 = tpu.matmul %94, %95, %cst_39 {dimension_numbers = #tpu.dot_dimension_numbers<[1], [1], [0], [0], [0, 0, 1, 0], [], []>} : vector<2x32xbf16>, vector<16x32xbf16>, vector<2x16xf32> -> vector<2x16xf32>
    %98 = arith.addf %97, %49 : vector<2x16xf32>
    %cst_40 = arith.constant dense<0xFF800000> : vector<2xf32>
    %99 = vector.multi_reduction <maximumf>, %98, %cst_40 [1] : vector<2x16xf32> to vector<2xf32>
    %100 = vector.shape_cast %99 : vector<2xf32> to vector<2x1xf32>
    %101 = vector.broadcast %100 : vector<2x1xf32> to vector<2x16xf32>
    %102 = arith.subf %98, %101 : vector<2x16xf32>
    %103 = math.exp %102 : vector<2x16xf32>
    %cst_41 = arith.constant dense<0.000000e+00> : vector<2xf32>
    %104 = vector.multi_reduction <add>, %103, %cst_41 [1] : vector<2x16xf32> to vector<2xf32>
    %105 = vector.shape_cast %104 : vector<2xf32> to vector<2x1xf32>
    %106 = tpu.reciprocal %105 {approx = true} : vector<2x1xf32> -> vector<2x1xf32>
    %107 = vector.broadcast %106 : vector<2x1xf32> to vector<2x16xf32>
    %108 = arith.mulf %103, %107 : vector<2x16xf32>
    %109 = arith.truncf %108 : vector<2x16xf32> to vector<2x16xbf16>
    %cst_42 = arith.constant dense<0.000000e+00> : vector<2x32xf32>
    %110 = tpu.matmul %109, %96, %cst_42 {dimension_numbers = #tpu.dot_dimension_numbers<[1], [0], [0], [1], [0, 0, 1, 1], [], []>} : vector<2x16xbf16>, vector<16x32xbf16>, vector<2x32xf32> -> vector<2x32xf32>
    %111 = arith.truncf %110 : vector<2x32xf32> to vector<2x32xbf16>
    %112 = vector.extract_strided_slice %50 {offsets = [64, 0], sizes = [32, 128], strides = [1, 1]} : vector<128x128xbf16> to vector<32x128xbf16>
    %cst_43 = arith.constant dense<0.000000e+00> : vector<2x128xf32>
    %113 = tpu.matmul %111, %112, %cst_43 {dimension_numbers = #tpu.dot_dimension_numbers<[1], [0], [0], [1], [0, 0, 1, 1], [], []>} : vector<2x32xbf16>, vector<32x128xbf16>, vector<2x128xf32> -> vector<2x128xf32>
    %114 = arith.addf %93, %113 : vector<2x128xf32>
    %115 = vector.extract_strided_slice %42 {offsets = [0, 96], sizes = [2, 32], strides = [1, 1]} : vector<2x128xbf16> to vector<2x32xbf16>
    %116 = vector.extract_strided_slice %44 {offsets = [0, 96], sizes = [16, 32], strides = [1, 1]} : vector<16x128xbf16> to vector<16x32xbf16>
    %117 = vector.extract_strided_slice %46 {offsets = [0, 96], sizes = [16, 32], strides = [1, 1]} : vector<16x128xbf16> to vector<16x32xbf16>
    %cst_44 = arith.constant dense<0.000000e+00> : vector<2x16xf32>
    %118 = tpu.matmul %115, %116, %cst_44 {dimension_numbers = #tpu.dot_dimension_numbers<[1], [1], [0], [0], [0, 0, 1, 0], [], []>} : vector<2x32xbf16>, vector<16x32xbf16>, vector<2x16xf32> -> vector<2x16xf32>
    %119 = arith.addf %118, %49 : vector<2x16xf32>
    %cst_45 = arith.constant dense<0xFF800000> : vector<2xf32>
    %120 = vector.multi_reduction <maximumf>, %119, %cst_45 [1] : vector<2x16xf32> to vector<2xf32>
    %121 = vector.shape_cast %120 : vector<2xf32> to vector<2x1xf32>
    %122 = vector.broadcast %121 : vector<2x1xf32> to vector<2x16xf32>
    %123 = arith.subf %119, %122 : vector<2x16xf32>
    %124 = math.exp %123 : vector<2x16xf32>
    %cst_46 = arith.constant dense<0.000000e+00> : vector<2xf32>
    %125 = vector.multi_reduction <add>, %124, %cst_46 [1] : vector<2x16xf32> to vector<2xf32>
    %126 = vector.shape_cast %125 : vector<2xf32> to vector<2x1xf32>
    %127 = tpu.reciprocal %126 {approx = true} : vector<2x1xf32> -> vector<2x1xf32>
    %128 = vector.broadcast %127 : vector<2x1xf32> to vector<2x16xf32>
    %129 = arith.mulf %124, %128 : vector<2x16xf32>
    %130 = arith.truncf %129 : vector<2x16xf32> to vector<2x16xbf16>
    %cst_47 = arith.constant dense<0.000000e+00> : vector<2x32xf32>
    %131 = tpu.matmul %130, %117, %cst_47 {dimension_numbers = #tpu.dot_dimension_numbers<[1], [0], [0], [1], [0, 0, 1, 1], [], []>} : vector<2x16xbf16>, vector<16x32xbf16>, vector<2x32xf32> -> vector<2x32xf32>
    %132 = arith.truncf %131 : vector<2x32xf32> to vector<2x32xbf16>
    %133 = vector.extract_strided_slice %50 {offsets = [96, 0], sizes = [32, 128], strides = [1, 1]} : vector<128x128xbf16> to vector<32x128xbf16>
    %cst_48 = arith.constant dense<0.000000e+00> : vector<2x128xf32>
    %134 = tpu.matmul %132, %133, %cst_48 {dimension_numbers = #tpu.dot_dimension_numbers<[1], [0], [0], [1], [0, 0, 1, 1], [], []>} : vector<2x32xbf16>, vector<32x128xbf16>, vector<2x128xf32> -> vector<2x128xf32>
    %135 = arith.addf %114, %134 : vector<2x128xf32>
    %136 = arith.addf %1, %135 : vector<2x128xf32>
    %c0_49 = arith.constant 0 : index
    %c0_50 = arith.constant 0 : index
    %137 = vector.load %arg11[%c0_49, %c0_50] : memref<1x128xf32, #tpu.memory_space<vmem>>, vector<1x128xf32>
    %138 = vector.broadcast %137 : vector<1x128xf32> to vector<2x128xf32>
    %139 = arith.addf %136, %138 : vector<2x128xf32>
    %cst_51 = arith.constant dense<0.000000e+00> : vector<2xf32>
    %140 = vector.multi_reduction <add>, %139, %cst_51 [1] : vector<2x128xf32> to vector<2xf32>
    %141 = vector.shape_cast %140 : vector<2xf32> to vector<2x1xf32>
    %cst_52 = arith.constant 1.280000e+02 : f32
    %142 = vector.broadcast %cst_52 : f32 to vector<2x1xf32>
    %143 = arith.divf %141, %142 : vector<2x1xf32>
    %144 = vector.broadcast %143 : vector<2x1xf32> to vector<2x128xf32>
    %145 = arith.subf %139, %144 : vector<2x128xf32>
    %146 = arith.mulf %145, %145 : vector<2x128xf32>
    %cst_53 = arith.constant dense<0.000000e+00> : vector<2xf32>
    %147 = vector.multi_reduction <add>, %146, %cst_53 [1] : vector<2x128xf32> to vector<2xf32>
    %148 = vector.shape_cast %147 : vector<2xf32> to vector<2x1xf32>
    %cst_54 = arith.constant 1.280000e+02 : f32
    %149 = vector.broadcast %cst_54 : f32 to vector<2x1xf32>
    %150 = arith.divf %148, %149 : vector<2x1xf32>
    %151 = vector.broadcast %143 : vector<2x1xf32> to vector<2x128xf32>
    %152 = arith.subf %139, %151 : vector<2x128xf32>
    %cst_55 = arith.constant 9.99999997E-7 : f32
    %153 = vector.broadcast %cst_55 : f32 to vector<2x1xf32>
    %154 = arith.addf %150, %153 : vector<2x1xf32>
    %155 = math.rsqrt %154 : vector<2x1xf32>
    %156 = vector.broadcast %155 : vector<2x1xf32> to vector<2x128xf32>
    %157 = arith.mulf %152, %156 : vector<2x128xf32>
    %c0_56 = arith.constant 0 : index
    %c0_57 = arith.constant 0 : index
    %158 = vector.load %arg12[%c0_56, %c0_57] : memref<1x128xf32, #tpu.memory_space<vmem>>, vector<1x128xf32>
    %159 = vector.broadcast %158 : vector<1x128xf32> to vector<2x128xf32>
    %160 = arith.mulf %157, %159 : vector<2x128xf32>
    %c0_58 = arith.constant 0 : index
    %c0_59 = arith.constant 0 : index
    %161 = vector.load %arg13[%c0_58, %c0_59] : memref<1x128xf32, #tpu.memory_space<vmem>>, vector<1x128xf32>
    %162 = vector.broadcast %161 : vector<1x128xf32> to vector<2x128xf32>
    %163 = arith.addf %160, %162 : vector<2x128xf32>
    %164 = arith.truncf %163 : vector<2x128xf32> to vector<2x128xbf16>
    %c0_60 = arith.constant 0 : index
    %c0_61 = arith.constant 0 : index
    %165 = vector.load %arg14[%c0_60, %c0_61] : memref<128x256xbf16, #tpu.memory_space<vmem>>, vector<128x256xbf16>
    %cst_62 = arith.constant dense<0.000000e+00> : vector<2x256xf32>
    %166 = tpu.matmul %164, %165, %cst_62 {dimension_numbers = #tpu.dot_dimension_numbers<[1], [0], [0], [1], [0, 0, 1, 1], [], []>} : vector<2x128xbf16>, vector<128x256xbf16>, vector<2x256xf32> -> vector<2x256xf32>
    %c0_63 = arith.constant 0 : index
    %c0_64 = arith.constant 0 : index
    %167 = vector.load %arg15[%c0_63, %c0_64] : memref<1x256xf32, #tpu.memory_space<vmem>>, vector<1x256xf32>
    %168 = vector.broadcast %167 : vector<1x256xf32> to vector<2x256xf32>
    %169 = arith.addf %166, %168 : vector<2x256xf32>
    %cst_65 = arith.constant 0.000000e+00 : f32
    %170 = vector.broadcast %cst_65 : f32 to vector<2x256xf32>
    %171 = arith.maximumf %169, %170 : vector<2x256xf32>
    %172 = arith.truncf %171 : vector<2x256xf32> to vector<2x256xbf16>
    %c0_66 = arith.constant 0 : index
    %c0_67 = arith.constant 0 : index
    %173 = vector.load %arg16[%c0_66, %c0_67] : memref<256x128xbf16, #tpu.memory_space<vmem>>, vector<256x128xbf16>
    %cst_68 = arith.constant dense<0.000000e+00> : vector<2x128xf32>
    %174 = tpu.matmul %172, %173, %cst_68 {dimension_numbers = #tpu.dot_dimension_numbers<[1], [0], [0], [1], [0, 0, 1, 1], [], []>} : vector<2x256xbf16>, vector<256x128xbf16>, vector<2x128xf32> -> vector<2x128xf32>
    %175 = arith.addf %139, %174 : vector<2x128xf32>
    %c0_69 = arith.constant 0 : index
    %c0_70 = arith.constant 0 : index
    %176 = vector.load %arg17[%c0_69, %c0_70] : memref<1x128xf32, #tpu.memory_space<vmem>>, vector<1x128xf32>
    %177 = vector.broadcast %176 : vector<1x128xf32> to vector<2x128xf32>
    %178 = arith.addf %175, %177 : vector<2x128xf32>
    %c0_71 = arith.constant 0 : index
    %c0_72 = arith.constant 0 : index
    %c0_73 = arith.constant 0 : index
    %179 = vector.load %arg18[%c0_71, %c0_72, %c0_73] : memref<1x2x128xf32, #tpu.memory_space<vmem>>, vector<1x2x128xf32>
    %180 = vector.shape_cast %179 : vector<1x2x128xf32> to vector<2x128xf32>
    %181 = vector.shape_cast %178 : vector<2x128xf32> to vector<1x2x128xf32>
    tpu.vector_store %arg18[%c0_71, %c0_72, %c0_73], %181 {strides = array<i32>} : memref<1x2x128xf32, #tpu.memory_space<vmem>>, vector<1x2x128xf32>,
    return
  }
  func.func @transform_0(%arg0: i32) -> (i32, i32, i32) {
    %c0_i32 = arith.constant 0 : i32
    %c0_i32_0 = arith.constant 0 : i32
    %c0_i32_1 = arith.constant 0 : i32
    return %arg0, %c0_i32, %c0_i32_0 : i32, i32, i32
  }
  func.func @transform_1(%arg0: i32) -> (i32, i32, i32) {
    %c0_i32 = arith.constant 0 : i32
    %c0_i32_0 = arith.constant 0 : i32
    %c0_i32_1 = arith.constant 0 : i32
    %c0_i32_2 = arith.constant 0 : i32
    return %c0_i32, %c0_i32_0, %c0_i32_1 : i32, i32, i32
  }
  func.func @transform_2(%arg0: i32) -> (i32, i32) {
    %c0_i32 = arith.constant 0 : i32
    %c0_i32_0 = arith.constant 0 : i32
    %c0_i32_1 = arith.constant 0 : i32
    return %c0_i32, %c0_i32_0 : i32, i32
  }
  func.func @transform_3(%arg0: i32) -> (i32, i32) {
    %c0_i32 = arith.constant 0 : i32
    %c0_i32_0 = arith.constant 0 : i32
    %c0_i32_1 = arith.constant 0 : i32
    return %c0_i32, %c0_i32_0 : i32, i32
  }
  func.func @transform_4(%arg0: i32) -> (i32, i32) {
    %c0_i32 = arith.constant 0 : i32
    %c0_i32_0 = arith.constant 0 : i32
    %c0_i32_1 = arith.constant 0 : i32
    return %c0_i32, %c0_i32_0 : i32, i32
  }
  func.func @transform_5(%arg0: i32) -> (i32, i32) {
    %c0_i32 = arith.constant 0 : i32
    %c0_i32_0 = arith.constant 0 : i32
    %c0_i32_1 = arith.constant 0 : i32
    return %c0_i32, %c0_i32_0 : i32, i32
  }
  func.func @transform_6(%arg0: i32) -> (i32, i32) {
    %c0_i32 = arith.constant 0 : i32
    %c0_i32_0 = arith.constant 0 : i32
    %c0_i32_1 = arith.constant 0 : i32
    return %c0_i32, %c0_i32_0 : i32, i32
  }
  func.func @transform_7(%arg0: i32) -> (i32, i32) {
    %c0_i32 = arith.constant 0 : i32
    %c0_i32_0 = arith.constant 0 : i32
    %c0_i32_1 = arith.constant 0 : i32
    return %c0_i32, %c0_i32_0 : i32, i32
  }
  func.func @transform_8(%arg0: i32) -> (i32, i32) {
    %c0_i32 = arith.constant 0 : i32
    %c0_i32_0 = arith.constant 0 : i32
    %c0_i32_1 = arith.constant 0 : i32
    return %c0_i32, %c0_i32_0 : i32, i32
  }
  func.func @transform_9(%arg0: i32) -> (i32, i32) {
    %c0_i32 = arith.constant 0 : i32
    %c0_i32_0 = arith.constant 0 : i32
    %c0_i32_1 = arith.constant 0 : i32
    return %c0_i32, %c0_i32_0 : i32, i32
  }
  func.func @transform_10(%arg0: i32) -> (i32, i32) {
    %c0_i32 = arith.constant 0 : i32
    %c0_i32_0 = arith.constant 0 : i32
    %c0_i32_1 = arith.constant 0 : i32
    return %c0_i32, %c0_i32_0 : i32, i32
  }
  func.func @transform_11(%arg0: i32) -> (i32, i32) {
    %c0_i32 = arith.constant 0 : i32
    %c0_i32_0 = arith.constant 0 : i32
    %c0_i32_1 = arith.constant 0 : i32
    return %c0_i32, %c0_i32_0 : i32, i32
  }
  func.func @transform_12(%arg0: i32) -> (i32, i32) {
    %c0_i32 = arith.constant 0 : i32
    %c0_i32_0 = arith.constant 0 : i32
    %c0_i32_1 = arith.constant 0 : i32
    return %c0_i32, %c0_i32_0 : i32, i32
  }
  func.func @transform_13(%arg0: i32) -> (i32, i32) {
    %c0_i32 = arith.constant 0 : i32
    %c0_i32_0 = arith.constant 0 : i32
    %c0_i32_1 = arith.constant 0 : i32
    return %c0_i32, %c0_i32_0 : i32, i32
  }
  func.func @transform_14(%arg0: i32) -> (i32, i32) {
    %c0_i32 = arith.constant 0 : i32
    %c0_i32_0 = arith.constant 0 : i32
    %c0_i32_1 = arith.constant 0 : i32
    return %c0_i32, %c0_i32_0 : i32, i32
  }
  func.func @transform_15(%arg0: i32) -> (i32, i32) {
    %c0_i32 = arith.constant 0 : i32
    %c0_i32_0 = arith.constant 0 : i32
    %c0_i32_1 = arith.constant 0 : i32
    return %c0_i32, %c0_i32_0 : i32, i32
  }
  func.func @transform_16(%arg0: i32) -> (i32, i32) {
    %c0_i32 = arith.constant 0 : i32
    %c0_i32_0 = arith.constant 0 : i32
    %c0_i32_1 = arith.constant 0 : i32
    return %c0_i32, %c0_i32_0 : i32, i32
  }
  func.func @transform_17(%arg0: i32) -> (i32, i32, i32) {
    %c0_i32 = arith.constant 0 : i32
    %c0_i32_0 = arith.constant 0 : i32
    %c0_i32_1 = arith.constant 0 : i32
    return %arg0, %c0_i32, %c0_i32_0 : i32, i32, i32
  }
}

</mosaic_0001>

<llo_original>
// kernel: kgmodel_vwmha_forward.6
$region0: #{kgmodel_vwmha_forward.6}
  #allocation0 [shape = 'u32[]', space=smem, size = 0x4, offset = 0x4, fixed_abs, tag = 'smem constant byte address 0x4 - core index']
  #allocation1 [shape = 'u32[144,128]{1,0:T(1,128)}', space=vmem, size = 0x12000, scoped, tag = 'internal scratch']
  %s0 = inlined_call_operand.vmem [shape: f32[16,128], index: 0, kind: input, shape index: {}]
  %s1 = inlined_call_operand.vmem [shape: bf16[128,128], index: 1, kind: input, shape index: {}]
  %s2 = inlined_call_operand.vmem [shape: f32[1,128], index: 2, kind: input, shape index: {}]
  %s3 = inlined_call_operand.vmem [shape: f32[16,128], index: 3, kind: output, shape index: {}]
  %s4 = sld [smem:[#allocation0]]
  $region22: #{kgmodel_vwmha_forward.6} parent=0
    _
  %s6 = ssub.s32 1, %s4
  %s7 = scalar_select 0, %s6, %s4
  // Predicated region
  $region2: #{kgmodel_vwmha_forward.6} parent=0 // pred_check
    _
  $region3: #{kgmodel_vwmha_forward.6} parent=0 // pred_check_branch
    %9 = sbr.rel (0) target = $region5
  $region4: #{kgmodel_vwmha_forward.6} parent=0 // pred_region
    _
  $region5: #{kgmodel_vwmha_forward.6} parent=0 // pred_fallthru
    _
  // Predicated region
  $region6: #{kgmodel_vwmha_forward.6} parent=0 // pred_check
    _
  $region7: #{kgmodel_vwmha_forward.6} parent=0 // pred_check_branch
    %11 = sbr.rel (0) target = $region9
  $region8: #{kgmodel_vwmha_forward.6} parent=0 // pred_region
    _
  $region9: #{kgmodel_vwmha_forward.6} parent=0 // pred_fallthru
    _
  // Predicated region
  $region10: #{kgmodel_vwmha_forward.6} parent=0 // pred_check
    _
  $region11: #{kgmodel_vwmha_forward.6} parent=0 // pred_check_branch
    %13 = sbr.rel (0) target = $region13
  $region12: #{kgmodel_vwmha_forward.6} parent=0 // pred_region
    _
  $region13: #{kgmodel_vwmha_forward.6} parent=0 // pred_fallthru
    _
  %v15 = vld [vmem:[%s0] sm:$0xff]
  %v16 = vld [vmem:[%s0 + $0x8] sm:$0xff]
  %v17 = vpack.c.bf16 %v16, %v15
  %v18 = vld [vmem:[%s1] sm:$0xf]
  %v19 = vld [vmem:[%s1 + $0x4] sm:$0xf]
  %v20 = vld [vmem:[%s1 + $0x8] sm:$0xf]
  %v21 = vld [vmem:[%s1 + $0xc] sm:$0xf]
  %v22 = vld [vmem:[%s1 + $0x10] sm:$0xf]
  %v23 = vld [vmem:[%s1 + $0x14] sm:$0xf]
  %v24 = vld [vmem:[%s1 + $0x18] sm:$0xf]
  %v25 = vld [vmem:[%s1 + $0x1c] sm:$0xf]
  %v26 = vld [vmem:[%s1 + $0x20] sm:$0xf]
  %v27 = vld [vmem:[%s1 + $0x24] sm:$0xf]
  %v28 = vld [vmem:[%s1 + $0x28] sm:$0xf]
  %v29 = vld [vmem:[%s1 + $0x2c] sm:$0xf]
  %v30 = vld [vmem:[%s1 + $0x30] sm:$0xf]
  %v31 = vld [vmem:[%s1 + $0x34] sm:$0xf]
  %v32 = vld [vmem:[%s1 + $0x38] sm:$0xf]
  %v33 = vld [vmem:[%s1 + $0x3c] sm:$0xf]
  %v34 = vld [vmem:[%s2] sm:$0x1]
  %v36 = vlaneseq
  %v37 = vshrl.u32 %v36, 7
  %v38 = vsub.s32 0, %v37
  %v39 = vrot.slane %v34, %v38
  %v57 = vunpack.c.l.b16 %v18
  %v58 = vunpack.c.l.b16 %v19
  %v59 = vunpack.c.l.b16 %v20
  %v60 = vunpack.c.l.b16 %v21
  %v61 = vunpack.c.l.b16 %v22
  %v62 = vunpack.c.l.b16 %v23
  %v63 = vunpack.c.l.b16 %v24
  %v64 = vunpack.c.l.b16 %v25
  %v65 = vunpack.c.l.b16 %v26
  %v66 = vunpack.c.l.b16 %v27
  %v67 = vunpack.c.l.b16 %v28
  %v68 = vunpack.c.l.b16 %v29
  %v69 = vunpack.c.l.b16 %v30
  %v70 = vunpack.c.l.b16 %v31
  %v71 = vunpack.c.l.b16 %v32
  %v72 = vunpack.c.l.b16 %v33
  %v73 = vpack.c.b16 %v58, %v57
  %v74 = vpack.c.b16 %v60, %v59
  %v75 = vpack.c.b16 %v62, %v61
  %v76 = vpack.c.b16 %v64, %v63
  %v77 = vpack.c.b16 %v66, %v65
  %v78 = vpack.c.b16 %v68, %v67
  %v79 = vpack.c.b16 %v70, %v69
  %v80 = vpack.c.b16 %v72, %v71
  %89 = vmatprep.subr.bf16.mxu0 0
  %90 = vmatpush1.bf16.msra.mxu0 %v80
  %91 = vmatprep.subr.bf16.mxu0 0
  %92 = vmatpush1.bf16.msra.mxu0 %v79
  %93 = vmatprep.subr.bf16.mxu0 0
  %94 = vmatpush1.bf16.msra.mxu0 %v78
  %95 = vmatprep.subr.bf16.mxu0 0
  %96 = vmatpush1.bf16.msra.mxu0 %v77
  %97 = vmatprep.subr.bf16.mxu0 0
  %98 = vmatpush1.bf16.msra.mxu0 %v76
  %99 = vmatprep.subr.bf16.mxu0 0
  %100 = vmatpush1.bf16.msra.mxu0 %v75
  %101 = vmatprep.subr.bf16.mxu0 0
  %102 = vmatpush1.bf16.msra.mxu0 %v74
  %103 = vmatprep.subr.bf16.mxu0 0
  %104 = vmatpush1.bf16.msra.mxu0 %v73
  %105 = vmatprep.subr.bf16.mxu0 0
  %106 = vmatpush2.bf16.msra.mxu0 0
  %107 = vmatprep.subr.bf16.mxu0 0
  %108 = vmatpush2.bf16.msra.mxu0 0
  %109 = vmatprep.subr.bf16.mxu0 0
  %110 = vmatpush2.bf16.msra.mxu0 0
  %111 = vmatprep.subr.bf16.mxu0 0
  %112 = vmatpush2.bf16.msra.mxu0 0
  %113 = vmatprep.subr.bf16.mxu0 0
  %114 = vmatpush2.bf16.msra.mxu0 0
  %115 = vmatprep.subr.bf16.mxu0 0
  %116 = vmatpush2.bf16.msra.mxu0 0
  %117 = vmatprep.subr.bf16.mxu0 0
  %118 = vmatpush2.bf16.msra.mxu0 0
  %119 = vmatprep.subr.bf16.mxu0 0
  %120 = vmatpush2.bf16.msra.mxu0 0
  %121 = vmatprep.mubr.bf16.mxu0 0
  %122 = vmatmul.mubr.bf16.gmra.mxu0 %v17
  %v123 = vpop.f32.mrf.mxu0
  %v124 = vadd.f32 %v39, %v123
  %v125 = vpop.f32.mrf.mxu0
  %v126 = vpop.f32.mrf.mxu0
  %v127 = vadd.f32 %v39, %v126
  %v128 = vpop.f32.mrf.mxu0
  %129 = vdwg.mxu0
  %130 = vst [vmem:[%s3] sm:$0xff] %v124
  %131 = vst [vmem:[%s3 + $0x8] sm:$0xff] %v127
  // Predicated region
  $region14: #{kgmodel_vwmha_forward.6} parent=0 // pred_check
    _
  $region15: #{kgmodel_vwmha_forward.6} parent=0 // pred_check_branch
    %133 = sbr.rel (0) target = $region17
  $region16: #{kgmodel_vwmha_forward.6} parent=0 // pred_region
    _
  $region17: #{kgmodel_vwmha_forward.6} parent=0 // pred_fallthru
    _
  // Predicated region
  $region18: #{kgmodel_vwmha_forward.6} parent=0 // pred_check
    _
  $region19: #{kgmodel_vwmha_forward.6} parent=0 // pred_check_branch
    %135 = sbr.rel (0) target = $region21
  $region20: #{kgmodel_vwmha_forward.6} parent=0 // pred_region
    _
  $region21: #{kgmodel_vwmha_forward.6} parent=0 // pred_fallthru
    _

// kernel: kgmodel_vwmha_forward.10
$region0: #{kgmodel_vwmha_forward.10}
  #allocation0 [shape = 'u32[]', space=smem, size = 0x4, offset = 0x4, fixed_abs, tag = 'smem constant byte address 0x4 - core index']
  #allocation1 [shape = 'u32[144,128]{1,0:T(1,128)}', space=vmem, size = 0x12000, scoped, tag = 'internal scratch']
  %s0 = inlined_call_operand.vmem [shape: f32[16,768], index: 0, kind: input, shape index: {}]
  %s1 = inlined_call_operand.vmem [shape: bf16[768,128], index: 1, kind: input, shape index: {}]
  %s2 = inlined_call_operand.vmem [shape: f32[1,128], index: 2, kind: input, shape index: {}]
  %s3 = inlined_call_operand.vmem [shape: f32[16,128], index: 3, kind: output, shape index: {}]
  %s4 = sld [smem:[#allocation0]]
  $region22: #{kgmodel_vwmha_forward.10} parent=0
    _
  %s6 = ssub.s32 1, %s4
  %s7 = scalar_select 0, %s6, %s4
  // Predicated region
  $region2: #{kgmodel_vwmha_forward.10} parent=0 // pred_check
    _
  $region3: #{kgmodel_vwmha_forward.10} parent=0 // pred_check_branch
    %9 = sbr.rel (0) target = $region5
  $region4: #{kgmodel_vwmha_forward.10} parent=0 // pred_region
    _
  $region5: #{kgmodel_vwmha_forward.10} parent=0 // pred_fallthru
    _
  // Predicated region
  $region6: #{kgmodel_vwmha_forward.10} parent=0 // pred_check
    _
  $region7: #{kgmodel_vwmha_forward.10} parent=0 // pred_check_branch
    %11 = sbr.rel (0) target = $region9
  $region8: #{kgmodel_vwmha_forward.10} parent=0 // pred_region
    _
  $region9: #{kgmodel_vwmha_forward.10} parent=0 // pred_fallthru
    _
  // Predicated region
  $region10: #{kgmodel_vwmha_forward.10} parent=0 // pred_check
    _
  $region11: #{kgmodel_vwmha_forward.10} parent=0 // pred_check_branch
    %13 = sbr.rel (0) target = $region13
  $region12: #{kgmodel_vwmha_forward.10} parent=0 // pred_region
    _
  $region13: #{kgmodel_vwmha_forward.10} parent=0 // pred_fallthru
    _
  %v15 = vld [vmem:[%s0] sm:$0xff]
  %v16 = vld [vmem:[%s0 + $0x8] sm:$0xff]
  %v17 = vld [vmem:[%s0 + $0x10] sm:$0xff]
  %v18 = vld [vmem:[%s0 + $0x18] sm:$0xff]
  %v19 = vld [vmem:[%s0 + $0x20] sm:$0xff]
  %v20 = vld [vmem:[%s0 + $0x28] sm:$0xff]
  %v21 = vld [vmem:[%s0 + $0x30] sm:$0xff]
  %v22 = vld [vmem:[%s0 + $0x38] sm:$0xff]
  %v23 = vld [vmem:[%s0 + $0x40] sm:$0xff]
  %v24 = vld [vmem:[%s0 + $0x48] sm:$0xff]
  %v25 = vld [vmem:[%s0 + $0x50] sm:$0xff]
  %v26 = vld [vmem:[%s0 + $0x58] sm:$0xff]
  %v27 = vpack.c.bf16 %v21, %v15
  %v28 = vpack.c.bf16 %v22, %v16
  %v29 = vpack.c.bf16 %v23, %v17
  %v30 = vpack.c.bf16 %v24, %v18
  %v31 = vpack.c.bf16 %v25, %v19
  %v32 = vpack.c.bf16 %v26, %v20
  %v33 = vld [vmem:[%s1] sm:$0xf]
  %v34 = vld [vmem:[%s1 + $0x4] sm:$0xf]
  %v35 = vld [vmem:[%s1 + $0x8] sm:$0xf]
  %v36 = vld [vmem:[%s1 + $0xc] sm:$0xf]
  %v37 = vld [vmem:[%s1 + $0x10] sm:$0xf]
  %v38 = vld [vmem:[%s1 + $0x14] sm:$0xf]
  %v39 = vld [vmem:[%s1 + $0x18] sm:$0xf]
  %v40 = vld [vmem:[%s1 + $0x1c] sm:$0xf]
  %v41 = vld [vmem:[%s1 + $0x20] sm:$0xf]
  %v42 = vld [vmem:[%s1 + $0x24] sm:$0xf]
  %v43 = vld [vmem:[%s1 + $0x28] sm:$0xf]
  %v44 = vld [vmem:[%s1 + $0x2c] sm:$0xf]
  %v45 = vld [vmem:[%s1 + $0x30] sm:$0xf]
  %v46 = vld [vmem:[%s1 + $0x34] sm:$0xf]
  %v47 = vld [vmem:[%s1 + $0x38] sm:$0xf]
  %v48 = vld [vmem:[%s1 + $0x3c] sm:$0xf]
  %v49 = vld [vmem:[%s1 + $0x40] sm:$0xf]
  %v50 = vld [vmem:[%s1 + $0x44] sm:$0xf]
  %v51 = vld [vmem:[%s1 + $0x48] sm:$0xf]
  %v52 = vld [vmem:[%s1 + $0x4c] sm:$0xf]
  %v53 = vld [vmem:[%s1 + $0x50] sm:$0xf]
  %v54 = vld [vmem:[%s1 + $0x54] sm:$0xf]
  %v55 = vld [vmem:[%s1 + $0x58] sm:$0xf]
  %v56 = vld [vmem:[%s1 + $0x5c] sm:$0xf]
  %v57 = vld [vmem:[%s1 + $0x60] sm:$0xf]
  %v58 = vld [vmem:[%s1 + $0x64] sm:$0xf]
  %v59 = vld [vmem:[%s1 + $0x68] sm:$0xf]
  %v60 = vld [vmem:[%s1 + $0x6c] sm:$0xf]
  %v61 = vld [vmem:[%s1 + $0x70] sm:$0xf]
  %v62 = vld [vmem:[%s1 + $0x74] sm:$0xf]
  %v63 = vld [vmem:[%s1 + $0x78] sm:$0xf]
  %v64 = vld [vmem:[%s1 + $0x7c] sm:$0xf]
  %v65 = vld [vmem:[%s1 + $0x80] sm:$0xf]
  %v66 = vld [vmem:[%s1 + $0x84] sm:$0xf]
  %v67 = vld [vmem:[%s1 + $0x88] sm:$0xf]
  %v68 = vld [vmem:[%s1 + $0x8c] sm:$0xf]
  %v69 = vld [vmem:[%s1 + $0x90] sm:$0xf]
  %v70 = vld [vmem:[%s1 + $0x94] sm:$0xf]
  %v71 = vld [vmem:[%s1 + $0x98] sm:$0xf]
  %v72 = vld [vmem:[%s1 + $0x9c] sm:$0xf]
  %v73 = vld [vmem:[%s1 + $0xa0] sm:$0xf]
  %v74 = vld [vmem:[%s1 + $0xa4] sm:$0xf]
  %v75 = vld [vmem:[%s1 + $0xa8] sm:$0xf]
  %v76 = vld [vmem:[%s1 + $0xac] sm:$0xf]
  %v77 = vld [vmem:[%s1 + $0xb0] sm:$0xf]
  %v78 = vld [vmem:[%s1 + $0xb4] sm:$0xf]
  %v79 = vld [vmem:[%s1 + $0xb8] sm:$0xf]
  %v80 = vld [vmem:[%s1 + $0xbc] sm:$0xf]
  %v81 = vld [vmem:[%s1 + $0xc0] sm:$0xf]
  %v82 = vld [vmem:[%s1 + $0xc4] sm:$0xf]
  %v83 = vld [vmem:[%s1 + $0xc8] sm:$0xf]
  %v84 = vld [vmem:[%s1 + $0xcc] sm:$0xf]
  %v85 = vld [vmem:[%s1 + $0xd0] sm:$0xf]
  %v86 = vld [vmem:[%s1 + $0xd4] sm:$0xf]
  %v87 = vld [vmem:[%s1 + $0xd8] sm:$0xf]
  %v88 = vld [vmem:[%s1 + $0xdc] sm:$0xf]
  %v89 = vld [vmem:[%s1 + $0xe0] sm:$0xf]
  %v90 = vld [vmem:[%s1 + $0xe4] sm:$0xf]
  %v91 = vld [vmem:[%s1 + $0xe8] sm:$0xf]
  %v92 = vld [vmem:[%s1 + $0xec] sm:$0xf]
  %v93 = vld [vmem:[%s1 + $0xf0] sm:$0xf]
  %v94 = vld [vmem:[%s1 + $0xf4] sm:$0xf]
  %v95 = vld [vmem:[%s1 + $0xf8] sm:$0xf]
  %v96 = vld [vmem:[%s1 + $0xfc] sm:$0xf]
  %v97 = vld [vmem:[%s1 + $0x100] sm:$0xf]
  %v98 = vld [vmem:[%s1 + $0x104] sm:$0xf]
  %v99 = vld [vmem:[%s1 + $0x108] sm:$0xf]
  %v100 = vld [vmem:[%s1 + $0x10c] sm:$0xf]
  %v101 = vld [vmem:[%s1 + $0x110] sm:$0xf]
  %v102 = vld [vmem:[%s1 + $0x114] sm:$0xf]
  %v103 = vld [vmem:[%s1 + $0x118] sm:$0xf]
  %v104 = vld [vmem:[%s1 + $0x11c] sm:$0xf]
  %v105 = vld [vmem:[%s1 + $0x120] sm:$0xf]
  %v106 = vld [vmem:[%s1 + $0x124] sm:$0xf]
  %v107 = vld [vmem:[%s1 + $0x128] sm:$0xf]
  %v108 = vld [vmem:[%s1 + $0x12c] sm:$0xf]
  %v109 = vld [vmem:[%s1 + $0x130] sm:$0xf]
  %v110 = vld [vmem:[%s1 + $0x134] sm:$0xf]
  %v111 = vld [vmem:[%s1 + $0x138] sm:$0xf]
  %v112 = vld [vmem:[%s1 + $0x13c] sm:$0xf]
  %v113 = vld [vmem:[%s1 + $0x140] sm:$0xf]
  %v114 = vld [vmem:[%s1 + $0x144] sm:$0xf]
  %v115 = vld [vmem:[%s1 + $0x148] sm:$0xf]
  %v116 = vld [vmem:[%s1 + $0x14c] sm:$0xf]
  %v117 = vld [vmem:[%s1 + $0x150] sm:$0xf]
  %v118 = vld [vmem:[%s1 + $0x154] sm:$0xf]
  %v119 = vld [vmem:[%s1 + $0x158] sm:$0xf]
  %v120 = vld [vmem:[%s1 + $0x15c] sm:$0xf]
  %v121 = vld [vmem:[%s1 + $0x160] sm:$0xf]
  %v122 = vld [vmem:[%s1 + $0x164] sm:$0xf]
  %v123 = vld [vmem:[%s1 + $0x168] sm:$0xf]
  %v124 = vld [vmem:[%s1 + $0x16c] sm:$0xf]
  %v125 = vld [vmem:[%s1 + $0x170] sm:$0xf]
  %v126 = vld [vmem:[%s1 + $0x174] sm:$0xf]
  %v127 = vld [vmem:[%s1 + $0x178] sm:$0xf]
  %v128 = vld [vmem:[%s1 + $0x17c] sm:$0xf]
  %v129 = vld [vmem:[%s2] sm:$0x1]
  %v131 = vlaneseq
  %v132 = vshrl.u32 %v131, 7
  %v133 = vsub.s32 0, %v132
  %v134 = vrot.slane %v129, %v133
  %v232 = vunpack.c.l.b16 %v33
  %v233 = vunpack.c.l.b16 %v34
  %v234 = vunpack.c.l.b16 %v35
  %v235 = vunpack.c.l.b16 %v36
  %v236 = vunpack.c.l.b16 %v37
  %v237 = vunpack.c.l.b16 %v38
  %v238 = vunpack.c.l.b16 %v39
  %v239 = vunpack.c.l.b16 %v40
  %v240 = vunpack.c.l.b16 %v41
  %v241 = vunpack.c.l.b16 %v42
  %v242 = vunpack.c.l.b16 %v43
  %v243 = vunpack.c.l.b16 %v44
  %v244 = vunpack.c.l.b16 %v45
  %v245 = vunpack.c.l.b16 %v46
  %v246 = vunpack.c.l.b16 %v47
  %v247 = vunpack.c.l.b16 %v48
  %v248 = vunpack.c.l.b16 %v49
  %v249 = vunpack.c.l.b16 %v50
  %v250 = vunpack.c.l.b16 %v51
  %v251 = vunpack.c.l.b16 %v52
  %v252 = vunpack.c.l.b16 %v53
  %v253 = vunpack.c.l.b16 %v54
  %v254 = vunpack.c.l.b16 %v55
  %v255 = vunpack.c.l.b16 %v56
  %v256 = vunpack.c.l.b16 %v57
  %v257 = vunpack.c.l.b16 %v58
  %v258 = vunpack.c.l.b16 %v59
  %v259 = vunpack.c.l.b16 %v60
  %v260 = vunpack.c.l.b16 %v61
  %v261 = vunpack.c.l.b16 %v62
  %v262 = vunpack.c.l.b16 %v63
  %v263 = vunpack.c.l.b16 %v64
  %v264 = vunpack.c.l.b16 %v65
  %v265 = vunpack.c.l.b16 %v66
  %v266 = vunpack.c.l.b16 %v67
  %v267 = vunpack.c.l.b16 %v68
  %v268 = vunpack.c.l.b16 %v69
  %v269 = vunpack.c.l.b16 %v70
  %v270 = vunpack.c.l.b16 %v71
  %v271 = vunpack.c.l.b16 %v72
  %v272 = vunpack.c.l.b16 %v73
  %v273 = vunpack.c.l.b16 %v74
  %v274 = vunpack.c.l.b16 %v75
  %v275 = vunpack.c.l.b16 %v76
  %v276 = vunpack.c.l.b16 %v77
  %v277 = vunpack.c.l.b16 %v78
  %v278 = vunpack.c.l.b16 %v79
  %v279 = vunpack.c.l.b16 %v80
  %v280 = vunpack.c.l.b16 %v81
  %v281 = vunpack.c.l.b16 %v82
  %v282 = vunpack.c.l.b16 %v83
  %v283 = vunpack.c.l.b16 %v84
  %v284 = vunpack.c.l.b16 %v85
  %v285 = vunpack.c.l.b16 %v86
  %v286 = vunpack.c.l.b16 %v87
  %v287 = vunpack.c.l.b16 %v88
  %v288 = vunpack.c.l.b16 %v89
  %v289 = vunpack.c.l.b16 %v90
  %v290 = vunpack.c.l.b16 %v91
  %v291 = vunpack.c.l.b16 %v92
  %v292 = vunpack.c.l.b16 %v93
  %v293 = vunpack.c.l.b16 %v94
  %v294 = vunpack.c.l.b16 %v95
  %v295 = vunpack.c.l.b16 %v96
  %v296 = vunpack.c.l.b16 %v97
  %v297 = vunpack.c.l.b16 %v98
  %v298 = vunpack.c.l.b16 %v99
  %v299 = vunpack.c.l.b16 %v100
  %v300 = vunpack.c.l.b16 %v101
  %v301 = vunpack.c.l.b16 %v102
  %v302 = vunpack.c.l.b16 %v103
  %v303 = vunpack.c.l.b16 %v104
  %v304 = vunpack.c.l.b16 %v105
  %v305 = vunpack.c.l.b16 %v106
  %v306 = vunpack.c.l.b16 %v107
  %v307 = vunpack.c.l.b16 %v108
  %v308 = vunpack.c.l.b16 %v109
  %v309 = vunpack.c.l.b16 %v110
  %v310 = vunpack.c.l.b16 %v111
  %v311 = vunpack.c.l.b16 %v112
  %v312 = vunpack.c.l.b16 %v113
  %v313 = vunpack.c.l.b16 %v114
  %v314 = vunpack.c.l.b16 %v115
  %v315 = vunpack.c.l.b16 %v116
  %v316 = vunpack.c.l.b16 %v117
  %v317 = vunpack.c.l.b16 %v118
  %v318 = vunpack.c.l.b16 %v119
  %v319 = vunpack.c.l.b16 %v120
  %v320 = vunpack.c.l.b16 %v121
  %v321 = vunpack.c.l.b16 %v122
  %v322 = vunpack.c.l.b16 %v123
  %v323 = vunpack.c.l.b16 %v124
  %v324 = vunpack.c.l.b16 %v125
  %v325 = vunpack.c.l.b16 %v126
  %v326 = vunpack.c.l.b16 %v127
  %v327 = vunpack.c.l.b16 %v128
  %v328 = vpack.c.b16 %v233, %v232
  %v329 = vpack.c.b16 %v235, %v234
  %v330 = vpack.c.b16 %v237, %v236
  %v331 = vpack.c.b16 %v239, %v238
  %v332 = vpack.c.b16 %v241, %v240
  %v333 = vpack.c.b16 %v243, %v242
  %v334 = vpack.c.b16 %v245, %v244
  %v335 = vpack.c.b16 %v247, %v246
  %v336 = vpack.c.b16 %v249, %v248
  %v337 = vpack.c.b16 %v251, %v250
  %v338 = vpack.c.b16 %v253, %v252
  %v339 = vpack.c.b16 %v255, %v254
  %v340 = vpack.c.b16 %v257, %v256
  %v341 = vpack.c.b16 %v259, %v258
  %v342 = vpack.c.b16 %v261, %v260
  %v343 = vpack.c.b16 %v263, %v262
  %v344 = vpack.c.b16 %v265, %v264
  %v345 = vpack.c.b16 %v267, %v266
  %v346 = vpack.c.b16 %v269, %v268
  %v347 = vpack.c.b16 %v271, %v270
  %v348 = vpack.c.b16 %v273, %v272
  %v349 = vpack.c.b16 %v275, %v274
  %v350 = vpack.c.b16 %v277, %v276
  %v351 = vpack.c.b16 %v279, %v278
  %v352 = vpack.c.b16 %v281, %v280
  %v353 = vpack.c.b16 %v283, %v282
  %v354 = vpack.c.b16 %v285, %v284
  %v355 = vpack.c.b16 %v287, %v286
  %v356 = vpack.c.b16 %v289, %v288
  %v357 = vpack.c.b16 %v291, %v290
  %v358 = vpack.c.b16 %v293, %v292
  %v359 = vpack.c.b16 %v295, %v294
  %v360 = vpack.c.b16 %v297, %v296
  %v361 = vpack.c.b16 %v299, %v298
  %v362 = vpack.c.b16 %v301, %v300
  %v363 = vpack.c.b16 %v303, %v302
  %v364 = vpack.c.b16 %v305, %v304
  %v365 = vpack.c.b16 %v307, %v306
  %v366 = vpack.c.b16 %v309, %v308
  %v367 = vpack.c.b16 %v311, %v310
  %v368 = vpack.c.b16 %v313, %v312
  %v369 = vpack.c.b16 %v315, %v314
  %v370 = vpack.c.b16 %v317, %v316
  %v371 = vpack.c.b16 %v319, %v318
  %v372 = vpack.c.b16 %v321, %v320
  %v373 = vpack.c.b16 %v323, %v322
  %v374 = vpack.c.b16 %v325, %v324
  %v375 = vpack.c.b16 %v327, %v326
  %424 = vmatprep.subr.bf16.mxu0 0
  %425 = vmatpush1.bf16.msra.mxu0 %v335
  %426 = vmatprep.subr.bf16.mxu0 0
  %427 = vmatpush1.bf16.msra.mxu0 %v334
  %428 = vmatprep.subr.bf16.mxu0 0
  %429 = vmatpush1.bf16.msra.mxu0 %v333
  %430 = vmatprep.subr.bf16.mxu0 0
  %431 = vmatpush1.bf16.msra.mxu0 %v332
  %432 = vmatprep.subr.bf16.mxu0 0
  %433 = vmatpush1.bf16.msra.mxu0 %v331
  %434 = vmatprep.subr.bf16.mxu0 0
  %435 = vmatpush1.bf16.msra.mxu0 %v330
  %436 = vmatprep.subr.bf16.mxu0 0
  %437 = vmatpush1.bf16.msra.mxu0 %v329
  %438 = vmatprep.subr.bf16.mxu0 0
  %439 = vmatpush1.bf16.msra.mxu0 %v328
  %440 = vmatprep.subr.bf16.mxu0 0
  %441 = vmatpush2.bf16.msra.mxu0 %v343
  %442 = vmatprep.subr.bf16.mxu0 0
  %443 = vmatpush2.bf16.msra.mxu0 %v342
  %444 = vmatprep.subr.bf16.mxu0 0
  %445 = vmatpush2.bf16.msra.mxu0 %v341
  %446 = vmatprep.subr.bf16.mxu0 0
  %447 = vmatpush2.bf16.msra.mxu0 %v340
  %448 = vmatprep.subr.bf16.mxu0 0
  %449 = vmatpush2.bf16.msra.mxu0 %v339
  %450 = vmatprep.subr.bf16.mxu0 0
  %451 = vmatpush2.bf16.msra.mxu0 %v338
  %452 = vmatprep.subr.bf16.mxu0 0
  %453 = vmatpush2.bf16.msra.mxu0 %v337
  %454 = vmatprep.subr.bf16.mxu0 0
  %455 = vmatpush2.bf16.msra.mxu0 %v336
  %456 = vmatprep.mubr.bf16.mxu0 %v28
  %457 = vmatmul.mubr.bf16.gmra.mxu0 %v27
  %v458 = vpop.f32.mrf.mxu0
  %v459 = vadd.f32 %v134, %v458
  %v460 = vpop.f32.mrf.mxu0
  %v461 = vpop.f32.mrf.mxu0
  %v462 = vadd.f32 %v134, %v461
  %v463 = vpop.f32.mrf.mxu0
  %464 = vdwg.mxu0
  %465 = vmatprep.subr.bf16.mxu0 0
  %466 = vmatpush1.bf16.msra.mxu0 %v351
  %467 = vmatprep.subr.bf16.mxu0 0
  %468 = vmatpush1.bf16.msra.mxu0 %v350
  %469 = vmatprep.subr.bf16.mxu0 0
  %470 = vmatpush1.bf16.msra.mxu0 %v349
  %471 = vmatprep.subr.bf16.mxu0 0
  %472 = vmatpush1.bf16.msra.mxu0 %v348
  %473 = vmatprep.subr.bf16.mxu0 0
  %474 = vmatpush1.bf16.msra.mxu0 %v347
  %475 = vmatprep.subr.bf16.mxu0 0
  %476 = vmatpush1.bf16.msra.mxu0 %v346
  %477 = vmatprep.subr.bf16.mxu0 0
  %478 = vmatpush1.bf16.msra.mxu0 %v345
  %479 = vmatprep.subr.bf16.mxu0 0
  %480 = vmatpush1.bf16.msra.mxu0 %v344
  %481 = vmatprep.subr.bf16.mxu0 0
  %482 = vmatpush2.bf16.msra.mxu0 %v359
  %483 = vmatprep.subr.bf16.mxu0 0
  %484 = vmatpush2.bf16.msra.mxu0 %v358
  %485 = vmatprep.subr.bf16.mxu0 0
  %486 = vmatpush2.bf16.msra.mxu0 %v357
  %487 = vmatprep.subr.bf16.mxu0 0
  %488 = vmatpush2.bf16.msra.mxu0 %v356
  %489 = vmatprep.subr.bf16.mxu0 0
  %490 = vmatpush2.bf16.msra.mxu0 %v355
  %491 = vmatprep.subr.bf16.mxu0 0
  %492 = vmatpush2.bf16.msra.mxu0 %v354
  %493 = vmatprep.subr.bf16.mxu0 0
  %494 = vmatpush2.bf16.msra.mxu0 %v353
  %495 = vmatprep.subr.bf16.mxu0 0
  %496 = vmatpush2.bf16.msra.mxu0 %v352
  %497 = vmatprep.mubr.bf16.mxu0 %v30
  %498 = vmatmul.mubr.bf16.gmra.mxu0 %v29
  %v499 = vpop.f32.mrf.mxu0
  %v500 = vadd.f32 %v459, %v499
  %v501 = vpop.f32.mrf.mxu0
  %v502 = vpop.f32.mrf.mxu0
  %v503 = vadd.f32 %v462, %v502
  %v504 = vpop.f32.mrf.mxu0
  %505 = vdwg.mxu0
  %506 = vmatprep.subr.bf16.mxu0 0
  %507 = vmatpush1.bf16.msra.mxu0 %v367
  %508 = vmatprep.subr.bf16.mxu0 0
  %509 = vmatpush1.bf16.msra.mxu0 %v366
  %510 = vmatprep.subr.bf16.mxu0 0
  %511 = vmatpush1.bf16.msra.mxu0 %v365
  %512 = vmatprep.subr.bf16.mxu0 0
  %513 = vmatpush1.bf16.msra.mxu0 %v364
  %514 = vmatprep.subr.bf16.mxu0 0
  %515 = vmatpush1.bf16.msra.mxu0 %v363
  %516 = vmatprep.subr.bf16.mxu0 0
  %517 = vmatpush1.bf16.msra.mxu0 %v362
  %518 = vmatprep.subr.bf16.mxu0 0
  %519 = vmatpush1.bf16.msra.mxu0 %v361
  %520 = vmatprep.subr.bf16.mxu0 0
  %521 = vmatpush1.bf16.msra.mxu0 %v360
  %522 = vmatprep.subr.bf16.mxu0 0
  %523 = vmatpush2.bf16.msra.mxu0 %v375
  %524 = vmatprep.subr.bf16.mxu0 0
  %525 = vmatpush2.bf16.msra.mxu0 %v374
  %526 = vmatprep.subr.bf16.mxu0 0
  %527 = vmatpush2.bf16.msra.mxu0 %v373
  %528 = vmatprep.subr.bf16.mxu0 0
  %529 = vmatpush2.bf16.msra.mxu0 %v372
  %530 = vmatprep.subr.bf16.mxu0 0
  %531 = vmatpush2.bf16.msra.mxu0 %v371
  %532 = vmatprep.subr.bf16.mxu0 0
  %533 = vmatpush2.bf16.msra.mxu0 %v370
  %534 = vmatprep.subr.bf16.mxu0 0
  %535 = vmatpush2.bf16.msra.mxu0 %v369
  %536 = vmatprep.subr.bf16.mxu0 0
  %537 = vmatpush2.bf16.msra.mxu0 %v368
  %538 = vmatprep.mubr.bf16.mxu0 %v32
  %539 = vmatmul.mubr.bf16.gmra.mxu0 %v31
  %v540 = vpop.f32.mrf.mxu0
  %v541 = vadd.f32 %v500, %v540
  %v542 = vpop.f32.mrf.mxu0
  %v543 = vpop.f32.mrf.mxu0
  %v544 = vadd.f32 %v503, %v543
  %v545 = vpop.f32.mrf.mxu0
  %546 = vdwg.mxu0
  %547 = vst [vmem:[%s3] sm:$0xff] %v541
  %548 = vst [vmem:[%s3 + $0x8] sm:$0xff] %v544
  // Predicated region
  $region14: #{kgmodel_vwmha_forward.10} parent=0 // pred_check
    _
  $region15: #{kgmodel_vwmha_forward.10} parent=0 // pred_check_branch
    %550 = sbr.rel (0) target = $region17
  $region16: #{kgmodel_vwmha_forward.10} parent=0 // pred_region
    _
  $region17: #{kgmodel_vwmha_forward.10} parent=0 // pred_fallthru
    _
  // Predicated region
  $region18: #{kgmodel_vwmha_forward.10} parent=0 // pred_check
    _
  $region19: #{kgmodel_vwmha_forward.10} parent=0 // pred_check_branch
    %552 = sbr.rel (0) target = $region21
  $region20: #{kgmodel_vwmha_forward.10} parent=0 // pred_region
    _
  $region21: #{kgmodel_vwmha_forward.10} parent=0 // pred_fallthru
    _

// kernel: kgmodel_vwmha_forward.7
$region0: #{kgmodel_vwmha_forward.7}
  #allocation0 [shape = 'u32[]', space=smem, size = 0x4, offset = 0x4, fixed_abs, tag = 'smem constant byte address 0x4 - core index']
  #allocation1 [shape = 'u32[144,128]{1,0:T(1,128)}', space=vmem, size = 0x12000, scoped, tag = 'internal scratch']
  %s0 = inlined_call_operand.vmem [shape: f32[4,128], index: 0, kind: input, shape index: {}]
  %s1 = inlined_call_operand.vmem [shape: bf16[128,128], index: 1, kind: input, shape index: {}]
  %s2 = inlined_call_operand.vmem [shape: f32[1,128], index: 2, kind: input, shape index: {}]
  %s3 = inlined_call_operand.vmem [shape: f32[4,128], index: 3, kind: output, shape index: {}]
  %s4 = sld [smem:[#allocation0]]
  $region22: #{kgmodel_vwmha_forward.7} parent=0
    _
  %s6 = ssub.s32 1, %s4
  %s7 = scalar_select 0, %s6, %s4
  // Predicated region
  $region2: #{kgmodel_vwmha_forward.7} parent=0 // pred_check
    _
  $region3: #{kgmodel_vwmha_forward.7} parent=0 // pred_check_branch
    %9 = sbr.rel (0) target = $region5
  $region4: #{kgmodel_vwmha_forward.7} parent=0 // pred_region
    _
  $region5: #{kgmodel_vwmha_forward.7} parent=0 // pred_fallthru
    _
  // Predicated region
  $region6: #{kgmodel_vwmha_forward.7} parent=0 // pred_check
    _
  $region7: #{kgmodel_vwmha_forward.7} parent=0 // pred_check_branch
    %11 = sbr.rel (0) target = $region9
  $region8: #{kgmodel_vwmha_forward.7} parent=0 // pred_region
    _
  $region9: #{kgmodel_vwmha_forward.7} parent=0 // pred_fallthru
    _
  // Predicated region
  $region10: #{kgmodel_vwmha_forward.7} parent=0 // pred_check
    _
  $region11: #{kgmodel_vwmha_forward.7} parent=0 // pred_check_branch
    %13 = sbr.rel (0) target = $region13
  $region12: #{kgmodel_vwmha_forward.7} parent=0 // pred_region
    _
  $region13: #{kgmodel_vwmha_forward.7} parent=0 // pred_fallthru
    _
  %v15 = vld [vmem:[%s0] sm:$0xf]
  %v16 = vpack.c.bf16 %v15, %v15
  %v17 = vld [vmem:[%s1] sm:$0xf]
  %v18 = vld [vmem:[%s1 + $0x4] sm:$0xf]
  %v19 = vld [vmem:[%s1 + $0x8] sm:$0xf]
  %v20 = vld [vmem:[%s1 + $0xc] sm:$0xf]
  %v21 = vld [vmem:[%s1 + $0x10] sm:$0xf]
  %v22 = vld [vmem:[%s1 + $0x14] sm:$0xf]
  %v23 = vld [vmem:[%s1 + $0x18] sm:$0xf]
  %v24 = vld [vmem:[%s1 + $0x1c] sm:$0xf]
  %v25 = vld [vmem:[%s1 + $0x20] sm:$0xf]
  %v26 = vld [vmem:[%s1 + $0x24] sm:$0xf]
  %v27 = vld [vmem:[%s1 + $0x28] sm:$0xf]
  %v28 = vld [vmem:[%s1 + $0x2c] sm:$0xf]
  %v29 = vld [vmem:[%s1 + $0x30] sm:$0xf]
  %v30 = vld [vmem:[%s1 + $0x34] sm:$0xf]
  %v31 = vld [vmem:[%s1 + $0x38] sm:$0xf]
  %v32 = vld [vmem:[%s1 + $0x3c] sm:$0xf]
  %v33 = vld [vmem:[%s2] sm:$0x1]
  %v35 = vlaneseq
  %v36 = vshrl.u32 %v35, 7
  %v37 = vsub.s32 0, %v36
  %v38 = vrot.slane %v33, %v37
  %v56 = vunpack.c.l.b16 %v17
  %v57 = vunpack.c.l.b16 %v18
  %v58 = vunpack.c.l.b16 %v19
  %v59 = vunpack.c.l.b16 %v20
  %v60 = vunpack.c.l.b16 %v21
  %v61 = vunpack.c.l.b16 %v22
  %v62 = vunpack.c.l.b16 %v23
  %v63 = vunpack.c.l.b16 %v24
  %v64 = vunpack.c.l.b16 %v25
  %v65 = vunpack.c.l.b16 %v26
  %v66 = vunpack.c.l.b16 %v27
  %v67 = vunpack.c.l.b16 %v28
  %v68 = vunpack.c.l.b16 %v29
  %v69 = vunpack.c.l.b16 %v30
  %v70 = vunpack.c.l.b16 %v31
  %v71 = vunpack.c.l.b16 %v32
  %v72 = vpack.c.b16 %v57, %v56
  %v73 = vpack.c.b16 %v59, %v58
  %v74 = vpack.c.b16 %v61, %v60
  %v75 = vpack.c.b16 %v63, %v62
  %v76 = vpack.c.b16 %v65, %v64
  %v77 = vpack.c.b16 %v67, %v66
  %v78 = vpack.c.b16 %v69, %v68
  %v79 = vpack.c.b16 %v71, %v70
  %88 = vmatprep.subr.bf16.mxu0 0
  %89 = vmatpush1.bf16.msra.mxu0 %v79
  %90 = vmatprep.subr.bf16.mxu0 0
  %91 = vmatpush1.bf16.msra.mxu0 %v78
  %92 = vmatprep.subr.bf16.mxu0 0
  %93 = vmatpush1.bf16.msra.mxu0 %v77
  %94 = vmatprep.subr.bf16.mxu0 0
  %95 = vmatpush1.bf16.msra.mxu0 %v76
  %96 = vmatprep.subr.bf16.mxu0 0
  %97 = vmatpush1.bf16.msra.mxu0 %v75
  %98 = vmatprep.subr.bf16.mxu0 0
  %99 = vmatpush1.bf16.msra.mxu0 %v74
  %100 = vmatprep.subr.bf16.mxu0 0
  %101 = vmatpush1.bf16.msra.mxu0 %v73
  %102 = vmatprep.subr.bf16.mxu0 0
  %103 = vmatpush1.bf16.msra.mxu0 %v72
  %104 = vmatprep.subr.bf16.mxu0 0
  %105 = vmatpush2.bf16.msra.mxu0 0
  %106 = vmatprep.subr.bf16.mxu0 0
  %107 = vmatpush2.bf16.msra.mxu0 0
  %108 = vmatprep.subr.bf16.mxu0 0
  %109 = vmatpush2.bf16.msra.mxu0 0
  %110 = vmatprep.subr.bf16.mxu0 0
  %111 = vmatpush2.bf16.msra.mxu0 0
  %112 = vmatprep.subr.bf16.mxu0 0
  %113 = vmatpush2.bf16.msra.mxu0 0
  %114 = vmatprep.subr.bf16.mxu0 0
  %115 = vmatpush2.bf16.msra.mxu0 0
  %116 = vmatprep.subr.bf16.mxu0 0
  %117 = vmatpush2.bf16.msra.mxu0 0
  %118 = vmatprep.subr.bf16.mxu0 0
  %119 = vmatpush2.bf16.msra.mxu0 0
  %120 = vmatprep.mubr.bf16.mxu0 0
  %121 = vmatmul.mubr.bf16.gmra.mxu0 %v16
  %v122 = vpop.f32.mrf.mxu0
  %v123 = vadd.f32 %v38, %v122
  %v124 = vpop.f32.mrf.mxu0
  %v125 = vpop.f32.mrf.mxu0
  %v126 = vpop.f32.mrf.mxu0
  %127 = vdwg.mxu0
  %128 = vst [vmem:[%s3] sm:$0xf] %v123
  // Predicated region
  $region14: #{kgmodel_vwmha_forward.7} parent=0 // pred_check
    _
  $region15: #{kgmodel_vwmha_forward.7} parent=0 // pred_check_branch
    %130 = sbr.rel (0) target = $region17
  $region16: #{kgmodel_vwmha_forward.7} parent=0 // pred_region
    _
  $region17: #{kgmodel_vwmha_forward.7} parent=0 // pred_fallthru
    _
  // Predicated region
  $region18: #{kgmodel_vwmha_forward.7} parent=0 // pred_check
    _
  $region19: #{kgmodel_vwmha_forward.7} parent=0 // pred_check_branch
    %132 = sbr.rel (0) target = $region21
  $region20: #{kgmodel_vwmha_forward.7} parent=0 // pred_region
    _
  $region21: #{kgmodel_vwmha_forward.7} parent=0 // pred_fallthru
    _

// kernel: kgmodel_vwmha_forward.8
$region0: #{kgmodel_vwmha_forward.8}
  #allocation0 [shape = 'u32[]', space=smem, size = 0x4, offset = 0x4, fixed_abs, tag = 'smem constant byte address 0x4 - core index']
  #allocation1 [shape = 'u32[144,128]{1,0:T(1,128)}', space=vmem, size = 0x12000, scoped, tag = 'internal scratch']
  %s0 = inlined_call_operand.vmem [shape: f32[16,400], index: 0, kind: input, shape index: {}]
  %s1 = inlined_call_operand.vmem [shape: bf16[400,128], index: 1, kind: input, shape index: {}]
  %s2 = inlined_call_operand.vmem [shape: f32[1,128], index: 2, kind: input, shape index: {}]
  %s3 = inlined_call_operand.vmem [shape: f32[16,128], index: 3, kind: output, shape index: {}]
  %s4 = sld [smem:[#allocation0]]
  $region22: #{kgmodel_vwmha_forward.8} parent=0
    _
  %s6 = ssub.s32 1, %s4
  %s7 = scalar_select 0, %s6, %s4
  // Predicated region
  $region2: #{kgmodel_vwmha_forward.8} parent=0 // pred_check
    _
  $region3: #{kgmodel_vwmha_forward.8} parent=0 // pred_check_branch
    %9 = sbr.rel (0) target = $region5
  $region4: #{kgmodel_vwmha_forward.8} parent=0 // pred_region
    _
  $region5: #{kgmodel_vwmha_forward.8} parent=0 // pred_fallthru
    _
  // Predicated region
  $region6: #{kgmodel_vwmha_forward.8} parent=0 // pred_check
    _
  $region7: #{kgmodel_vwmha_forward.8} parent=0 // pred_check_branch
    %11 = sbr.rel (0) target = $region9
  $region8: #{kgmodel_vwmha_forward.8} parent=0 // pred_region
    _
  $region9: #{kgmodel_vwmha_forward.8} parent=0 // pred_fallthru
    _
  // Predicated region
  $region10: #{kgmodel_vwmha_forward.8} parent=0 // pred_check
    _
  $region11: #{kgmodel_vwmha_forward.8} parent=0 // pred_check_branch
    %13 = sbr.rel (0) target = $region13
  $region12: #{kgmodel_vwmha_forward.8} parent=0 // pred_region
    _
  $region13: #{kgmodel_vwmha_forward.8} parent=0 // pred_fallthru
    _
  %v15 = vld [vmem:[%s0] sm:$0xff]
  %v16 = vld [vmem:[%s0 + $0x8] sm:$0xff]
  %v17 = vld [vmem:[%s0 + $0x10] sm:$0xff]
  %v18 = vld [vmem:[%s0 + $0x18] sm:$0xff]
  %v19 = vld [vmem:[%s0 + $0x20] sm:$0xff]
  %v20 = vld [vmem:[%s0 + $0x28] sm:$0xff]
  %v21 = vld [vmem:[%s0 + $0x30] sm:$0xff]
  %v22 = vld [vmem:[%s0 + $0x38] sm:$0xff]
  %v23 = vpack.c.bf16 %v19, %v15
  %v24 = vpack.c.bf16 %v20, %v16
  %v25 = vpack.c.bf16 %v21, %v17
  %v26 = vpack.c.bf16 %v22, %v18
  %v27 = vld [vmem:[%s1] sm:$0xf]
  %v28 = vld [vmem:[%s1 + $0x4] sm:$0xf]
  %v29 = vld [vmem:[%s1 + $0x8] sm:$0xf]
  %v30 = vld [vmem:[%s1 + $0xc] sm:$0xf]
  %v31 = vld [vmem:[%s1 + $0x10] sm:$0xf]
  %v32 = vld [vmem:[%s1 + $0x14] sm:$0xf]
  %v33 = vld [vmem:[%s1 + $0x18] sm:$0xf]
  %v34 = vld [vmem:[%s1 + $0x1c] sm:$0xf]
  %v35 = vld [vmem:[%s1 + $0x20] sm:$0xf]
  %v36 = vld [vmem:[%s1 + $0x24] sm:$0xf]
  %v37 = vld [vmem:[%s1 + $0x28] sm:$0xf]
  %v38 = vld [vmem:[%s1 + $0x2c] sm:$0xf]
  %v39 = vld [vmem:[%s1 + $0x30] sm:$0xf]
  %v40 = vld [vmem:[%s1 + $0x34] sm:$0xf]
  %v41 = vld [vmem:[%s1 + $0x38] sm:$0xf]
  %v42 = vld [vmem:[%s1 + $0x3c] sm:$0xf]
  %v43 = vld [vmem:[%s1 + $0x40] sm:$0xf]
  %v44 = vld [vmem:[%s1 + $0x44] sm:$0xf]
  %v45 = vld [vmem:[%s1 + $0x48] sm:$0xf]
  %v46 = vld [vmem:[%s1 + $0x4c] sm:$0xf]
  %v47 = vld [vmem:[%s1 + $0x50] sm:$0xf]
  %v48 = vld [vmem:[%s1 + $0x54] sm:$0xf]
  %v49 = vld [vmem:[%s1 + $0x58] sm:$0xf]
  %v50 = vld [vmem:[%s1 + $0x5c] sm:$0xf]
  %v51 = vld [vmem:[%s1 + $0x60] sm:$0xf]
  %v52 = vld [vmem:[%s1 + $0x64] sm:$0xf]
  %v53 = vld [vmem:[%s1 + $0x68] sm:$0xf]
  %v54 = vld [vmem:[%s1 + $0x6c] sm:$0xf]
  %v55 = vld [vmem:[%s1 + $0x70] sm:$0xf]
  %v56 = vld [vmem:[%s1 + $0x74] sm:$0xf]
  %v57 = vld [vmem:[%s1 + $0x78] sm:$0xf]
  %v58 = vld [vmem:[%s1 + $0x7c] sm:$0xf]
  %v59 = vld [vmem:[%s1 + $0x80] sm:$0xf]
  %v60 = vld [vmem:[%s1 + $0x84] sm:$0xf]
  %v61 = vld [vmem:[%s1 + $0x88] sm:$0xf]
  %v62 = vld [vmem:[%s1 + $0x8c] sm:$0xf]
  %v63 = vld [vmem:[%s1 + $0x90] sm:$0xf]
  %v64 = vld [vmem:[%s1 + $0x94] sm:$0xf]
  %v65 = vld [vmem:[%s1 + $0x98] sm:$0xf]
  %v66 = vld [vmem:[%s1 + $0x9c] sm:$0xf]
  %v67 = vld [vmem:[%s1 + $0xa0] sm:$0xf]
  %v68 = vld [vmem:[%s1 + $0xa4] sm:$0xf]
  %v69 = vld [vmem:[%s1 + $0xa8] sm:$0xf]
  %v70 = vld [vmem:[%s1 + $0xac] sm:$0xf]
  %v71 = vld [vmem:[%s1 + $0xb0] sm:$0xf]
  %v72 = vld [vmem:[%s1 + $0xb4] sm:$0xf]
  %v73 = vld [vmem:[%s1 + $0xb8] sm:$0xf]
  %v74 = vld [vmem:[%s1 + $0xbc] sm:$0xf]
  %v75 = vld [vmem:[%s1 + $0xc0] sm:$0xf]
  %v76 = vld [vmem:[%s1 + $0xc4] sm:$0xf]
  %v77 = vld [vmem:[%s2] sm:$0x1]
  %v79 = vlaneseq
  %v80 = vshrl.u32 %v79, 7
  %v81 = vsub.s32 0, %v80
  %v82 = vrot.slane %v77, %v81
  %v134 = vunpack.c.l.b16 %v27
  %v135 = vunpack.c.l.b16 %v28
  %v136 = vunpack.c.l.b16 %v29
  %v137 = vunpack.c.l.b16 %v30
  %v138 = vunpack.c.l.b16 %v31
  %v139 = vunpack.c.l.b16 %v32
  %v140 = vunpack.c.l.b16 %v33
  %v141 = vunpack.c.l.b16 %v34
  %v142 = vunpack.c.l.b16 %v35
  %v143 = vunpack.c.l.b16 %v36
  %v144 = vunpack.c.l.b16 %v37
  %v145 = vunpack.c.l.b16 %v38
  %v146 = vunpack.c.l.b16 %v39
  %v147 = vunpack.c.l.b16 %v40
  %v148 = vunpack.c.l.b16 %v41
  %v149 = vunpack.c.l.b16 %v42
  %v150 = vunpack.c.l.b16 %v43
  %v151 = vunpack.c.l.b16 %v44
  %v152 = vunpack.c.l.b16 %v45
  %v153 = vunpack.c.l.b16 %v46
  %v154 = vunpack.c.l.b16 %v47
  %v155 = vunpack.c.l.b16 %v48
  %v156 = vunpack.c.l.b16 %v49
  %v157 = vunpack.c.l.b16 %v50
  %v158 = vunpack.c.l.b16 %v51
  %v159 = vunpack.c.l.b16 %v52
  %v160 = vunpack.c.l.b16 %v53
  %v161 = vunpack.c.l.b16 %v54
  %v162 = vunpack.c.l.b16 %v55
  %v163 = vunpack.c.l.b16 %v56
  %v164 = vunpack.c.l.b16 %v57
  %v165 = vunpack.c.l.b16 %v58
  %v166 = vunpack.c.l.b16 %v59
  %v167 = vunpack.c.l.b16 %v60
  %v168 = vunpack.c.l.b16 %v61
  %v169 = vunpack.c.l.b16 %v62
  %v170 = vunpack.c.l.b16 %v63
  %v171 = vunpack.c.l.b16 %v64
  %v172 = vunpack.c.l.b16 %v65
  %v173 = vunpack.c.l.b16 %v66
  %v174 = vunpack.c.l.b16 %v67
  %v175 = vunpack.c.l.b16 %v68
  %v176 = vunpack.c.l.b16 %v69
  %v177 = vunpack.c.l.b16 %v70
  %v178 = vunpack.c.l.b16 %v71
  %v179 = vunpack.c.l.b16 %v72
  %v180 = vunpack.c.l.b16 %v73
  %v181 = vunpack.c.l.b16 %v74
  %v182 = vunpack.c.l.b16 %v75
  %v183 = vunpack.c.l.b16 %v76
  %v184 = vpack.c.b16 %v135, %v134
  %v185 = vpack.c.b16 %v137, %v136
  %v186 = vpack.c.b16 %v139, %v138
  %v187 = vpack.c.b16 %v141, %v140
  %v188 = vpack.c.b16 %v143, %v142
  %v189 = vpack.c.b16 %v145, %v144
  %v190 = vpack.c.b16 %v147, %v146
  %v191 = vpack.c.b16 %v149, %v148
  %v192 = vpack.c.b16 %v151, %v150
  %v193 = vpack.c.b16 %v153, %v152
  %v194 = vpack.c.b16 %v155, %v154
  %v195 = vpack.c.b16 %v157, %v156
  %v196 = vpack.c.b16 %v159, %v158
  %v197 = vpack.c.b16 %v161, %v160
  %v198 = vpack.c.b16 %v163, %v162
  %v199 = vpack.c.b16 %v165, %v164
  %v200 = vpack.c.b16 %v167, %v166
  %v201 = vpack.c.b16 %v169, %v168
  %v202 = vpack.c.b16 %v171, %v170
  %v203 = vpack.c.b16 %v173, %v172
  %v204 = vpack.c.b16 %v175, %v174
  %v205 = vpack.c.b16 %v177, %v176
  %v206 = vpack.c.b16 %v179, %v178
  %v207 = vpack.c.b16 %v181, %v180
  %v208 = vpack.c.b16 %v183, %v182
  %vm234 = vcmask 130048
  %v236 = vsel %vm234, %v26, 0
  %238 = vmatprep.subr.bf16.mxu0 0
  %239 = vmatpush1.bf16.msra.mxu0 %v191
  %240 = vmatprep.subr.bf16.mxu0 0
  %241 = vmatpush1.bf16.msra.mxu0 %v190
  %242 = vmatprep.subr.bf16.mxu0 0
  %243 = vmatpush1.bf16.msra.mxu0 %v189
  %244 = vmatprep.subr.bf16.mxu0 0
  %245 = vmatpush1.bf16.msra.mxu0 %v188
  %246 = vmatprep.subr.bf16.mxu0 0
  %247 = vmatpush1.bf16.msra.mxu0 %v187
  %248 = vmatprep.subr.bf16.mxu0 0
  %249 = vmatpush1.bf16.msra.mxu0 %v186
  %250 = vmatprep.subr.bf16.mxu0 0
  %251 = vmatpush1.bf16.msra.mxu0 %v185
  %252 = vmatprep.subr.bf16.mxu0 0
  %253 = vmatpush1.bf16.msra.mxu0 %v184
  %254 = vmatprep.subr.bf16.mxu0 0
  %255 = vmatpush2.bf16.msra.mxu0 %v199
  %256 = vmatprep.subr.bf16.mxu0 0
  %257 = vmatpush2.bf16.msra.mxu0 %v198
  %258 = vmatprep.subr.bf16.mxu0 0
  %259 = vmatpush2.bf16.msra.mxu0 %v197
  %260 = vmatprep.subr.bf16.mxu0 0
  %261 = vmatpush2.bf16.msra.mxu0 %v196
  %262 = vmatprep.subr.bf16.mxu0 0
  %263 = vmatpush2.bf16.msra.mxu0 %v195
  %264 = vmatprep.subr.bf16.mxu0 0
  %265 = vmatpush2.bf16.msra.mxu0 %v194
  %266 = vmatprep.subr.bf16.mxu0 0
  %267 = vmatpush2.bf16.msra.mxu0 %v193
  %268 = vmatprep.subr.bf16.mxu0 0
  %269 = vmatpush2.bf16.msra.mxu0 %v192
  %270 = vmatprep.mubr.bf16.mxu0 %v24
  %271 = vmatmul.mubr.bf16.gmra.mxu0 %v23
  %v272 = vpop.f32.mrf.mxu0
  %v273 = vadd.f32 %v82, %v272
  %v274 = vpop.f32.mrf.mxu0
  %v275 = vpop.f32.mrf.mxu0
  %v276 = vadd.f32 %v82, %v275
  %v277 = vpop.f32.mrf.mxu0
  %278 = vdwg.mxu0
  %279 = vmatprep.subr.bf16.mxu0 0
  %280 = vmatpush1.bf16.msra.mxu0 %v207
  %281 = vmatprep.subr.bf16.mxu0 0
  %282 = vmatpush1.bf16.msra.mxu0 %v206
  %283 = vmatprep.subr.bf16.mxu0 0
  %284 = vmatpush1.bf16.msra.mxu0 %v205
  %285 = vmatprep.subr.bf16.mxu0 0
  %286 = vmatpush1.bf16.msra.mxu0 %v204
  %287 = vmatprep.subr.bf16.mxu0 0
  %288 = vmatpush1.bf16.msra.mxu0 %v203
  %289 = vmatprep.subr.bf16.mxu0 0
  %290 = vmatpush1.bf16.msra.mxu0 %v202
  %291 = vmatprep.subr.bf16.mxu0 0
  %292 = vmatpush1.bf16.msra.mxu0 %v201
  %293 = vmatprep.subr.bf16.mxu0 0
  %294 = vmatpush1.bf16.msra.mxu0 %v200
  %295 = vmatprep.subr.bf16.mxu0 0
  %296 = vmatpush2.bf16.msra.mxu0 0
  %297 = vmatprep.subr.bf16.mxu0 0
  %298 = vmatpush2.bf16.msra.mxu0 0
  %299 = vmatprep.subr.bf16.mxu0 0
  %300 = vmatpush2.bf16.msra.mxu0 0
  %301 = vmatprep.subr.bf16.mxu0 0
  %302 = vmatpush2.bf16.msra.mxu0 0
  %303 = vmatprep.subr.bf16.mxu0 0
  %304 = vmatpush2.bf16.msra.mxu0 0
  %305 = vmatprep.subr.bf16.mxu0 0
  %306 = vmatpush2.bf16.msra.mxu0 0
  %307 = vmatprep.subr.bf16.mxu0 0
  %308 = vmatpush2.bf16.msra.mxu0 0
  %309 = vmatprep.subr.bf16.mxu0 0
  %310 = vmatpush2.bf16.msra.mxu0 %v208
  %311 = vmatprep.mubr.bf16.mxu0 %v236
  %312 = vmatmul.mubr.bf16.gmra.mxu0 %v25
  %v313 = vpop.f32.mrf.mxu0
  %v314 = vadd.f32 %v273, %v313
  %v315 = vpop.f32.mrf.mxu0
  %v316 = vpop.f32.mrf.mxu0
  %v317 = vadd.f32 %v276, %v316
  %v318 = vpop.f32.mrf.mxu0
  %319 = vdwg.mxu0
  %320 = vst [vmem:[%s3] sm:$0xff] %v314
  %321 = vst [vmem:[%s3 + $0x8] sm:$0xff] %v317
  // Predicated region
  $region14: #{kgmodel_vwmha_forward.8} parent=0 // pred_check
    _
  $region15: #{kgmodel_vwmha_forward.8} parent=0 // pred_check_branch
    %323 = sbr.rel (0) target = $region17
  $region16: #{kgmodel_vwmha_forward.8} parent=0 // pred_region
    _
  $region17: #{kgmodel_vwmha_forward.8} parent=0 // pred_fallthru
    _
  // Predicated region
  $region18: #{kgmodel_vwmha_forward.8} parent=0 // pred_check
    _
  $region19: #{kgmodel_vwmha_forward.8} parent=0 // pred_check_branch
    %325 = sbr.rel (0) target = $region21
  $region20: #{kgmodel_vwmha_forward.8} parent=0 // pred_region
    _
  $region21: #{kgmodel_vwmha_forward.8} parent=0 // pred_fallthru
    _

// kernel: kgmodel_vwmha_forward.11
$region0: #{kgmodel_vwmha_forward.11}
  #allocation0 [shape = 'u32[]', space=smem, size = 0x4, offset = 0x4, fixed_abs, tag = 'smem constant byte address 0x4 - core index']
  #allocation1 [shape = 'u32[144,128]{1,0:T(1,128)}', space=vmem, size = 0x12000, scoped, tag = 'internal scratch']
  %s0 = inlined_call_operand.vmem [shape: f32[2,8,128], index: 0, kind: input, shape index: {}]
  %s1 = inlined_call_operand.vmem [shape: f32[2,8,128], index: 1, kind: input, shape index: {}]
  %s2 = inlined_call_operand.vmem [shape: f32[1,8], index: 2, kind: input, shape index: {}]
  %s3 = inlined_call_operand.vmem [shape: f32[1,128], index: 3, kind: input, shape index: {}]
  %s4 = inlined_call_operand.vmem [shape: f32[1,128], index: 4, kind: input, shape index: {}]
  %s5 = inlined_call_operand.vmem [shape: bf16[128,128], index: 5, kind: input, shape index: {}]
  %s6 = inlined_call_operand.vmem [shape: f32[1,128], index: 6, kind: input, shape index: {}]
  %s7 = inlined_call_operand.vmem [shape: bf16[128,256], index: 7, kind: input, shape index: {}]
  %s8 = inlined_call_operand.vmem [shape: f32[1,256], index: 8, kind: input, shape index: {}]
  %s9 = inlined_call_operand.vmem [shape: bf16[128,128], index: 9, kind: input, shape index: {}]
  %s10 = inlined_call_operand.vmem [shape: f32[1,128], index: 10, kind: input, shape index: {}]
  %s11 = inlined_call_operand.vmem [shape: f32[1,128], index: 11, kind: input, shape index: {}]
  %s12 = inlined_call_operand.vmem [shape: f32[1,128], index: 12, kind: input, shape index: {}]
  %s13 = inlined_call_operand.vmem [shape: bf16[128,256], index: 13, kind: input, shape index: {}]
  %s14 = inlined_call_operand.vmem [shape: f32[1,256], index: 14, kind: input, shape index: {}]
  %s15 = inlined_call_operand.vmem [shape: bf16[256,128], index: 15, kind: input, shape index: {}]
  %s16 = inlined_call_operand.vmem [shape: f32[1,128], index: 16, kind: input, shape index: {}]
  %s17 = inlined_call_operand.vmem [shape: f32[2,8,128], index: 17, kind: output, shape index: {}]
  %s18 = sld [smem:[#allocation0]]
  $region101: #{kgmodel_vwmha_forward.11} parent=0
    _
  %s20 = ssub.s32 1, %s18
  %s21 = scalar_select 0, %s20, %s18
  loop: start=0, step=1, limit=4
  $region2: #{kgmodel_vwmha_forward.11} parent=0 // loop_pre_header
    _
  $region3: #{kgmodel_vwmha_forward.11} parent=0 // loop_header
    %s23 = sphi 0, %s27
    %p24 = scmp.ge.s32.totalorder %s23, 4
    %s33 = sphi 0, %s35
    %s36 = sphi 0, %s33
    %s37 = sphi 0, %s36
    %s53 = sphi 0, %s37
    %s59 = sphi 0, %s61
    %s62 = sphi 0, %s59
    %s63 = sphi 0, %s62
    %s79 = sphi 0, %s63
    %s83 = sphi 0, %s83
    %s85 = sphi 0, %s83
    %s86 = sphi 0, %s85
    %s100 = sphi 0, %s86
    %s104 = sphi 0, %s104
    %s106 = sphi 0, %s104
    %s107 = sphi 0, %s106
    %s121 = sphi 0, %s107
    %s125 = sphi 0, %s125
    %s127 = sphi 0, %s125
    %s128 = sphi 0, %s127
    %s142 = sphi 0, %s128
    %s146 = sphi 0, %s146
    %s148 = sphi 0, %s146
    %s149 = sphi 0, %s148
    %s163 = sphi 0, %s149
    %s167 = sphi 0, %s167
    %s169 = sphi 0, %s167
    %s170 = sphi 0, %s169
    %s184 = sphi 0, %s170
    %s188 = sphi 0, %s188
    %s190 = sphi 0, %s188
    %s191 = sphi 0, %s190
    %s205 = sphi 0, %s191
    %s209 = sphi 0, %s209
    %s211 = sphi 0, %s209
    %s212 = sphi 0, %s211
    %s226 = sphi 0, %s212
    %s230 = sphi 0, %s230
    %s232 = sphi 0, %s230
    %s233 = sphi 0, %s232
    %s247 = sphi 0, %s233
    %s251 = sphi 0, %s251
    %s253 = sphi 0, %s251
    %s254 = sphi 0, %s253
    %s268 = sphi 0, %s254
    %s272 = sphi 0, %s272
    %s274 = sphi 0, %s272
    %s275 = sphi 0, %s274
    %s289 = sphi 0, %s275
    %s293 = sphi 0, %s293
    %s295 = sphi 0, %s293
    %s296 = sphi 0, %s295
    %s310 = sphi 0, %s296
    %s314 = sphi 0, %s314
    %s316 = sphi 0, %s314
    %s317 = sphi 0, %s316
    %s331 = sphi 0, %s317
    %s335 = sphi 0, %s335
    %s337 = sphi 0, %s335
    %s338 = sphi 0, %s337
    %s352 = sphi 0, %s338
    %s356 = sphi 0, %s356
    %s358 = sphi 0, %s356
    %s359 = sphi 0, %s358
    %s373 = sphi 0, %s359
    %s377 = sphi 0, %s377
    %s379 = sphi 0, %s377
    %s380 = sphi 0, %s379
    %s394 = sphi 0, %s380
    %s400 = sphi 0, %s402
    %s403 = sphi 0, %s400
    %s404 = sphi 0, %s403
    %s420 = sphi 0, %s404
  $region4: #{kgmodel_vwmha_forward.11} parent=0 // loop_header_branch
    %26 = sbr.rel (%p24) target = $region8
  $region5: #{kgmodel_vwmha_forward.11} parent=0 // loop_body
    %s28 = ssub.s32 %s23, 1
    %s29 = ssub.s32 %s23, 2
    %s30 = sadd.s32 %s23, 1
    %s31 = ssub.s32 %s23, %s30
    %p32 = scmp.eq.s32.totalorder %s31, 0
    %s34 = sadd.s32 %s33, 1
    %s35 = scalar_select %p32, %s33, %s34
    %p38 = pneg %p32
    %p39 = scmp.eq.s32.totalorder %s23, 1
    %p40 = por %p38, %p39
    %p41 = scmp.ne.s32.totalorder %s33, %s36
    %p42 = scmp.eq.s32.totalorder %s23, 0
    %p43 = por %p41, %p42
    %p44 = scmp.ne.s32.totalorder %s33, %s36
    %p45 = scmp.eq.s32.totalorder %s28, 1
    %p46 = por %p44, %p45
    %p47 = scmp.ne.s32.totalorder %s36, %s37
    %p48 = scmp.eq.s32.totalorder %s28, 0
    %p49 = por %p47, %p48
    %p50 = scmp.ne.s32.totalorder %s36, %s37
    %p51 = scmp.eq.s32.totalorder %s29, 1
    %p52 = por %p50, %p51
    %p54 = scmp.ne.s32.totalorder %s37, %s53
    %p55 = scmp.eq.s32.totalorder %s29, 0
    %p56 = por %p54, %p55
    %s57 = ssub.s32 %s23, %s30
    %p58 = scmp.eq.s32.totalorder %s57, 0
    %s60 = sadd.s32 %s59, 1
    %s61 = scalar_select %p58, %s59, %s60
    %p64 = pneg %p58
    %p65 = scmp.eq.s32.totalorder %s23, 1
    %p66 = por %p64, %p65
    %p67 = scmp.ne.s32.totalorder %s59, %s62
    %p68 = scmp.eq.s32.totalorder %s23, 0
    %p69 = por %p67, %p68
    %p70 = scmp.ne.s32.totalorder %s59, %s62
    %p71 = scmp.eq.s32.totalorder %s28, 1
    %p72 = por %p70, %p71
    %p73 = scmp.ne.s32.totalorder %s62, %s63
    %p74 = scmp.eq.s32.totalorder %s28, 0
    %p75 = por %p73, %p74
    %p76 = scmp.ne.s32.totalorder %s62, %s63
    %p77 = scmp.eq.s32.totalorder %s29, 1
    %p78 = por %p76, %p77
    %p80 = scmp.ne.s32.totalorder %s63, %s79
    %p81 = scmp.eq.s32.totalorder %s29, 0
    %p82 = por %p80, %p81
    %s84 = sadd.s32 %s83, 1
    %p87 = scmp.eq.s32.totalorder %s23, 1
    %p88 = scmp.ne.s32.totalorder %s83, %s85
    %p89 = scmp.eq.s32.totalorder %s23, 0
    %p90 = por %p88, %p89
    %p91 = scmp.ne.s32.totalorder %s83, %s85
    %p92 = scmp.eq.s32.totalorder %s28, 1
    %p93 = por %p91, %p92
    %p94 = scmp.ne.s32.totalorder %s85, %s86
    %p95 = scmp.eq.s32.totalorder %s28, 0
    %p96 = por %p94, %p95
    %p97 = scmp.ne.s32.totalorder %s85, %s86
    %p98 = scmp.eq.s32.totalorder %s29, 1
    %p99 = por %p97, %p98
    %p101 = scmp.ne.s32.totalorder %s86, %s100
    %p102 = scmp.eq.s32.totalorder %s29, 0
    %p103 = por %p101, %p102
    %s105 = sadd.s32 %s104, 1
    %p108 = scmp.eq.s32.totalorder %s23, 1
    %p109 = scmp.ne.s32.totalorder %s104, %s106
    %p110 = scmp.eq.s32.totalorder %s23, 0
    %p111 = por %p109, %p110
    %p112 = scmp.ne.s32.totalorder %s104, %s106
    %p113 = scmp.eq.s32.totalorder %s28, 1
    %p114 = por %p112, %p113
    %p115 = scmp.ne.s32.totalorder %s106, %s107
    %p116 = scmp.eq.s32.totalorder %s28, 0
    %p117 = por %p115, %p116
    %p118 = scmp.ne.s32.totalorder %s106, %s107
    %p119 = scmp.eq.s32.totalorder %s29, 1
    %p120 = por %p118, %p119
    %p122 = scmp.ne.s32.totalorder %s107, %s121
    %p123 = scmp.eq.s32.totalorder %s29, 0
    %p124 = por %p122, %p123
    %s126 = sadd.s32 %s125, 1
    %p129 = scmp.eq.s32.totalorder %s23, 1
    %p130 = scmp.ne.s32.totalorder %s125, %s127
    %p131 = scmp.eq.s32.totalorder %s23, 0
    %p132 = por %p130, %p131
    %p133 = scmp.ne.s32.totalorder %s125, %s127
    %p134 = scmp.eq.s32.totalorder %s28, 1
    %p135 = por %p133, %p134
    %p136 = scmp.ne.s32.totalorder %s127, %s128
    %p137 = scmp.eq.s32.totalorder %s28, 0
    %p138 = por %p136, %p137
    %p139 = scmp.ne.s32.totalorder %s127, %s128
    %p140 = scmp.eq.s32.totalorder %s29, 1
    %p141 = por %p139, %p140
    %p143 = scmp.ne.s32.totalorder %s128, %s142
    %p144 = scmp.eq.s32.totalorder %s29, 0
    %p145 = por %p143, %p144
    %s147 = sadd.s32 %s146, 1
    %p150 = scmp.eq.s32.totalorder %s23, 1
    %p151 = scmp.ne.s32.totalorder %s146, %s148
    %p152 = scmp.eq.s32.totalorder %s23, 0
    %p153 = por %p151, %p152
    %p154 = scmp.ne.s32.totalorder %s146, %s148
    %p155 = scmp.eq.s32.totalorder %s28, 1
    %p156 = por %p154, %p155
    %p157 = scmp.ne.s32.totalorder %s148, %s149
    %p158 = scmp.eq.s32.totalorder %s28, 0
    %p159 = por %p157, %p158
    %p160 = scmp.ne.s32.totalorder %s148, %s149
    %p161 = scmp.eq.s32.totalorder %s29, 1
    %p162 = por %p160, %p161
    %p164 = scmp.ne.s32.totalorder %s149, %s163
    %p165 = scmp.eq.s32.totalorder %s29, 0
    %p166 = por %p164, %p165
    %s168 = sadd.s32 %s167, 1
    %p171 = scmp.eq.s32.totalorder %s23, 1
    %p172 = scmp.ne.s32.totalorder %s167, %s169
    %p173 = scmp.eq.s32.totalorder %s23, 0
    %p174 = por %p172, %p173
    %p175 = scmp.ne.s32.totalorder %s167, %s169
    %p176 = scmp.eq.s32.totalorder %s28, 1
    %p177 = por %p175, %p176
    %p178 = scmp.ne.s32.totalorder %s169, %s170
    %p179 = scmp.eq.s32.totalorder %s28, 0
    %p180 = por %p178, %p179
    %p181 = scmp.ne.s32.totalorder %s169, %s170
    %p182 = scmp.eq.s32.totalorder %s29, 1
    %p183 = por %p181, %p182
    %p185 = scmp.ne.s32.totalorder %s170, %s184
    %p186 = scmp.eq.s32.totalorder %s29, 0
    %p187 = por %p185, %p186
    %s189 = sadd.s32 %s188, 1
    %p192 = scmp.eq.s32.totalorder %s23, 1
    %p193 = scmp.ne.s32.totalorder %s188, %s190
    %p194 = scmp.eq.s32.totalorder %s23, 0
    %p195 = por %p193, %p194
    %p196 = scmp.ne.s32.totalorder %s188, %s190
    %p197 = scmp.eq.s32.totalorder %s28, 1
    %p198 = por %p196, %p197
    %p199 = scmp.ne.s32.totalorder %s190, %s191
    %p200 = scmp.eq.s32.totalorder %s28, 0
    %p201 = por %p199, %p200
    %p202 = scmp.ne.s32.totalorder %s190, %s191
    %p203 = scmp.eq.s32.totalorder %s29, 1
    %p204 = por %p202, %p203
    %p206 = scmp.ne.s32.totalorder %s191, %s205
    %p207 = scmp.eq.s32.totalorder %s29, 0
    %p208 = por %p206, %p207
    %s210 = sadd.s32 %s209, 1
    %p213 = scmp.eq.s32.totalorder %s23, 1
    %p214 = scmp.ne.s32.totalorder %s209, %s211
    %p215 = scmp.eq.s32.totalorder %s23, 0
    %p216 = por %p214, %p215
    %p217 = scmp.ne.s32.totalorder %s209, %s211
    %p218 = scmp.eq.s32.totalorder %s28, 1
    %p219 = por %p217, %p218
    %p220 = scmp.ne.s32.totalorder %s211, %s212
    %p221 = scmp.eq.s32.totalorder %s28, 0
    %p222 = por %p220, %p221
    %p223 = scmp.ne.s32.totalorder %s211, %s212
    %p224 = scmp.eq.s32.totalorder %s29, 1
    %p225 = por %p223, %p224
    %p227 = scmp.ne.s32.totalorder %s212, %s226
    %p228 = scmp.eq.s32.totalorder %s29, 0
    %p229 = por %p227, %p228
    %s231 = sadd.s32 %s230, 1
    %p234 = scmp.eq.s32.totalorder %s23, 1
    %p235 = scmp.ne.s32.totalorder %s230, %s232
    %p236 = scmp.eq.s32.totalorder %s23, 0
    %p237 = por %p235, %p236
    %p238 = scmp.ne.s32.totalorder %s230, %s232
    %p239 = scmp.eq.s32.totalorder %s28, 1
    %p240 = por %p238, %p239
    %p241 = scmp.ne.s32.totalorder %s232, %s233
    %p242 = scmp.eq.s32.totalorder %s28, 0
    %p243 = por %p241, %p242
    %p244 = scmp.ne.s32.totalorder %s232, %s233
    %p245 = scmp.eq.s32.totalorder %s29, 1
    %p246 = por %p244, %p245
    %p248 = scmp.ne.s32.totalorder %s233, %s247
    %p249 = scmp.eq.s32.totalorder %s29, 0
    %p250 = por %p248, %p249
    %s252 = sadd.s32 %s251, 1
    %p255 = scmp.eq.s32.totalorder %s23, 1
    %p256 = scmp.ne.s32.totalorder %s251, %s253
    %p257 = scmp.eq.s32.totalorder %s23, 0
    %p258 = por %p256, %p257
    %p259 = scmp.ne.s32.totalorder %s251, %s253
    %p260 = scmp.eq.s32.totalorder %s28, 1
    %p261 = por %p259, %p260
    %p262 = scmp.ne.s32.totalorder %s253, %s254
    %p263 = scmp.eq.s32.totalorder %s28, 0
    %p264 = por %p262, %p263
    %p265 = scmp.ne.s32.totalorder %s253, %s254
    %p266 = scmp.eq.s32.totalorder %s29, 1
    %p267 = por %p265, %p266
    %p269 = scmp.ne.s32.totalorder %s254, %s268
    %p270 = scmp.eq.s32.totalorder %s29, 0
    %p271 = por %p269, %p270
    %s273 = sadd.s32 %s272, 1
    %p276 = scmp.eq.s32.totalorder %s23, 1
    %p277 = scmp.ne.s32.totalorder %s272, %s274
    %p278 = scmp.eq.s32.totalorder %s23, 0
    %p279 = por %p277, %p278
    %p280 = scmp.ne.s32.totalorder %s272, %s274
    %p281 = scmp.eq.s32.totalorder %s28, 1
    %p282 = por %p280, %p281
    %p283 = scmp.ne.s32.totalorder %s274, %s275
    %p284 = scmp.eq.s32.totalorder %s28, 0
    %p285 = por %p283, %p284
    %p286 = scmp.ne.s32.totalorder %s274, %s275
    %p287 = scmp.eq.s32.totalorder %s29, 1
    %p288 = por %p286, %p287
    %p290 = scmp.ne.s32.totalorder %s275, %s289
    %p291 = scmp.eq.s32.totalorder %s29, 0
    %p292 = por %p290, %p291
    %s294 = sadd.s32 %s293, 1
    %p297 = scmp.eq.s32.totalorder %s23, 1
    %p298 = scmp.ne.s32.totalorder %s293, %s295
    %p299 = scmp.eq.s32.totalorder %s23, 0
    %p300 = por %p298, %p299
    %p301 = scmp.ne.s32.totalorder %s293, %s295
    %p302 = scmp.eq.s32.totalorder %s28, 1
    %p303 = por %p301, %p302
    %p304 = scmp.ne.s32.totalorder %s295, %s296
    %p305 = scmp.eq.s32.totalorder %s28, 0
    %p306 = por %p304, %p305
    %p307 = scmp.ne.s32.totalorder %s295, %s296
    %p308 = scmp.eq.s32.totalorder %s29, 1
    %p309 = por %p307, %p308
    %p311 = scmp.ne.s32.totalorder %s296, %s310
    %p312 = scmp.eq.s32.totalorder %s29, 0
    %p313 = por %p311, %p312
    %s315 = sadd.s32 %s314, 1
    %p318 = scmp.eq.s32.totalorder %s23, 1
    %p319 = scmp.ne.s32.totalorder %s314, %s316
    %p320 = scmp.eq.s32.totalorder %s23, 0
    %p321 = por %p319, %p320
    %p322 = scmp.ne.s32.totalorder %s314, %s316
    %p323 = scmp.eq.s32.totalorder %s28, 1
    %p324 = por %p322, %p323
    %p325 = scmp.ne.s32.totalorder %s316, %s317
    %p326 = scmp.eq.s32.totalorder %s28, 0
    %p327 = por %p325, %p326
    %p328 = scmp.ne.s32.totalorder %s316, %s317
    %p329 = scmp.eq.s32.totalorder %s29, 1
    %p330 = por %p328, %p329
    %p332 = scmp.ne.s32.totalorder %s317, %s331
    %p333 = scmp.eq.s32.totalorder %s29, 0
    %p334 = por %p332, %p333
    %s336 = sadd.s32 %s335, 1
    %p339 = scmp.eq.s32.totalorder %s23, 1
    %p340 = scmp.ne.s32.totalorder %s335, %s337
    %p341 = scmp.eq.s32.totalorder %s23, 0
    %p342 = por %p340, %p341
    %p343 = scmp.ne.s32.totalorder %s335, %s337
    %p344 = scmp.eq.s32.totalorder %s28, 1
    %p345 = por %p343, %p344
    %p346 = scmp.ne.s32.totalorder %s337, %s338
    %p347 = scmp.eq.s32.totalorder %s28, 0
    %p348 = por %p346, %p347
    %p349 = scmp.ne.s32.totalorder %s337, %s338
    %p350 = scmp.eq.s32.totalorder %s29, 1
    %p351 = por %p349, %p350
    %p353 = scmp.ne.s32.totalorder %s338, %s352
    %p354 = scmp.eq.s32.totalorder %s29, 0
    %p355 = por %p353, %p354
    %s357 = sadd.s32 %s356, 1
    %p360 = scmp.eq.s32.totalorder %s23, 1
    %p361 = scmp.ne.s32.totalorder %s356, %s358
    %p362 = scmp.eq.s32.totalorder %s23, 0
    %p363 = por %p361, %p362
    %p364 = scmp.ne.s32.totalorder %s356, %s358
    %p365 = scmp.eq.s32.totalorder %s28, 1
    %p366 = por %p364, %p365
    %p367 = scmp.ne.s32.totalorder %s358, %s359
    %p368 = scmp.eq.s32.totalorder %s28, 0
    %p369 = por %p367, %p368
    %p370 = scmp.ne.s32.totalorder %s358, %s359
    %p371 = scmp.eq.s32.totalorder %s29, 1
    %p372 = por %p370, %p371
    %p374 = scmp.ne.s32.totalorder %s359, %s373
    %p375 = scmp.eq.s32.totalorder %s29, 0
    %p376 = por %p374, %p375
    %s378 = sadd.s32 %s377, 1
    %p381 = scmp.eq.s32.totalorder %s23, 1
    %p382 = scmp.ne.s32.totalorder %s377, %s379
    %p383 = scmp.eq.s32.totalorder %s23, 0
    %p384 = por %p382, %p383
    %p385 = scmp.ne.s32.totalorder %s377, %s379
    %p386 = scmp.eq.s32.totalorder %s28, 1
    %p387 = por %p385, %p386
    %p388 = scmp.ne.s32.totalorder %s379, %s380
    %p389 = scmp.eq.s32.totalorder %s28, 0
    %p390 = por %p388, %p389
    %p391 = scmp.ne.s32.totalorder %s379, %s380
    %p392 = scmp.eq.s32.totalorder %s29, 1
    %p393 = por %p391, %p392
    %p395 = scmp.ne.s32.totalorder %s380, %s394
    %p396 = scmp.eq.s32.totalorder %s29, 0
    %p397 = por %p395, %p396
    %s398 = ssub.s32 %s23, %s30
    %p399 = scmp.eq.s32.totalorder %s398, 0
    %s401 = sadd.s32 %s400, 1
    %s402 = scalar_select %p399, %s400, %s401
    %p405 = pneg %p399
    %p406 = scmp.eq.s32.totalorder %s23, 1
    %p407 = por %p405, %p406
    %p408 = scmp.ne.s32.totalorder %s400, %s403
    %p409 = scmp.eq.s32.totalorder %s23, 0
    %p410 = por %p408, %p409
    %p411 = scmp.ne.s32.totalorder %s400, %s403
    %p412 = scmp.eq.s32.totalorder %s28, 1
    %p413 = por %p411, %p412
    %p414 = scmp.ne.s32.totalorder %s403, %s404
    %p415 = scmp.eq.s32.totalorder %s28, 0
    %p416 = por %p414, %p415
    %p417 = scmp.ne.s32.totalorder %s403, %s404
    %p418 = scmp.eq.s32.totalorder %s29, 1
    %p419 = por %p417, %p418
    %p421 = scmp.ne.s32.totalorder %s404, %s420
    %p422 = scmp.eq.s32.totalorder %s29, 0
    %p423 = por %p421, %p422
    %p424 = scmp.le.s32.totalorder 1, %s23
    %p425 = scmp.lt.s32.totalorder %s23, 3
    %p426 = pnand %p424, %p425
    %p427 = pneg %p426
    // Predicated region
    $region9: #{kgmodel_vwmha_forward.11} parent=5 // pred_check
      _
    $region10: #{kgmodel_vwmha_forward.11} parent=5 // pred_check_branch
      %429 = sbr.rel (%p426) target = $region12
    $region11: #{kgmodel_vwmha_forward.11} parent=5 // pred_region
      %s430 = ssub.s32 %s23, 1
      // Predicated region
      $region13: #{kgmodel_vwmha_forward.11} parent=11 // pred_check
        %p431 = pneg %p96
      $region14: #{kgmodel_vwmha_forward.11} parent=11 // pred_check_branch
        %433 = sbr.rel (%p431) target = $region16
      $region15: #{kgmodel_vwmha_forward.11} parent=11 // pred_region
        _
      $region16: #{kgmodel_vwmha_forward.11} parent=11 // pred_fallthru
        _
      // Predicated region
      $region17: #{kgmodel_vwmha_forward.11} parent=11 // pred_check
        %p434 = pneg %p117
      $region18: #{kgmodel_vwmha_forward.11} parent=11 // pred_check_branch
        %436 = sbr.rel (%p434) target = $region20
      $region19: #{kgmodel_vwmha_forward.11} parent=11 // pred_region
        _
      $region20: #{kgmodel_vwmha_forward.11} parent=11 // pred_fallthru
        _
      // Predicated region
      $region21: #{kgmodel_vwmha_forward.11} parent=11 // pred_check
        %p437 = pneg %p138
      $region22: #{kgmodel_vwmha_forward.11} parent=11 // pred_check_branch
        %439 = sbr.rel (%p437) target = $region24
      $region23: #{kgmodel_vwmha_forward.11} parent=11 // pred_region
        _
      $region24: #{kgmodel_vwmha_forward.11} parent=11 // pred_fallthru
        _
      // Predicated region
      $region25: #{kgmodel_vwmha_forward.11} parent=11 // pred_check
        %p440 = pneg %p159
      $region26: #{kgmodel_vwmha_forward.11} parent=11 // pred_check_branch
        %442 = sbr.rel (%p440) target = $region28
      $region27: #{kgmodel_vwmha_forward.11} parent=11 // pred_region
        _
      $region28: #{kgmodel_vwmha_forward.11} parent=11 // pred_fallthru
        _
      // Predicated region
      $region29: #{kgmodel_vwmha_forward.11} parent=11 // pred_check
        %p443 = pneg %p180
      $region30: #{kgmodel_vwmha_forward.11} parent=11 // pred_check_branch
        %445 = sbr.rel (%p443) target = $region32
      $region31: #{kgmodel_vwmha_forward.11} parent=11 // pred_region
        _
      $region32: #{kgmodel_vwmha_forward.11} parent=11 // pred_fallthru
        _
      // Predicated region
      $region33: #{kgmodel_vwmha_forward.11} parent=11 // pred_check
        %p446 = pneg %p201
      $region34: #{kgmodel_vwmha_forward.11} parent=11 // pred_check_branch
        %448 = sbr.rel (%p446) target = $region36
      $region35: #{kgmodel_vwmha_forward.11} parent=11 // pred_region
        _
      $region36: #{kgmodel_vwmha_forward.11} parent=11 // pred_fallthru
        _
      // Predicated region
      $region37: #{kgmodel_vwmha_forward.11} parent=11 // pred_check
        %p449 = pneg %p222
      $region38: #{kgmodel_vwmha_forward.11} parent=11 // pred_check_branch
        %451 = sbr.rel (%p449) target = $region40
      $region39: #{kgmodel_vwmha_forward.11} parent=11 // pred_region
        _
      $region40: #{kgmodel_vwmha_forward.11} parent=11 // pred_fallthru
        _
      // Predicated region
      $region41: #{kgmodel_vwmha_forward.11} parent=11 // pred_check
        %p452 = pneg %p243
      $region42: #{kgmodel_vwmha_forward.11} parent=11 // pred_check_branch
        %454 = sbr.rel (%p452) target = $region44
      $region43: #{kgmodel_vwmha_forward.11} parent=11 // pred_region
        _
      $region44: #{kgmodel_vwmha_forward.11} parent=11 // pred_fallthru
        _
      // Predicated region
      $region45: #{kgmodel_vwmha_forward.11} parent=11 // pred_check
        %p455 = pneg %p264
      $region46: #{kgmodel_vwmha_forward.11} parent=11 // pred_check_branch
        %457 = sbr.rel (%p455) target = $region48
      $region47: #{kgmodel_vwmha_forward.11} parent=11 // pred_region
        _
      $region48: #{kgmodel_vwmha_forward.11} parent=11 // pred_fallthru
        _
      // Predicated region
      $region49: #{kgmodel_vwmha_forward.11} parent=11 // pred_check
        %p458 = pneg %p285
      $region50: #{kgmodel_vwmha_forward.11} parent=11 // pred_check_branch
        %460 = sbr.rel (%p458) target = $region52
      $region51: #{kgmodel_vwmha_forward.11} parent=11 // pred_region
        _
      $region52: #{kgmodel_vwmha_forward.11} parent=11 // pred_fallthru
        _
      // Predicated region
      $region53: #{kgmodel_vwmha_forward.11} parent=11 // pred_check
        %p461 = pneg %p306
      $region54: #{kgmodel_vwmha_forward.11} parent=11 // pred_check_branch
        %463 = sbr.rel (%p461) target = $region56
      $region55: #{kgmodel_vwmha_forward.11} parent=11 // pred_region
        _
      $region56: #{kgmodel_vwmha_forward.11} parent=11 // pred_fallthru
        _
      // Predicated region
      $region57: #{kgmodel_vwmha_forward.11} parent=11 // pred_check
        %p464 = pneg %p327
      $region58: #{kgmodel_vwmha_forward.11} parent=11 // pred_check_branch
        %466 = sbr.rel (%p464) target = $region60
      $region59: #{kgmodel_vwmha_forward.11} parent=11 // pred_region
        _
      $region60: #{kgmodel_vwmha_forward.11} parent=11 // pred_fallthru
        _
      // Predicated region
      $region61: #{kgmodel_vwmha_forward.11} parent=11 // pred_check
        %p467 = pneg %p348
      $region62: #{kgmodel_vwmha_forward.11} parent=11 // pred_check_branch
        %469 = sbr.rel (%p467) target = $region64
      $region63: #{kgmodel_vwmha_forward.11} parent=11 // pred_region
        _
      $region64: #{kgmodel_vwmha_forward.11} parent=11 // pred_fallthru
        _
      // Predicated region
      $region65: #{kgmodel_vwmha_forward.11} parent=11 // pred_check
        %p470 = pneg %p369
      $region66: #{kgmodel_vwmha_forward.11} parent=11 // pred_check_branch
        %472 = sbr.rel (%p470) target = $region68
      $region67: #{kgmodel_vwmha_forward.11} parent=11 // pred_region
        _
      $region68: #{kgmodel_vwmha_forward.11} parent=11 // pred_fallthru
        _
      // Predicated region
      $region69: #{kgmodel_vwmha_forward.11} parent=11 // pred_check
        %p473 = pneg %p390
      $region70: #{kgmodel_vwmha_forward.11} parent=11 // pred_check_branch
        %475 = sbr.rel (%p473) target = $region72
      $region71: #{kgmodel_vwmha_forward.11} parent=11 // pred_region
        _
      $region72: #{kgmodel_vwmha_forward.11} parent=11 // pred_fallthru
        _
    $region12: #{kgmodel_vwmha_forward.11} parent=5 // pred_fallthru
      _
    %p476 = scmp.lt.s32.totalorder %s23, 2
    // Predicated region
    $region73: #{kgmodel_vwmha_forward.11} parent=5 // pred_check
      %p477 = pneg %p476
    $region74: #{kgmodel_vwmha_forward.11} parent=5 // pred_check_branch
      %479 = sbr.rel (%p477) target = $region76
    $region75: #{kgmodel_vwmha_forward.11} parent=5 // pred_region
      // Predicated region
      $region77: #{kgmodel_vwmha_forward.11} parent=75 // pred_check
        %p480 = pneg %p43
      $region78: #{kgmodel_vwmha_forward.11} parent=75 // pred_check_branch
        %482 = sbr.rel (%p480) target = $region80
      $region79: #{kgmodel_vwmha_forward.11} parent=75 // pred_region
        %p483 = scmp.lt.s32.totalorder %s23, 1
        %s484 = scalar_select %p483, %s23, 1
        %s485 = smul.addr %s484, 8
        %s486 = scalar_lea.vmem %s0, %s485
      $region80: #{kgmodel_vwmha_forward.11} parent=75 // pred_fallthru
        _
      // Predicated region
      $region81: #{kgmodel_vwmha_forward.11} parent=75 // pred_check
        %p487 = pneg %p69
      $region82: #{kgmodel_vwmha_forward.11} parent=75 // pred_check_branch
        %489 = sbr.rel (%p487) target = $region84
      $region83: #{kgmodel_vwmha_forward.11} parent=75 // pred_region
        %p490 = scmp.lt.s32.totalorder %s23, 1
        %s491 = scalar_select %p490, %s23, 1
        %s492 = smul.addr %s491, 8
        %s493 = scalar_lea.vmem %s1, %s492
      $region84: #{kgmodel_vwmha_forward.11} parent=75 // pred_fallthru
        _
    $region76: #{kgmodel_vwmha_forward.11} parent=5 // pred_fallthru
      _
    %p494 = scmp.le.s32.totalorder 1, %s23
    %p495 = scmp.lt.s32.totalorder %s23, 3
    %p496 = pnand %p494, %p495
    %p497 = pneg %p496
    // Predicated region
    $region85: #{kgmodel_vwmha_forward.11} parent=5 // pred_check
      _
    $region86: #{kgmodel_vwmha_forward.11} parent=5 // pred_check_branch
      %499 = sbr.rel (%p496) target = $region88
    $region87: #{kgmodel_vwmha_forward.11} parent=5 // pred_region
      %s500 = ssub.s32 %s23, 1
      %p501 = scmp.lt.s32.totalorder %s28, 1
      %s502 = scalar_select %p501, %s28, 1
      %s503 = smul.addr %s502, 8
      %s504 = scalar_lea.vmem %s0, %s503
      %p505 = pneg %p49
      %p506 = pneg %p46
      %p507 = scmp.lt.s32.totalorder %s28, 1
      %s508 = scalar_select %p507, %s28, 1
      %s509 = smul.addr %s508, 8
      %s510 = scalar_lea.vmem %s1, %s509
      %p511 = pneg %p75
      %p512 = pneg %p72
      %p513 = pneg %p96
      %p514 = pneg %p93
      %p515 = pneg %p117
      %p516 = pneg %p114
      %p517 = pneg %p138
      %p518 = pneg %p135
      %p519 = pneg %p159
      %p520 = pneg %p156
      %p521 = pneg %p180
      %p522 = pneg %p177
      %p523 = pneg %p201
      %p524 = pneg %p198
      %p525 = pneg %p222
      %p526 = pneg %p219
      %p527 = pneg %p243
      %p528 = pneg %p240
      %p529 = pneg %p264
      %p530 = pneg %p261
      %p531 = pneg %p285
      %p532 = pneg %p282
      %p533 = pneg %p306
      %p534 = pneg %p303
      %p535 = pneg %p327
      %p536 = pneg %p324
      %p537 = pneg %p348
      %p538 = pneg %p345
      %p539 = pneg %p369
      %p540 = pneg %p366
      %p541 = pneg %p390
      %p542 = pneg %p387
      %p543 = pneg %p416
      %p544 = pneg %p413
      %p545 = scmp.lt.s32.totalorder %s28, 1
      %s546 = scalar_select %p545, %s28, 1
      %s547 = smul.addr %s546, 8
      %s548 = scalar_lea.vmem %s17, %s547
      %p549 = scmp.lt.s32.totalorder %s28, 1
      %s550 = scalar_select %p549, %s28, 1
      %s551 = smul.addr %s550, 8
      %s552 = scalar_lea.vmem %s0, %s551
      %p553 = scmp.lt.s32.totalorder %s28, 1
      %s554 = scalar_select %p553, %s28, 1
      %s555 = smul.addr %s554, 8
      %s556 = scalar_lea.vmem %s1, %s555
      %p557 = scmp.lt.s32.totalorder %s28, 1
      %s558 = scalar_select %p557, %s28, 1
      %s559 = smul.addr %s558, 8
      %s560 = scalar_lea.vmem %s17, %s559
      %v562 = vld [vmem:[%s552] sm:$0xff]
      %v563 = vld [vmem:[%s556] sm:$0xff]
      %564 = vadd.xlane.f32.xlu0 %v562
      %v565 = vpop.xlane.xlu0 %564
      %v566 = vrcp.pop 128.0
      %v567 = vmul.f32 %v565, %v566
      %v568 = vsub.f32 %v562, %v567
      %v569 = vmul.f32 %v568, %v568
      %570 = vadd.xlane.f32.xlu0 %v569
      %v571 = vpop.xlane.xlu0 %570
      %v572 = vmul.f32 %v571, %v566
      %v573 = vadd.f32 %v572, 1e-06
      %v574 = vrsqrt.pop %v573
      %v575 = vmul.f32 %v568, %v574
      %v576 = vld [vmem:[%s3] sm:$0x1]
      %v578 = vlaneseq
      %v579 = vshrl.u32 %v578, 7
      %v580 = vsub.s32 0, %v579
      %v581 = vrot.slane %v576, %v580
      %v583 = vmul.f32 %v575, %v581
      %v584 = vld [vmem:[%s4] sm:$0x1]
      %v586 = vlaneseq
      %v587 = vshrl.u32 %v586, 7
      %v588 = vsub.s32 0, %v587
      %v589 = vrot.slane %v584, %v588
      %v591 = vadd.f32 %v583, %v589
      %v592 = vpack.c.bf16 %v591, %v591
      %v593 = vld [vmem:[%s5] sm:$0xf]
      %v594 = vld [vmem:[%s5 + $0x4] sm:$0xf]
      %v595 = vld [vmem:[%s5 + $0x8] sm:$0xf]
      %v596 = vld [vmem:[%s5 + $0xc] sm:$0xf]
      %v597 = vld [vmem:[%s5 + $0x10] sm:$0xf]
      %v598 = vld [vmem:[%s5 + $0x14] sm:$0xf]
      %v599 = vld [vmem:[%s5 + $0x18] sm:$0xf]
      %v600 = vld [vmem:[%s5 + $0x1c] sm:$0xf]
      %v601 = vld [vmem:[%s5 + $0x20] sm:$0xf]
      %v602 = vld [vmem:[%s5 + $0x24] sm:$0xf]
      %v603 = vld [vmem:[%s5 + $0x28] sm:$0xf]
      %v604 = vld [vmem:[%s5 + $0x2c] sm:$0xf]
      %v605 = vld [vmem:[%s5 + $0x30] sm:$0xf]
      %v606 = vld [vmem:[%s5 + $0x34] sm:$0xf]
      %v607 = vld [vmem:[%s5 + $0x38] sm:$0xf]
      %v608 = vld [vmem:[%s5 + $0x3c] sm:$0xf]
      %v609 = vld [vmem:[%s6] sm:$0x1]
      %v611 = vlaneseq
      %v612 = vshrl.u32 %v611, 7
      %v613 = vsub.s32 0, %v612
      %v614 = vrot.slane %v609, %v613
      %v632 = vunpack.c.l.b16 %v593
      %v633 = vunpack.c.l.b16 %v594
      %v634 = vunpack.c.l.b16 %v595
      %v635 = vunpack.c.l.b16 %v596
      %v636 = vunpack.c.l.b16 %v597
      %v637 = vunpack.c.l.b16 %v598
      %v638 = vunpack.c.l.b16 %v599
      %v639 = vunpack.c.l.b16 %v600
      %v640 = vunpack.c.l.b16 %v601
      %v641 = vunpack.c.l.b16 %v602
      %v642 = vunpack.c.l.b16 %v603
      %v643 = vunpack.c.l.b16 %v604
      %v644 = vunpack.c.l.b16 %v605
      %v645 = vunpack.c.l.b16 %v606
      %v646 = vunpack.c.l.b16 %v607
      %v647 = vunpack.c.l.b16 %v608
      %v648 = vpack.c.b16 %v633, %v632
      %v649 = vpack.c.b16 %v635, %v634
      %v650 = vpack.c.b16 %v637, %v636
      %v651 = vpack.c.b16 %v639, %v638
      %v652 = vpack.c.b16 %v641, %v640
      %v653 = vpack.c.b16 %v643, %v642
      %v654 = vpack.c.b16 %v645, %v644
      %v655 = vpack.c.b16 %v647, %v646
      %664 = vmatprep.subr.bf16.mxu0 0
      %665 = vmatpush1.bf16.msra.mxu0 %v655
      %666 = vmatprep.subr.bf16.mxu0 0
      %667 = vmatpush1.bf16.msra.mxu0 %v654
      %668 = vmatprep.subr.bf16.mxu0 0
      %669 = vmatpush1.bf16.msra.mxu0 %v653
      %670 = vmatprep.subr.bf16.mxu0 0
      %671 = vmatpush1.bf16.msra.mxu0 %v652
      %672 = vmatprep.subr.bf16.mxu0 0
      %673 = vmatpush1.bf16.msra.mxu0 %v651
      %674 = vmatprep.subr.bf16.mxu0 0
      %675 = vmatpush1.bf16.msra.mxu0 %v650
      %676 = vmatprep.subr.bf16.mxu0 0
      %677 = vmatpush1.bf16.msra.mxu0 %v649
      %678 = vmatprep.subr.bf16.mxu0 0
      %679 = vmatpush1.bf16.msra.mxu0 %v648
      %680 = vmatprep.subr.bf16.mxu0 0
      %681 = vmatpush2.bf16.msra.mxu0 0
      %682 = vmatprep.subr.bf16.mxu0 0
      %683 = vmatpush2.bf16.msra.mxu0 0
      %684 = vmatprep.subr.bf16.mxu0 0
      %685 = vmatpush2.bf16.msra.mxu0 0
      %686 = vmatprep.subr.bf16.mxu0 0
      %687 = vmatpush2.bf16.msra.mxu0 0
      %688 = vmatprep.subr.bf16.mxu0 0
      %689 = vmatpush2.bf16.msra.mxu0 0
      %690 = vmatprep.subr.bf16.mxu0 0
      %691 = vmatpush2.bf16.msra.mxu0 0
      %692 = vmatprep.subr.bf16.mxu0 0
      %693 = vmatpush2.bf16.msra.mxu0 0
      %694 = vmatprep.subr.bf16.mxu0 0
      %695 = vmatpush2.bf16.msra.mxu0 0
      %696 = vmatprep.mubr.bf16.mxu0 0
      %697 = vmatmul.mubr.bf16.gmra.mxu0 %v592
      %v698 = vpop.f32.mrf.mxu0
      %v699 = vadd.f32 %v614, %v698
      %v700 = vpop.f32.mrf.mxu0
      %v701 = vpop.f32.mrf.mxu0
      %v702 = vpop.f32.mrf.mxu0
      %703 = vdwg.mxu0
      %v704 = vmul.f32 %v699, 0.17677669
      %v705 = vpack.c.bf16 %v563, %v563
      %v706 = vld [vmem:[%s7] sm:$0xff]
      %v707 = vld [vmem:[%s7 + $0x8] sm:$0xff]
      %v708 = vld [vmem:[%s7 + $0x10] sm:$0xff]
      %v709 = vld [vmem:[%s7 + $0x18] sm:$0xff]
      %v710 = vld [vmem:[%s7 + $0x20] sm:$0xff]
      %v711 = vld [vmem:[%s7 + $0x28] sm:$0xff]
      %v712 = vld [vmem:[%s7 + $0x30] sm:$0xff]
      %v713 = vld [vmem:[%s7 + $0x38] sm:$0xff]
      %v714 = vld [vmem:[%s7 + $0x40] sm:$0xff]
      %v715 = vld [vmem:[%s7 + $0x48] sm:$0xff]
      %v716 = vld [vmem:[%s7 + $0x50] sm:$0xff]
      %v717 = vld [vmem:[%s7 + $0x58] sm:$0xff]
      %v718 = vld [vmem:[%s7 + $0x60] sm:$0xff]
      %v719 = vld [vmem:[%s7 + $0x68] sm:$0xff]
      %v720 = vld [vmem:[%s7 + $0x70] sm:$0xff]
      %v721 = vld [vmem:[%s7 + $0x78] sm:$0xff]
      %v722 = vld [vmem:[%s8] sm:$0x3]
      %v724 = vlaneseq
      %v725 = vshrl.u32 %v724, 7
      %v726 = vsub.s32 0, %v725
      %v727 = vrot.slane %v722, %v726
      %v728 = vlaneseq
      %v729 = vshrl.u32 %v728, 7
      %v730 = vsub.s32 1, %v729
      %v731 = vrot.slane %v722, %v730
      %v750 = vunpack.c.l.b16 %v706
      %v751 = vunpack.c.h.b16 %v706
      %v752 = vunpack.c.l.b16 %v707
      %v753 = vunpack.c.h.b16 %v707
      %v754 = vunpack.c.l.b16 %v708
      %v755 = vunpack.c.h.b16 %v708
      %v756 = vunpack.c.l.b16 %v709
      %v757 = vunpack.c.h.b16 %v709
      %v758 = vunpack.c.l.b16 %v710
      %v759 = vunpack.c.h.b16 %v710
      %v760 = vunpack.c.l.b16 %v711
      %v761 = vunpack.c.h.b16 %v711
      %v762 = vunpack.c.l.b16 %v712
      %v763 = vunpack.c.h.b16 %v712
      %v764 = vunpack.c.l.b16 %v713
      %v765 = vunpack.c.h.b16 %v713
      %v766 = vunpack.c.l.b16 %v714
      %v767 = vunpack.c.h.b16 %v714
      %v768 = vunpack.c.l.b16 %v715
      %v769 = vunpack.c.h.b16 %v715
      %v770 = vunpack.c.l.b16 %v716
      %v771 = vunpack.c.h.b16 %v716
      %v772 = vunpack.c.l.b16 %v717
      %v773 = vunpack.c.h.b16 %v717
      %v774 = vunpack.c.l.b16 %v718
      %v775 = vunpack.c.h.b16 %v718
      %v776 = vunpack.c.l.b16 %v719
      %v777 = vunpack.c.h.b16 %v719
      %v778 = vunpack.c.l.b16 %v720
      %v779 = vunpack.c.h.b16 %v720
      %v780 = vunpack.c.l.b16 %v721
      %v781 = vunpack.c.h.b16 %v721
      %v782 = vpack.c.b16 %v752, %v750
      %v783 = vpack.c.b16 %v753, %v751
      %v784 = vpack.c.b16 %v756, %v754
      %v785 = vpack.c.b16 %v757, %v755
      %v786 = vpack.c.b16 %v760, %v758
      %v787 = vpack.c.b16 %v761, %v759
      %v788 = vpack.c.b16 %v764, %v762
      %v789 = vpack.c.b16 %v765, %v763
      %v790 = vpack.c.b16 %v768, %v766
      %v791 = vpack.c.b16 %v769, %v767
      %v792 = vpack.c.b16 %v772, %v770
      %v793 = vpack.c.b16 %v773, %v771
      %v794 = vpack.c.b16 %v776, %v774
      %v795 = vpack.c.b16 %v777, %v775
      %v796 = vpack.c.b16 %v780, %v778
      %v797 = vpack.c.b16 %v781, %v779
      %814 = vmatprep.subr.bf16.mxu0 %v797
      %815 = vmatpush1.bf16.msra.mxu0 %v796
      %816 = vmatprep.subr.bf16.mxu0 %v795
      %817 = vmatpush1.bf16.msra.mxu0 %v794
      %818 = vmatprep.subr.bf16.mxu0 %v793
      %819 = vmatpush1.bf16.msra.mxu0 %v792
      %820 = vmatprep.subr.bf16.mxu0 %v791
      %821 = vmatpush1.bf16.msra.mxu0 %v790
      %822 = vmatprep.subr.bf16.mxu0 %v789
      %823 = vmatpush1.bf16.msra.mxu0 %v788
      %824 = vmatprep.subr.bf16.mxu0 %v787
      %825 = vmatpush1.bf16.msra.mxu0 %v786
      %826 = vmatprep.subr.bf16.mxu0 %v785
      %827 = vmatpush1.bf16.msra.mxu0 %v784
      %828 = vmatprep.subr.bf16.mxu0 %v783
      %829 = vmatpush1.bf16.msra.mxu0 %v782
      %830 = vmatprep.subr.bf16.mxu0 0
      %831 = vmatpush2.bf16.msra.mxu0 0
      %832 = vmatprep.subr.bf16.mxu0 0
      %833 = vmatpush2.bf16.msra.mxu0 0
      %834 = vmatprep.subr.bf16.mxu0 0
      %835 = vmatpush2.bf16.msra.mxu0 0
      %836 = vmatprep.subr.bf16.mxu0 0
      %837 = vmatpush2.bf16.msra.mxu0 0
      %838 = vmatprep.subr.bf16.mxu0 0
      %839 = vmatpush2.bf16.msra.mxu0 0
      %840 = vmatprep.subr.bf16.mxu0 0
      %841 = vmatpush2.bf16.msra.mxu0 0
      %842 = vmatprep.subr.bf16.mxu0 0
      %843 = vmatpush2.bf16.msra.mxu0 0
      %844 = vmatprep.subr.bf16.mxu0 0
      %845 = vmatpush2.bf16.msra.mxu0 0
      %846 = vmatprep.mubr.bf16.mxu0 0
      %847 = vmatmul.mubr.bf16.gmra.mxu0 %v705
      %v848 = vpop.f32.mrf.mxu0
      %v849 = vadd.f32 %v727, %v848
      %v850 = vpop.f32.mrf.mxu0
      %v851 = vadd.f32 %v731, %v850
      %v852 = vpop.f32.mrf.mxu0
      %v853 = vpop.f32.mrf.mxu0
      %854 = vdwg.mxu0
      %v855 = vpack.c.bf16 %v704, %v704
      %v856 = vpack.c.bf16 %v849, %v849
      %v857 = vpack.c.bf16 %v851, %v851
      %v858 = vld [vmem:[%s2] sm:$0x1]
      %v860 = vlaneseq
      %v861 = vshrl.u32 %v860, 7
      %v862 = vsub.s32 0, %v861
      %v863 = vrot.slane %v858, %v862
      %v865 = vld [vmem:[%s9] sm:$0xf]
      %v866 = vld [vmem:[%s9 + $0x4] sm:$0xf]
      %v867 = vld [vmem:[%s9 + $0x8] sm:$0xf]
      %v868 = vld [vmem:[%s9 + $0xc] sm:$0xf]
      %v869 = vld [vmem:[%s9 + $0x10] sm:$0xf]
      %v870 = vld [vmem:[%s9 + $0x14] sm:$0xf]
      %v871 = vld [vmem:[%s9 + $0x18] sm:$0xf]
      %v872 = vld [vmem:[%s9 + $0x1c] sm:$0xf]
      %v873 = vld [vmem:[%s9 + $0x20] sm:$0xf]
      %v874 = vld [vmem:[%s9 + $0x24] sm:$0xf]
      %v875 = vld [vmem:[%s9 + $0x28] sm:$0xf]
      %v876 = vld [vmem:[%s9 + $0x2c] sm:$0xf]
      %v877 = vld [vmem:[%s9 + $0x30] sm:$0xf]
      %v878 = vld [vmem:[%s9 + $0x34] sm:$0xf]
      %v879 = vld [vmem:[%s9 + $0x38] sm:$0xf]
      %v880 = vld [vmem:[%s9 + $0x3c] sm:$0xf]
      %vm881 = vcmask 261120
      %v883 = vsel %vm881, %v855, 0
      %v886 = vsel %vm881, %v856, 0
      %888 = vmatprep.subr.bf16.mxu0 0
      %889 = vmatpush1.bf16.xpose.msra.mxu0 0
      %890 = vmatprep.subr.bf16.mxu0 0
      %891 = vmatpush1.bf16.xpose.msra.mxu0 0
      %892 = vmatprep.subr.bf16.mxu0 0
      %893 = vmatpush1.bf16.xpose.msra.mxu0 0
      %894 = vmatprep.subr.bf16.mxu0 0
      %895 = vmatpush1.bf16.xpose.msra.mxu0 0
      %896 = vmatprep.subr.bf16.mxu0 0
      %897 = vmatpush1.bf16.xpose.msra.mxu0 0
      %898 = vmatprep.subr.bf16.mxu0 0
      %899 = vmatpush1.bf16.xpose.msra.mxu0 0
      %900 = vmatprep.subr.bf16.mxu0 0
      %901 = vmatpush1.bf16.xpose.msra.mxu0 0
      %902 = vmatprep.subr.bf16.mxu0 0
      %903 = vmatpush1.bf16.xpose.msra.mxu0 %v886
      %904 = vmatprep.subr.bf16.mxu0 0
      %905 = vmatpush2.bf16.xpose.msra.mxu0 0
      %906 = vmatprep.subr.bf16.mxu0 0
      %907 = vmatpush2.bf16.xpose.msra.mxu0 0
      %908 = vmatprep.subr.bf16.mxu0 0
      %909 = vmatpush2.bf16.xpose.msra.mxu0 0
      %910 = vmatprep.subr.bf16.mxu0 0
      %911 = vmatpush2.bf16.xpose.msra.mxu0 0
      %912 = vmatprep.subr.bf16.mxu0 0
      %913 = vmatpush2.bf16.xpose.msra.mxu0 0
      %914 = vmatprep.subr.bf16.mxu0 0
      %915 = vmatpush2.bf16.xpose.msra.mxu0 0
      %916 = vmatprep.subr.bf16.mxu0 0
      %917 = vmatpush2.bf16.xpose.msra.mxu0 0
      %918 = vmatprep.subr.bf16.mxu0 0
      %919 = vmatpush2.bf16.xpose.msra.mxu0 0
      %920 = vmatprep.mubr.bf16.mxu0 0
      %921 = vmatmul.mubr.bf16.gmra.mxu0 %v883
      %v922 = vpop.f32.mrf.mxu0
      %v923 = vadd.f32 %v863, %v922
      %v924 = vpop.f32.mrf.mxu0
      %v925 = vpop.f32.mrf.mxu0
      %v926 = vpop.f32.mrf.mxu0
      %927 = vdwg.mxu0
      %vm928 = vcmask 64512
      %v929 = vsel %vm928, %v923, -inf
      %930 = vmax.xlane.f32.xlu0 %v929
      %v931 = vpop.xlane.xlu0 %930
      %v932 = vsub.f32 %v923, %v931
      %v933 = vmul.f32 %v932, 1.442695
      %v934 = vpow.pop %v933
      %v935 = vsel %vm928, %v934, 0.0
      %936 = vadd.xlane.f32.xlu0 %v935
      %v937 = vpop.xlane.xlu0 %936
      %v938 = vrcp.pop %v937
      %v939 = vmul.f32 %v934, %v938
      %v940 = vpack.c.bf16 %v939, %v939
      %v942 = vsel %vm928, %v940, 0
      %vm944 = vcmask 1043456
      %v946 = vsel %vm944, %v857, 0
      %948 = vmatprep.subr.bf16.mxu0 0
      %949 = vmatpush1.bf16.msra.mxu0 0
      %950 = vmatprep.subr.bf16.mxu0 0
      %951 = vmatpush1.bf16.msra.mxu0 0
      %952 = vmatprep.subr.bf16.mxu0 0
      %953 = vmatpush1.bf16.msra.mxu0 0
      %954 = vmatprep.subr.bf16.mxu0 0
      %955 = vmatpush1.bf16.msra.mxu0 0
      %956 = vmatprep.subr.bf16.mxu0 0
      %957 = vmatpush1.bf16.msra.mxu0 0
      %958 = vmatprep.subr.bf16.mxu0 0
      %959 = vmatpush1.bf16.msra.mxu0 0
      %960 = vmatprep.subr.bf16.mxu0 0
      %961 = vmatpush1.bf16.msra.mxu0 0
      %962 = vmatprep.subr.bf16.mxu0 0
      %963 = vmatpush1.bf16.msra.mxu0 %v946
      %964 = vmatprep.subr.bf16.mxu0 0
      %965 = vmatpush2.bf16.msra.mxu0 0
      %966 = vmatprep.subr.bf16.mxu0 0
      %967 = vmatpush2.bf16.msra.mxu0 0
      %968 = vmatprep.subr.bf16.mxu0 0
      %969 = vmatpush2.bf16.msra.mxu0 0
      %970 = vmatprep.subr.bf16.mxu0 0
      %971 = vmatpush2.bf16.msra.mxu0 0
      %972 = vmatprep.subr.bf16.mxu0 0
      %973 = vmatpush2.bf16.msra.mxu0 0
      %974 = vmatprep.subr.bf16.mxu0 0
      %975 = vmatpush2.bf16.msra.mxu0 0
      %976 = vmatprep.subr.bf16.mxu0 0
      %977 = vmatpush2.bf16.msra.mxu0 0
      %978 = vmatprep.subr.bf16.mxu0 0
      %979 = vmatpush2.bf16.msra.mxu0 0
      %980 = vmatprep.mubr.bf16.mxu0 0
      %981 = vmatmul.mubr.bf16.gmra.mxu0 %v942
      %v982 = vpop.f32.mrf.mxu0
      %v983 = vadd.f32 0.0, %v982
      %v984 = vpop.f32.mrf.mxu0
      %v985 = vpop.f32.mrf.mxu0
      %v986 = vpop.f32.mrf.mxu0
      %987 = vdwg.mxu0
      %v988 = vpack.c.bf16 %v983, %v983
      %990 = vrot.lane.b32.xlu0 %v855, 96
      %v991 = vpop.permute.xlu0 %990
      %993 = vrot.lane.b32.xlu0 %v856, 96
      %v994 = vpop.permute.xlu0 %993
      %v996 = vsel %vm881, %v991, 0
      %v999 = vsel %vm881, %v994, 0
      %1001 = vmatprep.subr.bf16.mxu0 0
      %1002 = vmatpush1.bf16.xpose.msra.mxu0 0
      %1003 = vmatprep.subr.bf16.mxu0 0
      %1004 = vmatpush1.bf16.xpose.msra.mxu0 0
      %1005 = vmatprep.subr.bf16.mxu0 0
      %1006 = vmatpush1.bf16.xpose.msra.mxu0 0
      %1007 = vmatprep.subr.bf16.mxu0 0
      %1008 = vmatpush1.bf16.xpose.msra.mxu0 0
      %1009 = vmatprep.subr.bf16.mxu0 0
      %1010 = vmatpush1.bf16.xpose.msra.mxu0 0
      %1011 = vmatprep.subr.bf16.mxu0 0
      %1012 = vmatpush1.bf16.xpose.msra.mxu0 0
      %1013 = vmatprep.subr.bf16.mxu0 0
      %1014 = vmatpush1.bf16.xpose.msra.mxu0 0
      %1015 = vmatprep.subr.bf16.mxu0 0
      %1016 = vmatpush1.bf16.xpose.msra.mxu0 %v999
      %1017 = vmatprep.subr.bf16.mxu0 0
      %1018 = vmatpush2.bf16.xpose.msra.mxu0 0
      %1019 = vmatprep.subr.bf16.mxu0 0
      %1020 = vmatpush2.bf16.xpose.msra.mxu0 0
      %1021 = vmatprep.subr.bf16.mxu0 0
      %1022 = vmatpush2.bf16.xpose.msra.mxu0 0
      %1023 = vmatprep.subr.bf16.mxu0 0
      %1024 = vmatpush2.bf16.xpose.msra.mxu0 0
      %1025 = vmatprep.subr.bf16.mxu0 0
      %1026 = vmatpush2.bf16.xpose.msra.mxu0 0
      %1027 = vmatprep.subr.bf16.mxu0 0
      %1028 = vmatpush2.bf16.xpose.msra.mxu0 0
      %1029 = vmatprep.subr.bf16.mxu0 0
      %1030 = vmatpush2.bf16.xpose.msra.mxu0 0
      %1031 = vmatprep.subr.bf16.mxu0 0
      %1032 = vmatpush2.bf16.xpose.msra.mxu0 0
      %1033 = vmatprep.mubr.bf16.mxu0 0
      %1034 = vmatmul.mubr.bf16.gmra.mxu0 %v996
      %v1035 = vpop.f32.mrf.mxu0
      %v1036 = vadd.f32 %v863, %v1035
      %v1037 = vpop.f32.mrf.mxu0
      %v1038 = vpop.f32.mrf.mxu0
      %v1039 = vpop.f32.mrf.mxu0
      %1040 = vdwg.mxu0
      %v1041 = vsel %vm928, %v1036, -inf
      %1042 = vmax.xlane.f32.xlu0 %v1041
      %v1043 = vpop.xlane.xlu0 %1042
      %v1044 = vsub.f32 %v1036, %v1043
      %v1045 = vmul.f32 %v1044, 1.442695
      %v1046 = vpow.pop %v1045
      %v1047 = vsel %vm928, %v1046, 0.0
      %1048 = vadd.xlane.f32.xlu0 %v1047
      %v1049 = vpop.xlane.xlu0 %1048
      %v1050 = vrcp.pop %v1049
      %v1051 = vmul.f32 %v1046, %v1050
      %v1052 = vpack.c.bf16 %v1051, %v1051
      %1054 = vrot.lane.b32.xlu0 %v857, 96
      %v1055 = vpop.permute.xlu0 %1054
      %v1057 = vsel %vm928, %v1052, 0
      %v1060 = vsel %vm944, %v1055, 0
      %1062 = vmatprep.subr.bf16.mxu0 0
      %1063 = vmatpush1.bf16.msra.mxu0 0
      %1064 = vmatprep.subr.bf16.mxu0 0
      %1065 = vmatpush1.bf16.msra.mxu0 0
      %1066 = vmatprep.subr.bf16.mxu0 0
      %1067 = vmatpush1.bf16.msra.mxu0 0
      %1068 = vmatprep.subr.bf16.mxu0 0
      %1069 = vmatpush1.bf16.msra.mxu0 0
      %1070 = vmatprep.subr.bf16.mxu0 0
      %1071 = vmatpush1.bf16.msra.mxu0 0
      %1072 = vmatprep.subr.bf16.mxu0 0
      %1073 = vmatpush1.bf16.msra.mxu0 0
      %1074 = vmatprep.subr.bf16.mxu0 0
      %1075 = vmatpush1.bf16.msra.mxu0 0
      %1076 = vmatprep.subr.bf16.mxu0 0
      %1077 = vmatpush1.bf16.msra.mxu0 %v1060
      %1078 = vmatprep.subr.bf16.mxu0 0
      %1079 = vmatpush2.bf16.msra.mxu0 0
      %1080 = vmatprep.subr.bf16.mxu0 0
      %1081 = vmatpush2.bf16.msra.mxu0 0
      %1082 = vmatprep.subr.bf16.mxu0 0
      %1083 = vmatpush2.bf16.msra.mxu0 0
      %1084 = vmatprep.subr.bf16.mxu0 0
      %1085 = vmatpush2.bf16.msra.mxu0 0
      %1086 = vmatprep.subr.bf16.mxu0 0
      %1087 = vmatpush2.bf16.msra.mxu0 0
      %1088 = vmatprep.subr.bf16.mxu0 0
      %1089 = vmatpush2.bf16.msra.mxu0 0
      %1090 = vmatprep.subr.bf16.mxu0 0
      %1091 = vmatpush2.bf16.msra.mxu0 0
      %1092 = vmatprep.subr.bf16.mxu0 0
      %1093 = vmatpush2.bf16.msra.mxu0 0
      %1094 = vmatprep.mubr.bf16.mxu0 0
      %1095 = vmatmul.mubr.bf16.gmra.mxu0 %v1057
      %v1096 = vpop.f32.mrf.mxu0
      %v1097 = vadd.f32 0.0, %v1096
      %v1098 = vpop.f32.mrf.mxu0
      %v1099 = vpop.f32.mrf.mxu0
      %v1100 = vpop.f32.mrf.mxu0
      %1101 = vdwg.mxu0
      %v1102 = vpack.c.bf16 %v1097, %v1097
      %v1107 = vunpack.c.l.b16 %v869
      %v1108 = vunpack.c.l.b16 %v870
      %v1109 = vunpack.c.l.b16 %v871
      %v1110 = vunpack.c.l.b16 %v872
      %v1111 = vpack.c.b16 %v1108, %v1107
      %v1112 = vpack.c.b16 %v1110, %v1109
      %v1116 = vsel %vm881, %v1102, 0
      %1118 = vmatprep.subr.bf16.mxu0 0
      %1119 = vmatpush1.bf16.msra.mxu0 0
      %1120 = vmatprep.subr.bf16.mxu0 0
      %1121 = vmatpush1.bf16.msra.mxu0 0
      %1122 = vmatprep.subr.bf16.mxu0 0
      %1123 = vmatpush1.bf16.msra.mxu0 0
      %1124 = vmatprep.subr.bf16.mxu0 0
      %1125 = vmatpush1.bf16.msra.mxu0 0
      %1126 = vmatprep.subr.bf16.mxu0 0
      %1127 = vmatpush1.bf16.msra.mxu0 0
      %1128 = vmatprep.subr.bf16.mxu0 0
      %1129 = vmatpush1.bf16.msra.mxu0 0
      %1130 = vmatprep.subr.bf16.mxu0 0
      %1131 = vmatpush1.bf16.msra.mxu0 %v1112
      %1132 = vmatprep.subr.bf16.mxu0 0
      %1133 = vmatpush1.bf16.msra.mxu0 %v1111
      %1134 = vmatprep.subr.bf16.mxu0 0
      %1135 = vmatpush2.bf16.msra.mxu0 0
      %1136 = vmatprep.subr.bf16.mxu0 0
      %1137 = vmatpush2.bf16.msra.mxu0 0
      %1138 = vmatprep.subr.bf16.mxu0 0
      %1139 = vmatpush2.bf16.msra.mxu0 0
      %1140 = vmatprep.subr.bf16.mxu0 0
      %1141 = vmatpush2.bf16.msra.mxu0 0
      %1142 = vmatprep.subr.bf16.mxu0 0
      %1143 = vmatpush2.bf16.msra.mxu0 0
      %1144 = vmatprep.subr.bf16.mxu0 0
      %1145 = vmatpush2.bf16.msra.mxu0 0
      %1146 = vmatprep.subr.bf16.mxu0 0
      %1147 = vmatpush2.bf16.msra.mxu0 0
      %1148 = vmatprep.subr.bf16.mxu0 0
      %1149 = vmatpush2.bf16.msra.mxu0 0
      %1150 = vmatprep.mubr.bf16.mxu0 0
      %1151 = vmatmul.mubr.bf16.gmra.mxu0 %v1116
      %v1152 = vpop.f32.mrf.mxu0
      %v1153 = vadd.f32 0.0, %v1152
      %v1154 = vpop.f32.mrf.mxu0
      %v1155 = vpop.f32.mrf.mxu0
      %v1156 = vpop.f32.mrf.mxu0
      %1157 = vdwg.mxu0
      %v1162 = vunpack.c.l.b16 %v865
      %v1163 = vunpack.c.l.b16 %v866
      %v1164 = vunpack.c.l.b16 %v867
      %v1165 = vunpack.c.l.b16 %v868
      %v1166 = vpack.c.b16 %v1163, %v1162
      %v1167 = vpack.c.b16 %v1165, %v1164
      %v1171 = vsel %vm881, %v988, 0
      %1173 = vmatprep.subr.bf16.mxu0 0
      %1174 = vmatpush1.bf16.msra.mxu0 0
      %1175 = vmatprep.subr.bf16.mxu0 0
      %1176 = vmatpush1.bf16.msra.mxu0 0
      %1177 = vmatprep.subr.bf16.mxu0 0
      %1178 = vmatpush1.bf16.msra.mxu0 0
      %1179 = vmatprep.subr.bf16.mxu0 0
      %1180 = vmatpush1.bf16.msra.mxu0 0
      %1181 = vmatprep.subr.bf16.mxu0 0
      %1182 = vmatpush1.bf16.msra.mxu0 0
      %1183 = vmatprep.subr.bf16.mxu0 0
      %1184 = vmatpush1.bf16.msra.mxu0 0
      %1185 = vmatprep.subr.bf16.mxu0 0
      %1186 = vmatpush1.bf16.msra.mxu0 %v1167
      %1187 = vmatprep.subr.bf16.mxu0 0
      %1188 = vmatpush1.bf16.msra.mxu0 %v1166
      %1189 = vmatprep.subr.bf16.mxu0 0
      %1190 = vmatpush2.bf16.msra.mxu0 0
      %1191 = vmatprep.subr.bf16.mxu0 0
      %1192 = vmatpush2.bf16.msra.mxu0 0
      %1193 = vmatprep.subr.bf16.mxu0 0
      %1194 = vmatpush2.bf16.msra.mxu0 0
      %1195 = vmatprep.subr.bf16.mxu0 0
      %1196 = vmatpush2.bf16.msra.mxu0 0
      %1197 = vmatprep.subr.bf16.mxu0 0
      %1198 = vmatpush2.bf16.msra.mxu0 0
      %1199 = vmatprep.subr.bf16.mxu0 0
      %1200 = vmatpush2.bf16.msra.mxu0 0
      %1201 = vmatprep.subr.bf16.mxu0 0
      %1202 = vmatpush2.bf16.msra.mxu0 0
      %1203 = vmatprep.subr.bf16.mxu0 0
      %1204 = vmatpush2.bf16.msra.mxu0 0
      %1205 = vmatprep.mubr.bf16.mxu0 0
      %1206 = vmatmul.mubr.bf16.gmra.mxu0 %v1171
      %v1207 = vpop.f32.mrf.mxu0
      %v1208 = vadd.f32 %v1153, %v1207
      %v1209 = vpop.f32.mrf.mxu0
      %v1210 = vpop.f32.mrf.mxu0
      %v1211 = vpop.f32.mrf.mxu0
      %1212 = vdwg.mxu0
      %1213 = vrot.lane.b32.xlu0 %v855, 64
      %v1214 = vpop.permute.xlu0 %1213
      %1215 = vrot.lane.b32.xlu0 %v856, 64
      %v1216 = vpop.permute.xlu0 %1215
      %v1218 = vsel %vm881, %v1214, 0
      %v1221 = vsel %vm881, %v1216, 0
      %1223 = vmatprep.subr.bf16.mxu0 0
      %1224 = vmatpush1.bf16.xpose.msra.mxu0 0
      %1225 = vmatprep.subr.bf16.mxu0 0
      %1226 = vmatpush1.bf16.xpose.msra.mxu0 0
      %1227 = vmatprep.subr.bf16.mxu0 0
      %1228 = vmatpush1.bf16.xpose.msra.mxu0 0
      %1229 = vmatprep.subr.bf16.mxu0 0
      %1230 = vmatpush1.bf16.xpose.msra.mxu0 0
      %1231 = vmatprep.subr.bf16.mxu0 0
      %1232 = vmatpush1.bf16.xpose.msra.mxu0 0
      %1233 = vmatprep.subr.bf16.mxu0 0
      %1234 = vmatpush1.bf16.xpose.msra.mxu0 0
      %1235 = vmatprep.subr.bf16.mxu0 0
      %1236 = vmatpush1.bf16.xpose.msra.mxu0 0
      %1237 = vmatprep.subr.bf16.mxu0 0
      %1238 = vmatpush1.bf16.xpose.msra.mxu0 %v1221
      %1239 = vmatprep.subr.bf16.mxu0 0
      %1240 = vmatpush2.bf16.xpose.msra.mxu0 0
      %1241 = vmatprep.subr.bf16.mxu0 0
      %1242 = vmatpush2.bf16.xpose.msra.mxu0 0
      %1243 = vmatprep.subr.bf16.mxu0 0
      %1244 = vmatpush2.bf16.xpose.msra.mxu0 0
      %1245 = vmatprep.subr.bf16.mxu0 0
      %1246 = vmatpush2.bf16.xpose.msra.mxu0 0
      %1247 = vmatprep.subr.bf16.mxu0 0
      %1248 = vmatpush2.bf16.xpose.msra.mxu0 0
      %1249 = vmatprep.subr.bf16.mxu0 0
      %1250 = vmatpush2.bf16.xpose.msra.mxu0 0
      %1251 = vmatprep.subr.bf16.mxu0 0
      %1252 = vmatpush2.bf16.xpose.msra.mxu0 0
      %1253 = vmatprep.subr.bf16.mxu0 0
      %1254 = vmatpush2.bf16.xpose.msra.mxu0 0
      %1255 = vmatprep.mubr.bf16.mxu0 0
      %1256 = vmatmul.mubr.bf16.gmra.mxu0 %v1218
      %v1257 = vpop.f32.mrf.mxu0
      %v1258 = vadd.f32 %v863, %v1257
      %v1259 = vpop.f32.mrf.mxu0
      %v1260 = vpop.f32.mrf.mxu0
      %v1261 = vpop.f32.mrf.mxu0
      %1262 = vdwg.mxu0
      %v1263 = vsel %vm928, %v1258, -inf
      %1264 = vmax.xlane.f32.xlu0 %v1263
      %v1265 = vpop.xlane.xlu0 %1264
      %v1266 = vsub.f32 %v1258, %v1265
      %v1267 = vmul.f32 %v1266, 1.442695
      %v1268 = vpow.pop %v1267
      %v1269 = vsel %vm928, %v1268, 0.0
      %1270 = vadd.xlane.f32.xlu0 %v1269
      %v1271 = vpop.xlane.xlu0 %1270
      %v1272 = vrcp.pop %v1271
      %v1273 = vmul.f32 %v1268, %v1272
      %v1274 = vpack.c.bf16 %v1273, %v1273
      %1275 = vrot.lane.b32.xlu0 %v857, 64
      %v1276 = vpop.permute.xlu0 %1275
      %v1278 = vsel %vm928, %v1274, 0
      %v1281 = vsel %vm944, %v1276, 0
      %1283 = vmatprep.subr.bf16.mxu0 0
      %1284 = vmatpush1.bf16.msra.mxu0 0
      %1285 = vmatprep.subr.bf16.mxu0 0
      %1286 = vmatpush1.bf16.msra.mxu0 0
      %1287 = vmatprep.subr.bf16.mxu0 0
      %1288 = vmatpush1.bf16.msra.mxu0 0
      %1289 = vmatprep.subr.bf16.mxu0 0
      %1290 = vmatpush1.bf16.msra.mxu0 0
      %1291 = vmatprep.subr.bf16.mxu0 0
      %1292 = vmatpush1.bf16.msra.mxu0 0
      %1293 = vmatprep.subr.bf16.mxu0 0
      %1294 = vmatpush1.bf16.msra.mxu0 0
      %1295 = vmatprep.subr.bf16.mxu0 0
      %1296 = vmatpush1.bf16.msra.mxu0 0
      %1297 = vmatprep.subr.bf16.mxu0 0
      %1298 = vmatpush1.bf16.msra.mxu0 %v1281
      %1299 = vmatprep.subr.bf16.mxu0 0
      %1300 = vmatpush2.bf16.msra.mxu0 0
      %1301 = vmatprep.subr.bf16.mxu0 0
      %1302 = vmatpush2.bf16.msra.mxu0 0
      %1303 = vmatprep.subr.bf16.mxu0 0
      %1304 = vmatpush2.bf16.msra.mxu0 0
      %1305 = vmatprep.subr.bf16.mxu0 0
      %1306 = vmatpush2.bf16.msra.mxu0 0
      %1307 = vmatprep.subr.bf16.mxu0 0
      %1308 = vmatpush2.bf16.msra.mxu0 0
      %1309 = vmatprep.subr.bf16.mxu0 0
      %1310 = vmatpush2.bf16.msra.mxu0 0
      %1311 = vmatprep.subr.bf16.mxu0 0
      %1312 = vmatpush2.bf16.msra.mxu0 0
      %1313 = vmatprep.subr.bf16.mxu0 0
      %1314 = vmatpush2.bf16.msra.mxu0 0
      %1315 = vmatprep.mubr.bf16.mxu0 0
      %1316 = vmatmul.mubr.bf16.gmra.mxu0 %v1278
      %v1317 = vpop.f32.mrf.mxu0
      %v1318 = vadd.f32 0.0, %v1317
      %v1319 = vpop.f32.mrf.mxu0
      %v1320 = vpop.f32.mrf.mxu0
      %v1321 = vpop.f32.mrf.mxu0
      %1322 = vdwg.mxu0
      %v1323 = vpack.c.bf16 %v1318, %v1318
      %v1328 = vunpack.c.l.b16 %v873
      %v1329 = vunpack.c.l.b16 %v874
      %v1330 = vunpack.c.l.b16 %v875
      %v1331 = vunpack.c.l.b16 %v876
      %v1332 = vpack.c.b16 %v1329, %v1328
      %v1333 = vpack.c.b16 %v1331, %v1330
      %v1337 = vsel %vm881, %v1323, 0
      %1339 = vmatprep.subr.bf16.mxu0 0
      %1340 = vmatpush1.bf16.msra.mxu0 0
      %1341 = vmatprep.subr.bf16.mxu0 0
      %1342 = vmatpush1.bf16.msra.mxu0 0
      %1343 = vmatprep.subr.bf16.mxu0 0
      %1344 = vmatpush1.bf16.msra.mxu0 0
      %1345 = vmatprep.subr.bf16.mxu0 0
      %1346 = vmatpush1.bf16.msra.mxu0 0
      %1347 = vmatprep.subr.bf16.mxu0 0
      %1348 = vmatpush1.bf16.msra.mxu0 0
      %1349 = vmatprep.subr.bf16.mxu0 0
      %1350 = vmatpush1.bf16.msra.mxu0 0
      %1351 = vmatprep.subr.bf16.mxu0 0
      %1352 = vmatpush1.bf16.msra.mxu0 %v1333
      %1353 = vmatprep.subr.bf16.mxu0 0
      %1354 = vmatpush1.bf16.msra.mxu0 %v1332
      %1355 = vmatprep.subr.bf16.mxu0 0
      %1356 = vmatpush2.bf16.msra.mxu0 0
      %1357 = vmatprep.subr.bf16.mxu0 0
      %1358 = vmatpush2.bf16.msra.mxu0 0
      %1359 = vmatprep.subr.bf16.mxu0 0
      %1360 = vmatpush2.bf16.msra.mxu0 0
      %1361 = vmatprep.subr.bf16.mxu0 0
      %1362 = vmatpush2.bf16.msra.mxu0 0
      %1363 = vmatprep.subr.bf16.mxu0 0
      %1364 = vmatpush2.bf16.msra.mxu0 0
      %1365 = vmatprep.subr.bf16.mxu0 0
      %1366 = vmatpush2.bf16.msra.mxu0 0
      %1367 = vmatprep.subr.bf16.mxu0 0
      %1368 = vmatpush2.bf16.msra.mxu0 0
      %1369 = vmatprep.subr.bf16.mxu0 0
      %1370 = vmatpush2.bf16.msra.mxu0 0
      %1371 = vmatprep.mubr.bf16.mxu0 0
      %1372 = vmatmul.mubr.bf16.gmra.mxu0 %v1337
      %v1373 = vpop.f32.mrf.mxu0
      %v1374 = vadd.f32 0.0, %v1373
      %v1375 = vpop.f32.mrf.mxu0
      %v1376 = vpop.f32.mrf.mxu0
      %v1377 = vpop.f32.mrf.mxu0
      %1378 = vdwg.mxu0
      %v1379 = vadd.f32 %v1208, %v1374
      %1380 = vrot.lane.b32.xlu0 %v855, 32
      %v1381 = vpop.permute.xlu0 %1380
      %1382 = vrot.lane.b32.xlu0 %v856, 32
      %v1383 = vpop.permute.xlu0 %1382
      %v1385 = vsel %vm881, %v1381, 0
      %v1388 = vsel %vm881, %v1383, 0
      %1390 = vmatprep.subr.bf16.mxu0 0
      %1391 = vmatpush1.bf16.xpose.msra.mxu0 0
      %1392 = vmatprep.subr.bf16.mxu0 0
      %1393 = vmatpush1.bf16.xpose.msra.mxu0 0
      %1394 = vmatprep.subr.bf16.mxu0 0
      %1395 = vmatpush1.bf16.xpose.msra.mxu0 0
      %1396 = vmatprep.subr.bf16.mxu0 0
      %1397 = vmatpush1.bf16.xpose.msra.mxu0 0
      %1398 = vmatprep.subr.bf16.mxu0 0
      %1399 = vmatpush1.bf16.xpose.msra.mxu0 0
      %1400 = vmatprep.subr.bf16.mxu0 0
      %1401 = vmatpush1.bf16.xpose.msra.mxu0 0
      %1402 = vmatprep.subr.bf16.mxu0 0
      %1403 = vmatpush1.bf16.xpose.msra.mxu0 0
      %1404 = vmatprep.subr.bf16.mxu0 0
      %1405 = vmatpush1.bf16.xpose.msra.mxu0 %v1388
      %1406 = vmatprep.subr.bf16.mxu0 0
      %1407 = vmatpush2.bf16.xpose.msra.mxu0 0
      %1408 = vmatprep.subr.bf16.mxu0 0
      %1409 = vmatpush2.bf16.xpose.msra.mxu0 0
      %1410 = vmatprep.subr.bf16.mxu0 0
      %1411 = vmatpush2.bf16.xpose.msra.mxu0 0
      %1412 = vmatprep.subr.bf16.mxu0 0
      %1413 = vmatpush2.bf16.xpose.msra.mxu0 0
      %1414 = vmatprep.subr.bf16.mxu0 0
      %1415 = vmatpush2.bf16.xpose.msra.mxu0 0
      %1416 = vmatprep.subr.bf16.mxu0 0
      %1417 = vmatpush2.bf16.xpose.msra.mxu0 0
      %1418 = vmatprep.subr.bf16.mxu0 0
      %1419 = vmatpush2.bf16.xpose.msra.mxu0 0
      %1420 = vmatprep.subr.bf16.mxu0 0
      %1421 = vmatpush2.bf16.xpose.msra.mxu0 0
      %1422 = vmatprep.mubr.bf16.mxu0 0
      %1423 = vmatmul.mubr.bf16.gmra.mxu0 %v1385
      %v1424 = vpop.f32.mrf.mxu0
      %v1425 = vadd.f32 %v863, %v1424
      %v1426 = vpop.f32.mrf.mxu0
      %v1427 = vpop.f32.mrf.mxu0
      %v1428 = vpop.f32.mrf.mxu0
      %1429 = vdwg.mxu0
      %v1430 = vsel %vm928, %v1425, -inf
      %1431 = vmax.xlane.f32.xlu0 %v1430
      %v1432 = vpop.xlane.xlu0 %1431
      %v1433 = vsub.f32 %v1425, %v1432
      %v1434 = vmul.f32 %v1433, 1.442695
      %v1435 = vpow.pop %v1434
      %v1436 = vsel %vm928, %v1435, 0.0
      %1437 = vadd.xlane.f32.xlu0 %v1436
      %v1438 = vpop.xlane.xlu0 %1437
      %v1439 = vrcp.pop %v1438
      %v1440 = vmul.f32 %v1435, %v1439
      %v1441 = vpack.c.bf16 %v1440, %v1440
      %1442 = vrot.lane.b32.xlu0 %v857, 32
      %v1443 = vpop.permute.xlu0 %1442
      %v1445 = vsel %vm928, %v1441, 0
      %v1448 = vsel %vm944, %v1443, 0
      %1450 = vmatprep.subr.bf16.mxu0 0
      %1451 = vmatpush1.bf16.msra.mxu0 0
      %1452 = vmatprep.subr.bf16.mxu0 0
      %1453 = vmatpush1.bf16.msra.mxu0 0
      %1454 = vmatprep.subr.bf16.mxu0 0
      %1455 = vmatpush1.bf16.msra.mxu0 0
      %1456 = vmatprep.subr.bf16.mxu0 0
      %1457 = vmatpush1.bf16.msra.mxu0 0
      %1458 = vmatprep.subr.bf16.mxu0 0
      %1459 = vmatpush1.bf16.msra.mxu0 0
      %1460 = vmatprep.subr.bf16.mxu0 0
      %1461 = vmatpush1.bf16.msra.mxu0 0
      %1462 = vmatprep.subr.bf16.mxu0 0
      %1463 = vmatpush1.bf16.msra.mxu0 0
      %1464 = vmatprep.subr.bf16.mxu0 0
      %1465 = vmatpush1.bf16.msra.mxu0 %v1448
      %1466 = vmatprep.subr.bf16.mxu0 0
      %1467 = vmatpush2.bf16.msra.mxu0 0
      %1468 = vmatprep.subr.bf16.mxu0 0
      %1469 = vmatpush2.bf16.msra.mxu0 0
      %1470 = vmatprep.subr.bf16.mxu0 0
      %1471 = vmatpush2.bf16.msra.mxu0 0
      %1472 = vmatprep.subr.bf16.mxu0 0
      %1473 = vmatpush2.bf16.msra.mxu0 0
      %1474 = vmatprep.subr.bf16.mxu0 0
      %1475 = vmatpush2.bf16.msra.mxu0 0
      %1476 = vmatprep.subr.bf16.mxu0 0
      %1477 = vmatpush2.bf16.msra.mxu0 0
      %1478 = vmatprep.subr.bf16.mxu0 0
      %1479 = vmatpush2.bf16.msra.mxu0 0
      %1480 = vmatprep.subr.bf16.mxu0 0
      %1481 = vmatpush2.bf16.msra.mxu0 0
      %1482 = vmatprep.mubr.bf16.mxu0 0
      %1483 = vmatmul.mubr.bf16.gmra.mxu0 %v1445
      %v1484 = vpop.f32.mrf.mxu0
      %v1485 = vadd.f32 0.0, %v1484
      %v1486 = vpop.f32.mrf.mxu0
      %v1487 = vpop.f32.mrf.mxu0
      %v1488 = vpop.f32.mrf.mxu0
      %1489 = vdwg.mxu0
      %v1490 = vpack.c.bf16 %v1485, %v1485
      %v1495 = vunpack.c.l.b16 %v877
      %v1496 = vunpack.c.l.b16 %v878
      %v1497 = vunpack.c.l.b16 %v879
      %v1498 = vunpack.c.l.b16 %v880
      %v1499 = vpack.c.b16 %v1496, %v1495
      %v1500 = vpack.c.b16 %v1498, %v1497
      %v1504 = vsel %vm881, %v1490, 0
      %1506 = vmatprep.subr.bf16.mxu0 0
      %1507 = vmatpush1.bf16.msra.mxu0 0
      %1508 = vmatprep.subr.bf16.mxu0 0
      %1509 = vmatpush1.bf16.msra.mxu0 0
      %1510 = vmatprep.subr.bf16.mxu0 0
      %1511 = vmatpush1.bf16.msra.mxu0 0
      %1512 = vmatprep.subr.bf16.mxu0 0
      %1513 = vmatpush1.bf16.msra.mxu0 0
      %1514 = vmatprep.subr.bf16.mxu0 0
      %1515 = vmatpush1.bf16.msra.mxu0 0
      %1516 = vmatprep.subr.bf16.mxu0 0
      %1517 = vmatpush1.bf16.msra.mxu0 0
      %1518 = vmatprep.subr.bf16.mxu0 0
      %1519 = vmatpush1.bf16.msra.mxu0 %v1500
      %1520 = vmatprep.subr.bf16.mxu0 0
      %1521 = vmatpush1.bf16.msra.mxu0 %v1499
      %1522 = vmatprep.subr.bf16.mxu0 0
      %1523 = vmatpush2.bf16.msra.mxu0 0
      %1524 = vmatprep.subr.bf16.mxu0 0
      %1525 = vmatpush2.bf16.msra.mxu0 0
      %1526 = vmatprep.subr.bf16.mxu0 0
      %1527 = vmatpush2.bf16.msra.mxu0 0
      %1528 = vmatprep.subr.bf16.mxu0 0
      %1529 = vmatpush2.bf16.msra.mxu0 0
      %1530 = vmatprep.subr.bf16.mxu0 0
      %1531 = vmatpush2.bf16.msra.mxu0 0
      %1532 = vmatprep.subr.bf16.mxu0 0
      %1533 = vmatpush2.bf16.msra.mxu0 0
      %1534 = vmatprep.subr.bf16.mxu0 0
      %1535 = vmatpush2.bf16.msra.mxu0 0
      %1536 = vmatprep.subr.bf16.mxu0 0
      %1537 = vmatpush2.bf16.msra.mxu0 0
      %1538 = vmatprep.mubr.bf16.mxu0 0
      %1539 = vmatmul.mubr.bf16.gmra.mxu0 %v1504
      %v1540 = vpop.f32.mrf.mxu0
      %v1541 = vadd.f32 0.0, %v1540
      %v1542 = vpop.f32.mrf.mxu0
      %v1543 = vpop.f32.mrf.mxu0
      %v1544 = vpop.f32.mrf.mxu0
      %1545 = vdwg.mxu0
      %v1546 = vadd.f32 %v1379, %v1541
      %v1547 = vadd.f32 %v562, %v1546
      %v1548 = vld [vmem:[%s10] sm:$0x1]
      %v1550 = vlaneseq
      %v1551 = vshrl.u32 %v1550, 7
      %v1552 = vsub.s32 0, %v1551
      %v1553 = vrot.slane %v1548, %v1552
      %v1555 = vadd.f32 %v1547, %v1553
      %1556 = vadd.xlane.f32.xlu0 %v1555
      %v1557 = vpop.xlane.xlu0 %1556
      %v1558 = vmul.f32 %v1557, %v566
      %v1559 = vsub.f32 %v1555, %v1558
      %v1560 = vmul.f32 %v1559, %v1559
      %1561 = vadd.xlane.f32.xlu0 %v1560
      %v1562 = vpop.xlane.xlu0 %1561
      %v1563 = vmul.f32 %v1562, %v566
      %v1564 = vadd.f32 %v1563, 1e-06
      %v1565 = vrsqrt.pop %v1564
      %v1566 = vmul.f32 %v1559, %v1565
      %v1567 = vld [vmem:[%s11] sm:$0x1]
      %v1569 = vlaneseq
      %v1570 = vshrl.u32 %v1569, 7
      %v1571 = vsub.s32 0, %v1570
      %v1572 = vrot.slane %v1567, %v1571
      %v1574 = vmul.f32 %v1566, %v1572
      %v1575 = vld [vmem:[%s12] sm:$0x1]
      %v1577 = vlaneseq
      %v1578 = vshrl.u32 %v1577, 7
      %v1579 = vsub.s32 0, %v1578
      %v1580 = vrot.slane %v1575, %v1579
      %v1582 = vadd.f32 %v1574, %v1580
      %v1583 = vpack.c.bf16 %v1582, %v1582
      %v1584 = vld [vmem:[%s13] sm:$0xff]
      %v1585 = vld [vmem:[%s13 + $0x8] sm:$0xff]
      %v1586 = vld [vmem:[%s13 + $0x10] sm:$0xff]
      %v1587 = vld [vmem:[%s13 + $0x18] sm:$0xff]
      %v1588 = vld [vmem:[%s13 + $0x20] sm:$0xff]
      %v1589 = vld [vmem:[%s13 + $0x28] sm:$0xff]
      %v1590 = vld [vmem:[%s13 + $0x30] sm:$0xff]
      %v1591 = vld [vmem:[%s13 + $0x38] sm:$0xff]
      %v1592 = vld [vmem:[%s13 + $0x40] sm:$0xff]
      %v1593 = vld [vmem:[%s13 + $0x48] sm:$0xff]
      %v1594 = vld [vmem:[%s13 + $0x50] sm:$0xff]
      %v1595 = vld [vmem:[%s13 + $0x58] sm:$0xff]
      %v1596 = vld [vmem:[%s13 + $0x60] sm:$0xff]
      %v1597 = vld [vmem:[%s13 + $0x68] sm:$0xff]
      %v1598 = vld [vmem:[%s13 + $0x70] sm:$0xff]
      %v1599 = vld [vmem:[%s13 + $0x78] sm:$0xff]
      %v1600 = vld [vmem:[%s14] sm:$0x3]
      %v1602 = vlaneseq
      %v1603 = vshrl.u32 %v1602, 7
      %v1604 = vsub.s32 0, %v1603
      %v1605 = vrot.slane %v1600, %v1604
      %v1606 = vlaneseq
      %v1607 = vshrl.u32 %v1606, 7
      %v1608 = vsub.s32 1, %v1607
      %v1609 = vrot.slane %v1600, %v1608
      %v1628 = vunpack.c.l.b16 %v1584
      %v1629 = vunpack.c.h.b16 %v1584
      %v1630 = vunpack.c.l.b16 %v1585
      %v1631 = vunpack.c.h.b16 %v1585
      %v1632 = vunpack.c.l.b16 %v1586
      %v1633 = vunpack.c.h.b16 %v1586
      %v1634 = vunpack.c.l.b16 %v1587
      %v1635 = vunpack.c.h.b16 %v1587
      %v1636 = vunpack.c.l.b16 %v1588
      %v1637 = vunpack.c.h.b16 %v1588
      %v1638 = vunpack.c.l.b16 %v1589
      %v1639 = vunpack.c.h.b16 %v1589
      %v1640 = vunpack.c.l.b16 %v1590
      %v1641 = vunpack.c.h.b16 %v1590
      %v1642 = vunpack.c.l.b16 %v1591
      %v1643 = vunpack.c.h.b16 %v1591
      %v1644 = vunpack.c.l.b16 %v1592
      %v1645 = vunpack.c.h.b16 %v1592
      %v1646 = vunpack.c.l.b16 %v1593
      %v1647 = vunpack.c.h.b16 %v1593
      %v1648 = vunpack.c.l.b16 %v1594
      %v1649 = vunpack.c.h.b16 %v1594
      %v1650 = vunpack.c.l.b16 %v1595
      %v1651 = vunpack.c.h.b16 %v1595
      %v1652 = vunpack.c.l.b16 %v1596
      %v1653 = vunpack.c.h.b16 %v1596
      %v1654 = vunpack.c.l.b16 %v1597
      %v1655 = vunpack.c.h.b16 %v1597
      %v1656 = vunpack.c.l.b16 %v1598
      %v1657 = vunpack.c.h.b16 %v1598
      %v1658 = vunpack.c.l.b16 %v1599
      %v1659 = vunpack.c.h.b16 %v1599
      %v1660 = vpack.c.b16 %v1630, %v1628
      %v1661 = vpack.c.b16 %v1631, %v1629
      %v1662 = vpack.c.b16 %v1634, %v1632
      %v1663 = vpack.c.b16 %v1635, %v1633
      %v1664 = vpack.c.b16 %v1638, %v1636
      %v1665 = vpack.c.b16 %v1639, %v1637
      %v1666 = vpack.c.b16 %v1642, %v1640
      %v1667 = vpack.c.b16 %v1643, %v1641
      %v1668 = vpack.c.b16 %v1646, %v1644
      %v1669 = vpack.c.b16 %v1647, %v1645
      %v1670 = vpack.c.b16 %v1650, %v1648
      %v1671 = vpack.c.b16 %v1651, %v1649
      %v1672 = vpack.c.b16 %v1654, %v1652
      %v1673 = vpack.c.b16 %v1655, %v1653
      %v1674 = vpack.c.b16 %v1658, %v1656
      %v1675 = vpack.c.b16 %v1659, %v1657
      %1692 = vmatprep.subr.bf16.mxu0 %v1675
      %1693 = vmatpush1.bf16.msra.mxu0 %v1674
      %1694 = vmatprep.subr.bf16.mxu0 %v1673
      %1695 = vmatpush1.bf16.msra.mxu0 %v1672
      %1696 = vmatprep.subr.bf16.mxu0 %v1671
      %1697 = vmatpush1.bf16.msra.mxu0 %v1670
      %1698 = vmatprep.subr.bf16.mxu0 %v1669
      %1699 = vmatpush1.bf16.msra.mxu0 %v1668
      %1700 = vmatprep.subr.bf16.mxu0 %v1667
      %1701 = vmatpush1.bf16.msra.mxu0 %v1666
      %1702 = vmatprep.subr.bf16.mxu0 %v1665
      %1703 = vmatpush1.bf16.msra.mxu0 %v1664
      %1704 = vmatprep.subr.bf16.mxu0 %v1663
      %1705 = vmatpush1.bf16.msra.mxu0 %v1662
      %1706 = vmatprep.subr.bf16.mxu0 %v1661
      %1707 = vmatpush1.bf16.msra.mxu0 %v1660
      %1708 = vmatprep.subr.bf16.mxu0 0
      %1709 = vmatpush2.bf16.msra.mxu0 0
      %1710 = vmatprep.subr.bf16.mxu0 0
      %1711 = vmatpush2.bf16.msra.mxu0 0
      %1712 = vmatprep.subr.bf16.mxu0 0
      %1713 = vmatpush2.bf16.msra.mxu0 0
      %1714 = vmatprep.subr.bf16.mxu0 0
      %1715 = vmatpush2.bf16.msra.mxu0 0
      %1716 = vmatprep.subr.bf16.mxu0 0
      %1717 = vmatpush2.bf16.msra.mxu0 0
      %1718 = vmatprep.subr.bf16.mxu0 0
      %1719 = vmatpush2.bf16.msra.mxu0 0
      %1720 = vmatprep.subr.bf16.mxu0 0
      %1721 = vmatpush2.bf16.msra.mxu0 0
      %1722 = vmatprep.subr.bf16.mxu0 0
      %1723 = vmatpush2.bf16.msra.mxu0 0
      %1724 = vmatprep.mubr.bf16.mxu0 0
      %1725 = vmatmul.mubr.bf16.gmra.mxu0 %v1583
      %v1726 = vpop.f32.mrf.mxu0
      %v1727 = vadd.f32 %v1605, %v1726
      %v1728 = vpop.f32.mrf.mxu0
      %v1729 = vadd.f32 %v1609, %v1728
      %v1730 = vpop.f32.mrf.mxu0
      %v1731 = vpop.f32.mrf.mxu0
      %1732 = vdwg.mxu0
      %v1733 = vmax.f32 %v1727, 0.0
      %v1734 = vmax.f32 %v1729, 0.0
      %v1735 = vpack.c.bf16 %v1733, %v1733
      %v1736 = vpack.c.bf16 %v1734, %v1734
      %v1737 = vld [vmem:[%s15] sm:$0xf]
      %v1738 = vld [vmem:[%s15 + $0x4] sm:$0xf]
      %v1739 = vld [vmem:[%s15 + $0x8] sm:$0xf]
      %v1740 = vld [vmem:[%s15 + $0xc] sm:$0xf]
      %v1741 = vld [vmem:[%s15 + $0x10] sm:$0xf]
      %v1742 = vld [vmem:[%s15 + $0x14] sm:$0xf]
      %v1743 = vld [vmem:[%s15 + $0x18] sm:$0xf]
      %v1744 = vld [vmem:[%s15 + $0x1c] sm:$0xf]
      %v1745 = vld [vmem:[%s15 + $0x20] sm:$0xf]
      %v1746 = vld [vmem:[%s15 + $0x24] sm:$0xf]
      %v1747 = vld [vmem:[%s15 + $0x28] sm:$0xf]
      %v1748 = vld [vmem:[%s15 + $0x2c] sm:$0xf]
      %v1749 = vld [vmem:[%s15 + $0x30] sm:$0xf]
      %v1750 = vld [vmem:[%s15 + $0x34] sm:$0xf]
      %v1751 = vld [vmem:[%s15 + $0x38] sm:$0xf]
      %v1752 = vld [vmem:[%s15 + $0x3c] sm:$0xf]
      %v1753 = vld [vmem:[%s15 + $0x40] sm:$0xf]
      %v1754 = vld [vmem:[%s15 + $0x44] sm:$0xf]
      %v1755 = vld [vmem:[%s15 + $0x48] sm:$0xf]
      %v1756 = vld [vmem:[%s15 + $0x4c] sm:$0xf]
      %v1757 = vld [vmem:[%s15 + $0x50] sm:$0xf]
      %v1758 = vld [vmem:[%s15 + $0x54] sm:$0xf]
      %v1759 = vld [vmem:[%s15 + $0x58] sm:$0xf]
      %v1760 = vld [vmem:[%s15 + $0x5c] sm:$0xf]
      %v1761 = vld [vmem:[%s15 + $0x60] sm:$0xf]
      %v1762 = vld [vmem:[%s15 + $0x64] sm:$0xf]
      %v1763 = vld [vmem:[%s15 + $0x68] sm:$0xf]
      %v1764 = vld [vmem:[%s15 + $0x6c] sm:$0xf]
      %v1765 = vld [vmem:[%s15 + $0x70] sm:$0xf]
      %v1766 = vld [vmem:[%s15 + $0x74] sm:$0xf]
      %v1767 = vld [vmem:[%s15 + $0x78] sm:$0xf]
      %v1768 = vld [vmem:[%s15 + $0x7c] sm:$0xf]
      %v1801 = vunpack.c.l.b16 %v1737
      %v1802 = vunpack.c.l.b16 %v1738
      %v1803 = vunpack.c.l.b16 %v1739
      %v1804 = vunpack.c.l.b16 %v1740
      %v1805 = vunpack.c.l.b16 %v1741
      %v1806 = vunpack.c.l.b16 %v1742
      %v1807 = vunpack.c.l.b16 %v1743
      %v1808 = vunpack.c.l.b16 %v1744
      %v1809 = vunpack.c.l.b16 %v1745
      %v1810 = vunpack.c.l.b16 %v1746
      %v1811 = vunpack.c.l.b16 %v1747
      %v1812 = vunpack.c.l.b16 %v1748
      %v1813 = vunpack.c.l.b16 %v1749
      %v1814 = vunpack.c.l.b16 %v1750
      %v1815 = vunpack.c.l.b16 %v1751
      %v1816 = vunpack.c.l.b16 %v1752
      %v1817 = vunpack.c.l.b16 %v1753
      %v1818 = vunpack.c.l.b16 %v1754
      %v1819 = vunpack.c.l.b16 %v1755
      %v1820 = vunpack.c.l.b16 %v1756
      %v1821 = vunpack.c.l.b16 %v1757
      %v1822 = vunpack.c.l.b16 %v1758
      %v1823 = vunpack.c.l.b16 %v1759
      %v1824 = vunpack.c.l.b16 %v1760
      %v1825 = vunpack.c.l.b16 %v1761
      %v1826 = vunpack.c.l.b16 %v1762
      %v1827 = vunpack.c.l.b16 %v1763
      %v1828 = vunpack.c.l.b16 %v1764
      %v1829 = vunpack.c.l.b16 %v1765
      %v1830 = vunpack.c.l.b16 %v1766
      %v1831 = vunpack.c.l.b16 %v1767
      %v1832 = vunpack.c.l.b16 %v1768
      %v1833 = vpack.c.b16 %v1802, %v1801
      %v1834 = vpack.c.b16 %v1804, %v1803
      %v1835 = vpack.c.b16 %v1806, %v1805
      %v1836 = vpack.c.b16 %v1808, %v1807
      %v1837 = vpack.c.b16 %v1810, %v1809
      %v1838 = vpack.c.b16 %v1812, %v1811
      %v1839 = vpack.c.b16 %v1814, %v1813
      %v1840 = vpack.c.b16 %v1816, %v1815
      %v1841 = vpack.c.b16 %v1818, %v1817
      %v1842 = vpack.c.b16 %v1820, %v1819
      %v1843 = vpack.c.b16 %v1822, %v1821
      %v1844 = vpack.c.b16 %v1824, %v1823
      %v1845 = vpack.c.b16 %v1826, %v1825
      %v1846 = vpack.c.b16 %v1828, %v1827
      %v1847 = vpack.c.b16 %v1830, %v1829
      %v1848 = vpack.c.b16 %v1832, %v1831
      %1865 = vmatprep.subr.bf16.mxu0 0
      %1866 = vmatpush1.bf16.msra.mxu0 %v1840
      %1867 = vmatprep.subr.bf16.mxu0 0
      %1868 = vmatpush1.bf16.msra.mxu0 %v1839
      %1869 = vmatprep.subr.bf16.mxu0 0
      %1870 = vmatpush1.bf16.msra.mxu0 %v1838
      %1871 = vmatprep.subr.bf16.mxu0 0
      %1872 = vmatpush1.bf16.msra.mxu0 %v1837
      %1873 = vmatprep.subr.bf16.mxu0 0
      %1874 = vmatpush1.bf16.msra.mxu0 %v1836
      %1875 = vmatprep.subr.bf16.mxu0 0
      %1876 = vmatpush1.bf16.msra.mxu0 %v1835
      %1877 = vmatprep.subr.bf16.mxu0 0
      %1878 = vmatpush1.bf16.msra.mxu0 %v1834
      %1879 = vmatprep.subr.bf16.mxu0 0
      %1880 = vmatpush1.bf16.msra.mxu0 %v1833
      %1881 = vmatprep.subr.bf16.mxu0 0
      %1882 = vmatpush2.bf16.msra.mxu0 %v1848
      %1883 = vmatprep.subr.bf16.mxu0 0
      %1884 = vmatpush2.bf16.msra.mxu0 %v1847
      %1885 = vmatprep.subr.bf16.mxu0 0
      %1886 = vmatpush2.bf16.msra.mxu0 %v1846
      %1887 = vmatprep.subr.bf16.mxu0 0
      %1888 = vmatpush2.bf16.msra.mxu0 %v1845
      %1889 = vmatprep.subr.bf16.mxu0 0
      %1890 = vmatpush2.bf16.msra.mxu0 %v1844
      %1891 = vmatprep.subr.bf16.mxu0 0
      %1892 = vmatpush2.bf16.msra.mxu0 %v1843
      %1893 = vmatprep.subr.bf16.mxu0 0
      %1894 = vmatpush2.bf16.msra.mxu0 %v1842
      %1895 = vmatprep.subr.bf16.mxu0 0
      %1896 = vmatpush2.bf16.msra.mxu0 %v1841
      %1897 = vmatprep.mubr.bf16.mxu0 %v1736
      %1898 = vmatmul.mubr.bf16.gmra.mxu0 %v1735
      %v1899 = vpop.f32.mrf.mxu0
      %v1900 = vadd.f32 0.0, %v1899
      %v1901 = vpop.f32.mrf.mxu0
      %v1902 = vpop.f32.mrf.mxu0
      %v1903 = vpop.f32.mrf.mxu0
      %1904 = vdwg.mxu0
      %v1905 = vadd.f32 %v1555, %v1900
      %v1906 = vld [vmem:[%s16] sm:$0x1]
      %v1908 = vlaneseq
      %v1909 = vshrl.u32 %v1908, 7
      %v1910 = vsub.s32 0, %v1909
      %v1911 = vrot.slane %v1906, %v1910
      %v1913 = vadd.f32 %v1905, %v1911
      %1914 = vst [vmem:[%s560] sm:$0xff] %v1913
      %p1915 = scmp.lt.s32.totalorder %s28, 1
      %s1916 = scalar_select %p1915, %s28, 1
      %s1917 = smul.addr %s1916, 8
      %s1918 = scalar_lea.vmem %s17, %s1917
      // Predicated region
      $region89: #{kgmodel_vwmha_forward.11} parent=87 // pred_check
        %p1919 = pneg %p413
      $region90: #{kgmodel_vwmha_forward.11} parent=87 // pred_check_branch
        %1921 = sbr.rel (%p1919) target = $region92
      $region91: #{kgmodel_vwmha_forward.11} parent=87 // pred_region
        _
      $region92: #{kgmodel_vwmha_forward.11} parent=87 // pred_fallthru
        _
    $region88: #{kgmodel_vwmha_forward.11} parent=5 // pred_fallthru
      _
    %p1922 = scmp.le.s32.totalorder 2, %s23
    // Predicated region
    $region93: #{kgmodel_vwmha_forward.11} parent=5 // pred_check
      %p1923 = pneg %p1922
    $region94: #{kgmodel_vwmha_forward.11} parent=5 // pred_check_branch
      %1925 = sbr.rel (%p1923) target = $region96
    $region95: #{kgmodel_vwmha_forward.11} parent=5 // pred_region
      %s1926 = ssub.s32 %s23, 2
      // Predicated region
      $region97: #{kgmodel_vwmha_forward.11} parent=95 // pred_check
        %p1927 = pneg %p419
      $region98: #{kgmodel_vwmha_forward.11} parent=95 // pred_check_branch
        %1929 = sbr.rel (%p1927) target = $region100
      $region99: #{kgmodel_vwmha_forward.11} parent=95 // pred_region
        %p1930 = scmp.lt.s32.totalorder %s29, 1
        %s1931 = scalar_select %p1930, %s29, 1
        %s1932 = smul.addr %s1931, 8
        %s1933 = scalar_lea.vmem %s17, %s1932
      $region100: #{kgmodel_vwmha_forward.11} parent=95 // pred_fallthru
        _
    $region96: #{kgmodel_vwmha_forward.11} parent=5 // pred_fallthru
      _
  $region6: #{kgmodel_vwmha_forward.11} parent=0 // loop_footer
    %s27 = sadd.s32 1, %s23
  $region7: #{kgmodel_vwmha_forward.11} parent=0 // loop_footer_branch
    %22 = sbr.rel target = $region3
  $region8: #{kgmodel_vwmha_forward.11} parent=0 // loop_exit
    _

// kernel: kgmodel_vwmha_forward.9
$region0: #{kgmodel_vwmha_forward.9}
  #allocation0 [shape = 'u32[]', space=smem, size = 0x4, offset = 0x4, fixed_abs, tag = 'smem constant byte address 0x4 - core index']
  #allocation1 [shape = 'u32[144,128]{1,0:T(1,128)}', space=vmem, size = 0x12000, scoped, tag = 'internal scratch']
  %s0 = inlined_call_operand.vmem [shape: f32[2,2,128], index: 0, kind: input, shape index: {}]
  %s1 = inlined_call_operand.vmem [shape: f32[1,16,128], index: 1, kind: input, shape index: {}]
  %s2 = inlined_call_operand.vmem [shape: f32[1,16], index: 2, kind: input, shape index: {}]
  %s3 = inlined_call_operand.vmem [shape: f32[1,128], index: 3, kind: input, shape index: {}]
  %s4 = inlined_call_operand.vmem [shape: f32[1,128], index: 4, kind: input, shape index: {}]
  %s5 = inlined_call_operand.vmem [shape: bf16[128,128], index: 5, kind: input, shape index: {}]
  %s6 = inlined_call_operand.vmem [shape: f32[1,128], index: 6, kind: input, shape index: {}]
  %s7 = inlined_call_operand.vmem [shape: bf16[128,256], index: 7, kind: input, shape index: {}]
  %s8 = inlined_call_operand.vmem [shape: f32[1,256], index: 8, kind: input, shape index: {}]
  %s9 = inlined_call_operand.vmem [shape: bf16[128,128], index: 9, kind: input, shape index: {}]
  %s10 = inlined_call_operand.vmem [shape: f32[1,128], index: 10, kind: input, shape index: {}]
  %s11 = inlined_call_operand.vmem [shape: f32[1,128], index: 11, kind: input, shape index: {}]
  %s12 = inlined_call_operand.vmem [shape: f32[1,128], index: 12, kind: input, shape index: {}]
  %s13 = inlined_call_operand.vmem [shape: bf16[128,256], index: 13, kind: input, shape index: {}]
  %s14 = inlined_call_operand.vmem [shape: f32[1,256], index: 14, kind: input, shape index: {}]
  %s15 = inlined_call_operand.vmem [shape: bf16[256,128], index: 15, kind: input, shape index: {}]
  %s16 = inlined_call_operand.vmem [shape: f32[1,128], index: 16, kind: input, shape index: {}]
  %s17 = inlined_call_operand.vmem [shape: f32[2,2,128], index: 17, kind: output, shape index: {}]
  %s18 = sld [smem:[#allocation0]]
  $region101: #{kgmodel_vwmha_forward.9} parent=0
    _
  %s20 = ssub.s32 1, %s18
  %s21 = scalar_select 0, %s20, %s18
  loop: start=0, step=1, limit=4
  $region2: #{kgmodel_vwmha_forward.9} parent=0 // loop_pre_header
    _
  $region3: #{kgmodel_vwmha_forward.9} parent=0 // loop_header
    %s23 = sphi 0, %s27
    %p24 = scmp.ge.s32.totalorder %s23, 4
    %s33 = sphi 0, %s35
    %s36 = sphi 0, %s33
    %s37 = sphi 0, %s36
    %s53 = sphi 0, %s37
    %s57 = sphi 0, %s57
    %s59 = sphi 0, %s57
    %s60 = sphi 0, %s59
    %s74 = sphi 0, %s60
    %s78 = sphi 0, %s78
    %s80 = sphi 0, %s78
    %s81 = sphi 0, %s80
    %s95 = sphi 0, %s81
    %s99 = sphi 0, %s99
    %s101 = sphi 0, %s99
    %s102 = sphi 0, %s101
    %s116 = sphi 0, %s102
    %s120 = sphi 0, %s120
    %s122 = sphi 0, %s120
    %s123 = sphi 0, %s122
    %s137 = sphi 0, %s123
    %s141 = sphi 0, %s141
    %s143 = sphi 0, %s141
    %s144 = sphi 0, %s143
    %s158 = sphi 0, %s144
    %s162 = sphi 0, %s162
    %s164 = sphi 0, %s162
    %s165 = sphi 0, %s164
    %s179 = sphi 0, %s165
    %s183 = sphi 0, %s183
    %s185 = sphi 0, %s183
    %s186 = sphi 0, %s185
    %s200 = sphi 0, %s186
    %s204 = sphi 0, %s204
    %s206 = sphi 0, %s204
    %s207 = sphi 0, %s206
    %s221 = sphi 0, %s207
    %s225 = sphi 0, %s225
    %s227 = sphi 0, %s225
    %s228 = sphi 0, %s227
    %s242 = sphi 0, %s228
    %s246 = sphi 0, %s246
    %s248 = sphi 0, %s246
    %s249 = sphi 0, %s248
    %s263 = sphi 0, %s249
    %s267 = sphi 0, %s267
    %s269 = sphi 0, %s267
    %s270 = sphi 0, %s269
    %s284 = sphi 0, %s270
    %s288 = sphi 0, %s288
    %s290 = sphi 0, %s288
    %s291 = sphi 0, %s290
    %s305 = sphi 0, %s291
    %s309 = sphi 0, %s309
    %s311 = sphi 0, %s309
    %s312 = sphi 0, %s311
    %s326 = sphi 0, %s312
    %s330 = sphi 0, %s330
    %s332 = sphi 0, %s330
    %s333 = sphi 0, %s332
    %s347 = sphi 0, %s333
    %s351 = sphi 0, %s351
    %s353 = sphi 0, %s351
    %s354 = sphi 0, %s353
    %s368 = sphi 0, %s354
    %s372 = sphi 0, %s372
    %s374 = sphi 0, %s372
    %s375 = sphi 0, %s374
    %s389 = sphi 0, %s375
    %s395 = sphi 0, %s397
    %s398 = sphi 0, %s395
    %s399 = sphi 0, %s398
    %s415 = sphi 0, %s399
  $region4: #{kgmodel_vwmha_forward.9} parent=0 // loop_header_branch
    %26 = sbr.rel (%p24) target = $region8
  $region5: #{kgmodel_vwmha_forward.9} parent=0 // loop_body
    %s28 = ssub.s32 %s23, 1
    %s29 = ssub.s32 %s23, 2
    %s30 = sadd.s32 %s23, 1
    %s31 = ssub.s32 %s23, %s30
    %p32 = scmp.eq.s32.totalorder %s31, 0
    %s34 = sadd.s32 %s33, 1
    %s35 = scalar_select %p32, %s33, %s34
    %p38 = pneg %p32
    %p39 = scmp.eq.s32.totalorder %s23, 1
    %p40 = por %p38, %p39
    %p41 = scmp.ne.s32.totalorder %s33, %s36
    %p42 = scmp.eq.s32.totalorder %s23, 0
    %p43 = por %p41, %p42
    %p44 = scmp.ne.s32.totalorder %s33, %s36
    %p45 = scmp.eq.s32.totalorder %s28, 1
    %p46 = por %p44, %p45
    %p47 = scmp.ne.s32.totalorder %s36, %s37
    %p48 = scmp.eq.s32.totalorder %s28, 0
    %p49 = por %p47, %p48
    %p50 = scmp.ne.s32.totalorder %s36, %s37
    %p51 = scmp.eq.s32.totalorder %s29, 1
    %p52 = por %p50, %p51
    %p54 = scmp.ne.s32.totalorder %s37, %s53
    %p55 = scmp.eq.s32.totalorder %s29, 0
    %p56 = por %p54, %p55
    %s58 = sadd.s32 %s57, 1
    %p61 = scmp.eq.s32.totalorder %s23, 1
    %p62 = scmp.ne.s32.totalorder %s57, %s59
    %p63 = scmp.eq.s32.totalorder %s23, 0
    %p64 = por %p62, %p63
    %p65 = scmp.ne.s32.totalorder %s57, %s59
    %p66 = scmp.eq.s32.totalorder %s28, 1
    %p67 = por %p65, %p66
    %p68 = scmp.ne.s32.totalorder %s59, %s60
    %p69 = scmp.eq.s32.totalorder %s28, 0
    %p70 = por %p68, %p69
    %p71 = scmp.ne.s32.totalorder %s59, %s60
    %p72 = scmp.eq.s32.totalorder %s29, 1
    %p73 = por %p71, %p72
    %p75 = scmp.ne.s32.totalorder %s60, %s74
    %p76 = scmp.eq.s32.totalorder %s29, 0
    %p77 = por %p75, %p76
    %s79 = sadd.s32 %s78, 1
    %p82 = scmp.eq.s32.totalorder %s23, 1
    %p83 = scmp.ne.s32.totalorder %s78, %s80
    %p84 = scmp.eq.s32.totalorder %s23, 0
    %p85 = por %p83, %p84
    %p86 = scmp.ne.s32.totalorder %s78, %s80
    %p87 = scmp.eq.s32.totalorder %s28, 1
    %p88 = por %p86, %p87
    %p89 = scmp.ne.s32.totalorder %s80, %s81
    %p90 = scmp.eq.s32.totalorder %s28, 0
    %p91 = por %p89, %p90
    %p92 = scmp.ne.s32.totalorder %s80, %s81
    %p93 = scmp.eq.s32.totalorder %s29, 1
    %p94 = por %p92, %p93
    %p96 = scmp.ne.s32.totalorder %s81, %s95
    %p97 = scmp.eq.s32.totalorder %s29, 0
    %p98 = por %p96, %p97
    %s100 = sadd.s32 %s99, 1
    %p103 = scmp.eq.s32.totalorder %s23, 1
    %p104 = scmp.ne.s32.totalorder %s99, %s101
    %p105 = scmp.eq.s32.totalorder %s23, 0
    %p106 = por %p104, %p105
    %p107 = scmp.ne.s32.totalorder %s99, %s101
    %p108 = scmp.eq.s32.totalorder %s28, 1
    %p109 = por %p107, %p108
    %p110 = scmp.ne.s32.totalorder %s101, %s102
    %p111 = scmp.eq.s32.totalorder %s28, 0
    %p112 = por %p110, %p111
    %p113 = scmp.ne.s32.totalorder %s101, %s102
    %p114 = scmp.eq.s32.totalorder %s29, 1
    %p115 = por %p113, %p114
    %p117 = scmp.ne.s32.totalorder %s102, %s116
    %p118 = scmp.eq.s32.totalorder %s29, 0
    %p119 = por %p117, %p118
    %s121 = sadd.s32 %s120, 1
    %p124 = scmp.eq.s32.totalorder %s23, 1
    %p125 = scmp.ne.s32.totalorder %s120, %s122
    %p126 = scmp.eq.s32.totalorder %s23, 0
    %p127 = por %p125, %p126
    %p128 = scmp.ne.s32.totalorder %s120, %s122
    %p129 = scmp.eq.s32.totalorder %s28, 1
    %p130 = por %p128, %p129
    %p131 = scmp.ne.s32.totalorder %s122, %s123
    %p132 = scmp.eq.s32.totalorder %s28, 0
    %p133 = por %p131, %p132
    %p134 = scmp.ne.s32.totalorder %s122, %s123
    %p135 = scmp.eq.s32.totalorder %s29, 1
    %p136 = por %p134, %p135
    %p138 = scmp.ne.s32.totalorder %s123, %s137
    %p139 = scmp.eq.s32.totalorder %s29, 0
    %p140 = por %p138, %p139
    %s142 = sadd.s32 %s141, 1
    %p145 = scmp.eq.s32.totalorder %s23, 1
    %p146 = scmp.ne.s32.totalorder %s141, %s143
    %p147 = scmp.eq.s32.totalorder %s23, 0
    %p148 = por %p146, %p147
    %p149 = scmp.ne.s32.totalorder %s141, %s143
    %p150 = scmp.eq.s32.totalorder %s28, 1
    %p151 = por %p149, %p150
    %p152 = scmp.ne.s32.totalorder %s143, %s144
    %p153 = scmp.eq.s32.totalorder %s28, 0
    %p154 = por %p152, %p153
    %p155 = scmp.ne.s32.totalorder %s143, %s144
    %p156 = scmp.eq.s32.totalorder %s29, 1
    %p157 = por %p155, %p156
    %p159 = scmp.ne.s32.totalorder %s144, %s158
    %p160 = scmp.eq.s32.totalorder %s29, 0
    %p161 = por %p159, %p160
    %s163 = sadd.s32 %s162, 1
    %p166 = scmp.eq.s32.totalorder %s23, 1
    %p167 = scmp.ne.s32.totalorder %s162, %s164
    %p168 = scmp.eq.s32.totalorder %s23, 0
    %p169 = por %p167, %p168
    %p170 = scmp.ne.s32.totalorder %s162, %s164
    %p171 = scmp.eq.s32.totalorder %s28, 1
    %p172 = por %p170, %p171
    %p173 = scmp.ne.s32.totalorder %s164, %s165
    %p174 = scmp.eq.s32.totalorder %s28, 0
    %p175 = por %p173, %p174
    %p176 = scmp.ne.s32.totalorder %s164, %s165
    %p177 = scmp.eq.s32.totalorder %s29, 1
    %p178 = por %p176, %p177
    %p180 = scmp.ne.s32.totalorder %s165, %s179
    %p181 = scmp.eq.s32.totalorder %s29, 0
    %p182 = por %p180, %p181
    %s184 = sadd.s32 %s183, 1
    %p187 = scmp.eq.s32.totalorder %s23, 1
    %p188 = scmp.ne.s32.totalorder %s183, %s185
    %p189 = scmp.eq.s32.totalorder %s23, 0
    %p190 = por %p188, %p189
    %p191 = scmp.ne.s32.totalorder %s183, %s185
    %p192 = scmp.eq.s32.totalorder %s28, 1
    %p193 = por %p191, %p192
    %p194 = scmp.ne.s32.totalorder %s185, %s186
    %p195 = scmp.eq.s32.totalorder %s28, 0
    %p196 = por %p194, %p195
    %p197 = scmp.ne.s32.totalorder %s185, %s186
    %p198 = scmp.eq.s32.totalorder %s29, 1
    %p199 = por %p197, %p198
    %p201 = scmp.ne.s32.totalorder %s186, %s200
    %p202 = scmp.eq.s32.totalorder %s29, 0
    %p203 = por %p201, %p202
    %s205 = sadd.s32 %s204, 1
    %p208 = scmp.eq.s32.totalorder %s23, 1
    %p209 = scmp.ne.s32.totalorder %s204, %s206
    %p210 = scmp.eq.s32.totalorder %s23, 0
    %p211 = por %p209, %p210
    %p212 = scmp.ne.s32.totalorder %s204, %s206
    %p213 = scmp.eq.s32.totalorder %s28, 1
    %p214 = por %p212, %p213
    %p215 = scmp.ne.s32.totalorder %s206, %s207
    %p216 = scmp.eq.s32.totalorder %s28, 0
    %p217 = por %p215, %p216
    %p218 = scmp.ne.s32.totalorder %s206, %s207
    %p219 = scmp.eq.s32.totalorder %s29, 1
    %p220 = por %p218, %p219
    %p222 = scmp.ne.s32.totalorder %s207, %s221
    %p223 = scmp.eq.s32.totalorder %s29, 0
    %p224 = por %p222, %p223
    %s226 = sadd.s32 %s225, 1
    %p229 = scmp.eq.s32.totalorder %s23, 1
    %p230 = scmp.ne.s32.totalorder %s225, %s227
    %p231 = scmp.eq.s32.totalorder %s23, 0
    %p232 = por %p230, %p231
    %p233 = scmp.ne.s32.totalorder %s225, %s227
    %p234 = scmp.eq.s32.totalorder %s28, 1
    %p235 = por %p233, %p234
    %p236 = scmp.ne.s32.totalorder %s227, %s228
    %p237 = scmp.eq.s32.totalorder %s28, 0
    %p238 = por %p236, %p237
    %p239 = scmp.ne.s32.totalorder %s227, %s228
    %p240 = scmp.eq.s32.totalorder %s29, 1
    %p241 = por %p239, %p240
    %p243 = scmp.ne.s32.totalorder %s228, %s242
    %p244 = scmp.eq.s32.totalorder %s29, 0
    %p245 = por %p243, %p244
    %s247 = sadd.s32 %s246, 1
    %p250 = scmp.eq.s32.totalorder %s23, 1
    %p251 = scmp.ne.s32.totalorder %s246, %s248
    %p252 = scmp.eq.s32.totalorder %s23, 0
    %p253 = por %p251, %p252
    %p254 = scmp.ne.s32.totalorder %s246, %s248
    %p255 = scmp.eq.s32.totalorder %s28, 1
    %p256 = por %p254, %p255
    %p257 = scmp.ne.s32.totalorder %s248, %s249
    %p258 = scmp.eq.s32.totalorder %s28, 0
    %p259 = por %p257, %p258
    %p260 = scmp.ne.s32.totalorder %s248, %s249
    %p261 = scmp.eq.s32.totalorder %s29, 1
    %p262 = por %p260, %p261
    %p264 = scmp.ne.s32.totalorder %s249, %s263
    %p265 = scmp.eq.s32.totalorder %s29, 0
    %p266 = por %p264, %p265
    %s268 = sadd.s32 %s267, 1
    %p271 = scmp.eq.s32.totalorder %s23, 1
    %p272 = scmp.ne.s32.totalorder %s267, %s269
    %p273 = scmp.eq.s32.totalorder %s23, 0
    %p274 = por %p272, %p273
    %p275 = scmp.ne.s32.totalorder %s267, %s269
    %p276 = scmp.eq.s32.totalorder %s28, 1
    %p277 = por %p275, %p276
    %p278 = scmp.ne.s32.totalorder %s269, %s270
    %p279 = scmp.eq.s32.totalorder %s28, 0
    %p280 = por %p278, %p279
    %p281 = scmp.ne.s32.totalorder %s269, %s270
    %p282 = scmp.eq.s32.totalorder %s29, 1
    %p283 = por %p281, %p282
    %p285 = scmp.ne.s32.totalorder %s270, %s284
    %p286 = scmp.eq.s32.totalorder %s29, 0
    %p287 = por %p285, %p286
    %s289 = sadd.s32 %s288, 1
    %p292 = scmp.eq.s32.totalorder %s23, 1
    %p293 = scmp.ne.s32.totalorder %s288, %s290
    %p294 = scmp.eq.s32.totalorder %s23, 0
    %p295 = por %p293, %p294
    %p296 = scmp.ne.s32.totalorder %s288, %s290
    %p297 = scmp.eq.s32.totalorder %s28, 1
    %p298 = por %p296, %p297
    %p299 = scmp.ne.s32.totalorder %s290, %s291
    %p300 = scmp.eq.s32.totalorder %s28, 0
    %p301 = por %p299, %p300
    %p302 = scmp.ne.s32.totalorder %s290, %s291
    %p303 = scmp.eq.s32.totalorder %s29, 1
    %p304 = por %p302, %p303
    %p306 = scmp.ne.s32.totalorder %s291, %s305
    %p307 = scmp.eq.s32.totalorder %s29, 0
    %p308 = por %p306, %p307
    %s310 = sadd.s32 %s309, 1
    %p313 = scmp.eq.s32.totalorder %s23, 1
    %p314 = scmp.ne.s32.totalorder %s309, %s311
    %p315 = scmp.eq.s32.totalorder %s23, 0
    %p316 = por %p314, %p315
    %p317 = scmp.ne.s32.totalorder %s309, %s311
    %p318 = scmp.eq.s32.totalorder %s28, 1
    %p319 = por %p317, %p318
    %p320 = scmp.ne.s32.totalorder %s311, %s312
    %p321 = scmp.eq.s32.totalorder %s28, 0
    %p322 = por %p320, %p321
    %p323 = scmp.ne.s32.totalorder %s311, %s312
    %p324 = scmp.eq.s32.totalorder %s29, 1
    %p325 = por %p323, %p324
    %p327 = scmp.ne.s32.totalorder %s312, %s326
    %p328 = scmp.eq.s32.totalorder %s29, 0
    %p329 = por %p327, %p328
    %s331 = sadd.s32 %s330, 1
    %p334 = scmp.eq.s32.totalorder %s23, 1
    %p335 = scmp.ne.s32.totalorder %s330, %s332
    %p336 = scmp.eq.s32.totalorder %s23, 0
    %p337 = por %p335, %p336
    %p338 = scmp.ne.s32.totalorder %s330, %s332
    %p339 = scmp.eq.s32.totalorder %s28, 1
    %p340 = por %p338, %p339
    %p341 = scmp.ne.s32.totalorder %s332, %s333
    %p342 = scmp.eq.s32.totalorder %s28, 0
    %p343 = por %p341, %p342
    %p344 = scmp.ne.s32.totalorder %s332, %s333
    %p345 = scmp.eq.s32.totalorder %s29, 1
    %p346 = por %p344, %p345
    %p348 = scmp.ne.s32.totalorder %s333, %s347
    %p349 = scmp.eq.s32.totalorder %s29, 0
    %p350 = por %p348, %p349
    %s352 = sadd.s32 %s351, 1
    %p355 = scmp.eq.s32.totalorder %s23, 1
    %p356 = scmp.ne.s32.totalorder %s351, %s353
    %p357 = scmp.eq.s32.totalorder %s23, 0
    %p358 = por %p356, %p357
    %p359 = scmp.ne.s32.totalorder %s351, %s353
    %p360 = scmp.eq.s32.totalorder %s28, 1
    %p361 = por %p359, %p360
    %p362 = scmp.ne.s32.totalorder %s353, %s354
    %p363 = scmp.eq.s32.totalorder %s28, 0
    %p364 = por %p362, %p363
    %p365 = scmp.ne.s32.totalorder %s353, %s354
    %p366 = scmp.eq.s32.totalorder %s29, 1
    %p367 = por %p365, %p366
    %p369 = scmp.ne.s32.totalorder %s354, %s368
    %p370 = scmp.eq.s32.totalorder %s29, 0
    %p371 = por %p369, %p370
    %s373 = sadd.s32 %s372, 1
    %p376 = scmp.eq.s32.totalorder %s23, 1
    %p377 = scmp.ne.s32.totalorder %s372, %s374
    %p378 = scmp.eq.s32.totalorder %s23, 0
    %p379 = por %p377, %p378
    %p380 = scmp.ne.s32.totalorder %s372, %s374
    %p381 = scmp.eq.s32.totalorder %s28, 1
    %p382 = por %p380, %p381
    %p383 = scmp.ne.s32.totalorder %s374, %s375
    %p384 = scmp.eq.s32.totalorder %s28, 0
    %p385 = por %p383, %p384
    %p386 = scmp.ne.s32.totalorder %s374, %s375
    %p387 = scmp.eq.s32.totalorder %s29, 1
    %p388 = por %p386, %p387
    %p390 = scmp.ne.s32.totalorder %s375, %s389
    %p391 = scmp.eq.s32.totalorder %s29, 0
    %p392 = por %p390, %p391
    %s393 = ssub.s32 %s23, %s30
    %p394 = scmp.eq.s32.totalorder %s393, 0
    %s396 = sadd.s32 %s395, 1
    %s397 = scalar_select %p394, %s395, %s396
    %p400 = pneg %p394
    %p401 = scmp.eq.s32.totalorder %s23, 1
    %p402 = por %p400, %p401
    %p403 = scmp.ne.s32.totalorder %s395, %s398
    %p404 = scmp.eq.s32.totalorder %s23, 0
    %p405 = por %p403, %p404
    %p406 = scmp.ne.s32.totalorder %s395, %s398
    %p407 = scmp.eq.s32.totalorder %s28, 1
    %p408 = por %p406, %p407
    %p409 = scmp.ne.s32.totalorder %s398, %s399
    %p410 = scmp.eq.s32.totalorder %s28, 0
    %p411 = por %p409, %p410
    %p412 = scmp.ne.s32.totalorder %s398, %s399
    %p413 = scmp.eq.s32.totalorder %s29, 1
    %p414 = por %p412, %p413
    %p416 = scmp.ne.s32.totalorder %s399, %s415
    %p417 = scmp.eq.s32.totalorder %s29, 0
    %p418 = por %p416, %p417
    %p419 = scmp.le.s32.totalorder 1, %s23
    %p420 = scmp.lt.s32.totalorder %s23, 3
    %p421 = pnand %p419, %p420
    %p422 = pneg %p421
    // Predicated region
    $region9: #{kgmodel_vwmha_forward.9} parent=5 // pred_check
      _
    $region10: #{kgmodel_vwmha_forward.9} parent=5 // pred_check_branch
      %424 = sbr.rel (%p421) target = $region12
    $region11: #{kgmodel_vwmha_forward.9} parent=5 // pred_region
      %s425 = ssub.s32 %s23, 1
      // Predicated region
      $region13: #{kgmodel_vwmha_forward.9} parent=11 // pred_check
        %p426 = pneg %p70
      $region14: #{kgmodel_vwmha_forward.9} parent=11 // pred_check_branch
        %428 = sbr.rel (%p426) target = $region16
      $region15: #{kgmodel_vwmha_forward.9} parent=11 // pred_region
        _
      $region16: #{kgmodel_vwmha_forward.9} parent=11 // pred_fallthru
        _
      // Predicated region
      $region17: #{kgmodel_vwmha_forward.9} parent=11 // pred_check
        %p429 = pneg %p91
      $region18: #{kgmodel_vwmha_forward.9} parent=11 // pred_check_branch
        %431 = sbr.rel (%p429) target = $region20
      $region19: #{kgmodel_vwmha_forward.9} parent=11 // pred_region
        _
      $region20: #{kgmodel_vwmha_forward.9} parent=11 // pred_fallthru
        _
      // Predicated region
      $region21: #{kgmodel_vwmha_forward.9} parent=11 // pred_check
        %p432 = pneg %p112
      $region22: #{kgmodel_vwmha_forward.9} parent=11 // pred_check_branch
        %434 = sbr.rel (%p432) target = $region24
      $region23: #{kgmodel_vwmha_forward.9} parent=11 // pred_region
        _
      $region24: #{kgmodel_vwmha_forward.9} parent=11 // pred_fallthru
        _
      // Predicated region
      $region25: #{kgmodel_vwmha_forward.9} parent=11 // pred_check
        %p435 = pneg %p133
      $region26: #{kgmodel_vwmha_forward.9} parent=11 // pred_check_branch
        %437 = sbr.rel (%p435) target = $region28
      $region27: #{kgmodel_vwmha_forward.9} parent=11 // pred_region
        _
      $region28: #{kgmodel_vwmha_forward.9} parent=11 // pred_fallthru
        _
      // Predicated region
      $region29: #{kgmodel_vwmha_forward.9} parent=11 // pred_check
        %p438 = pneg %p154
      $region30: #{kgmodel_vwmha_forward.9} parent=11 // pred_check_branch
        %440 = sbr.rel (%p438) target = $region32
      $region31: #{kgmodel_vwmha_forward.9} parent=11 // pred_region
        _
      $region32: #{kgmodel_vwmha_forward.9} parent=11 // pred_fallthru
        _
      // Predicated region
      $region33: #{kgmodel_vwmha_forward.9} parent=11 // pred_check
        %p441 = pneg %p175
      $region34: #{kgmodel_vwmha_forward.9} parent=11 // pred_check_branch
        %443 = sbr.rel (%p441) target = $region36
      $region35: #{kgmodel_vwmha_forward.9} parent=11 // pred_region
        _
      $region36: #{kgmodel_vwmha_forward.9} parent=11 // pred_fallthru
        _
      // Predicated region
      $region37: #{kgmodel_vwmha_forward.9} parent=11 // pred_check
        %p444 = pneg %p196
      $region38: #{kgmodel_vwmha_forward.9} parent=11 // pred_check_branch
        %446 = sbr.rel (%p444) target = $region40
      $region39: #{kgmodel_vwmha_forward.9} parent=11 // pred_region
        _
      $region40: #{kgmodel_vwmha_forward.9} parent=11 // pred_fallthru
        _
      // Predicated region
      $region41: #{kgmodel_vwmha_forward.9} parent=11 // pred_check
        %p447 = pneg %p217
      $region42: #{kgmodel_vwmha_forward.9} parent=11 // pred_check_branch
        %449 = sbr.rel (%p447) target = $region44
      $region43: #{kgmodel_vwmha_forward.9} parent=11 // pred_region
        _
      $region44: #{kgmodel_vwmha_forward.9} parent=11 // pred_fallthru
        _
      // Predicated region
      $region45: #{kgmodel_vwmha_forward.9} parent=11 // pred_check
        %p450 = pneg %p238
      $region46: #{kgmodel_vwmha_forward.9} parent=11 // pred_check_branch
        %452 = sbr.rel (%p450) target = $region48
      $region47: #{kgmodel_vwmha_forward.9} parent=11 // pred_region
        _
      $region48: #{kgmodel_vwmha_forward.9} parent=11 // pred_fallthru
        _
      // Predicated region
      $region49: #{kgmodel_vwmha_forward.9} parent=11 // pred_check
        %p453 = pneg %p259
      $region50: #{kgmodel_vwmha_forward.9} parent=11 // pred_check_branch
        %455 = sbr.rel (%p453) target = $region52
      $region51: #{kgmodel_vwmha_forward.9} parent=11 // pred_region
        _
      $region52: #{kgmodel_vwmha_forward.9} parent=11 // pred_fallthru
        _
      // Predicated region
      $region53: #{kgmodel_vwmha_forward.9} parent=11 // pred_check
        %p456 = pneg %p280
      $region54: #{kgmodel_vwmha_forward.9} parent=11 // pred_check_branch
        %458 = sbr.rel (%p456) target = $region56
      $region55: #{kgmodel_vwmha_forward.9} parent=11 // pred_region
        _
      $region56: #{kgmodel_vwmha_forward.9} parent=11 // pred_fallthru
        _
      // Predicated region
      $region57: #{kgmodel_vwmha_forward.9} parent=11 // pred_check
        %p459 = pneg %p301
      $region58: #{kgmodel_vwmha_forward.9} parent=11 // pred_check_branch
        %461 = sbr.rel (%p459) target = $region60
      $region59: #{kgmodel_vwmha_forward.9} parent=11 // pred_region
        _
      $region60: #{kgmodel_vwmha_forward.9} parent=11 // pred_fallthru
        _
      // Predicated region
      $region61: #{kgmodel_vwmha_forward.9} parent=11 // pred_check
        %p462 = pneg %p322
      $region62: #{kgmodel_vwmha_forward.9} parent=11 // pred_check_branch
        %464 = sbr.rel (%p462) target = $region64
      $region63: #{kgmodel_vwmha_forward.9} parent=11 // pred_region
        _
      $region64: #{kgmodel_vwmha_forward.9} parent=11 // pred_fallthru
        _
      // Predicated region
      $region65: #{kgmodel_vwmha_forward.9} parent=11 // pred_check
        %p465 = pneg %p343
      $region66: #{kgmodel_vwmha_forward.9} parent=11 // pred_check_branch
        %467 = sbr.rel (%p465) target = $region68
      $region67: #{kgmodel_vwmha_forward.9} parent=11 // pred_region
        _
      $region68: #{kgmodel_vwmha_forward.9} parent=11 // pred_fallthru
        _
      // Predicated region
      $region69: #{kgmodel_vwmha_forward.9} parent=11 // pred_check
        %p468 = pneg %p364
      $region70: #{kgmodel_vwmha_forward.9} parent=11 // pred_check_branch
        %470 = sbr.rel (%p468) target = $region72
      $region71: #{kgmodel_vwmha_forward.9} parent=11 // pred_region
        _
      $region72: #{kgmodel_vwmha_forward.9} parent=11 // pred_fallthru
        _
      // Predicated region
      $region73: #{kgmodel_vwmha_forward.9} parent=11 // pred_check
        %p471 = pneg %p385
      $region74: #{kgmodel_vwmha_forward.9} parent=11 // pred_check_branch
        %473 = sbr.rel (%p471) target = $region76
      $region75: #{kgmodel_vwmha_forward.9} parent=11 // pred_region
        _
      $region76: #{kgmodel_vwmha_forward.9} parent=11 // pred_fallthru
        _
    $region12: #{kgmodel_vwmha_forward.9} parent=5 // pred_fallthru
      _
    %p474 = scmp.lt.s32.totalorder %s23, 2
    // Predicated region
    $region77: #{kgmodel_vwmha_forward.9} parent=5 // pred_check
      %p475 = pneg %p474
    $region78: #{kgmodel_vwmha_forward.9} parent=5 // pred_check_branch
      %477 = sbr.rel (%p475) target = $region80
    $region79: #{kgmodel_vwmha_forward.9} parent=5 // pred_region
      // Predicated region
      $region81: #{kgmodel_vwmha_forward.9} parent=79 // pred_check
        %p478 = pneg %p43
      $region82: #{kgmodel_vwmha_forward.9} parent=79 // pred_check_branch
        %480 = sbr.rel (%p478) target = $region84
      $region83: #{kgmodel_vwmha_forward.9} parent=79 // pred_region
        %p481 = scmp.lt.s32.totalorder %s23, 1
        %s482 = scalar_select %p481, %s23, 1
        %s483 = smul.addr %s482, 2
        %s484 = scalar_lea.vmem %s0, %s483
      $region84: #{kgmodel_vwmha_forward.9} parent=79 // pred_fallthru
        _
    $region80: #{kgmodel_vwmha_forward.9} parent=5 // pred_fallthru
      _
    %p485 = scmp.le.s32.totalorder 1, %s23
    %p486 = scmp.lt.s32.totalorder %s23, 3
    %p487 = pnand %p485, %p486
    %p488 = pneg %p487
    // Predicated region
    $region85: #{kgmodel_vwmha_forward.9} parent=5 // pred_check
      _
    $region86: #{kgmodel_vwmha_forward.9} parent=5 // pred_check_branch
      %490 = sbr.rel (%p487) target = $region88
    $region87: #{kgmodel_vwmha_forward.9} parent=5 // pred_region
      %s491 = ssub.s32 %s23, 1
      %p492 = scmp.lt.s32.totalorder %s28, 1
      %s493 = scalar_select %p492, %s28, 1
      %s494 = smul.addr %s493, 2
      %s495 = scalar_lea.vmem %s0, %s494
      %p496 = pneg %p49
      %p497 = pneg %p46
      %p498 = pneg %p70
      %p499 = pneg %p67
      %p500 = pneg %p91
      %p501 = pneg %p88
      %p502 = pneg %p112
      %p503 = pneg %p109
      %p504 = pneg %p133
      %p505 = pneg %p130
      %p506 = pneg %p154
      %p507 = pneg %p151
      %p508 = pneg %p175
      %p509 = pneg %p172
      %p510 = pneg %p196
      %p511 = pneg %p193
      %p512 = pneg %p217
      %p513 = pneg %p214
      %p514 = pneg %p238
      %p515 = pneg %p235
      %p516 = pneg %p259
      %p517 = pneg %p256
      %p518 = pneg %p280
      %p519 = pneg %p277
      %p520 = pneg %p301
      %p521 = pneg %p298
      %p522 = pneg %p322
      %p523 = pneg %p319
      %p524 = pneg %p343
      %p525 = pneg %p340
      %p526 = pneg %p364
      %p527 = pneg %p361
      %p528 = pneg %p385
      %p529 = pneg %p382
      %p530 = pneg %p411
      %p531 = pneg %p408
      %p532 = scmp.lt.s32.totalorder %s28, 1
      %s533 = scalar_select %p532, %s28, 1
      %s534 = smul.addr %s533, 2
      %s535 = scalar_lea.vmem %s17, %s534
      %p536 = scmp.lt.s32.totalorder %s28, 1
      %s537 = scalar_select %p536, %s28, 1
      %s538 = smul.addr %s537, 2
      %s539 = scalar_lea.vmem %s0, %s538
      %p540 = scmp.lt.s32.totalorder %s28, 1
      %s541 = scalar_select %p540, %s28, 1
      %s542 = smul.addr %s541, 2
      %s543 = scalar_lea.vmem %s17, %s542
      %v545 = vld [vmem:[%s539] sm:$0x3]
      %v546 = vld [vmem:[%s1] sm:$0xff]
      %v547 = vld [vmem:[%s1 + $0x8] sm:$0xff]
      %vm548 = vcmask 1041408
      %v549 = vsel %vm548, %v545, 0.0
      %550 = vadd.xlane.f32.xlu0 %v549
      %v551 = vpop.xlane.xlu0 %550
      %v552 = vrcp.pop 128.0
      %v553 = vmul.f32 %v551, %v552
      %v554 = vsub.f32 %v545, %v553
      %v555 = vmul.f32 %v554, %v554
      %v556 = vsel %vm548, %v555, 0.0
      %557 = vadd.xlane.f32.xlu0 %v556
      %v558 = vpop.xlane.xlu0 %557
      %v559 = vmul.f32 %v558, %v552
      %v560 = vadd.f32 %v559, 1e-06
      %v561 = vrsqrt.pop %v560
      %v562 = vmul.f32 %v554, %v561
      %v563 = vld [vmem:[%s3] sm:$0x1]
      %v565 = vlaneseq
      %v566 = vshrl.u32 %v565, 7
      %v567 = vsub.s32 0, %v566
      %v568 = vrot.slane %v563, %v567
      %v570 = vmul.f32 %v562, %v568
      %v571 = vld [vmem:[%s4] sm:$0x1]
      %v573 = vlaneseq
      %v574 = vshrl.u32 %v573, 7
      %v575 = vsub.s32 0, %v574
      %v576 = vrot.slane %v571, %v575
      %v578 = vadd.f32 %v570, %v576
      %v579 = vpack.c.bf16 %v578, %v578
      %v580 = vld [vmem:[%s5] sm:$0xf]
      %v581 = vld [vmem:[%s5 + $0x4] sm:$0xf]
      %v582 = vld [vmem:[%s5 + $0x8] sm:$0xf]
      %v583 = vld [vmem:[%s5 + $0xc] sm:$0xf]
      %v584 = vld [vmem:[%s5 + $0x10] sm:$0xf]
      %v585 = vld [vmem:[%s5 + $0x14] sm:$0xf]
      %v586 = vld [vmem:[%s5 + $0x18] sm:$0xf]
      %v587 = vld [vmem:[%s5 + $0x1c] sm:$0xf]
      %v588 = vld [vmem:[%s5 + $0x20] sm:$0xf]
      %v589 = vld [vmem:[%s5 + $0x24] sm:$0xf]
      %v590 = vld [vmem:[%s5 + $0x28] sm:$0xf]
      %v591 = vld [vmem:[%s5 + $0x2c] sm:$0xf]
      %v592 = vld [vmem:[%s5 + $0x30] sm:$0xf]
      %v593 = vld [vmem:[%s5 + $0x34] sm:$0xf]
      %v594 = vld [vmem:[%s5 + $0x38] sm:$0xf]
      %v595 = vld [vmem:[%s5 + $0x3c] sm:$0xf]
      %v596 = vld [vmem:[%s6] sm:$0x1]
      %v598 = vlaneseq
      %v599 = vshrl.u32 %v598, 7
      %v600 = vsub.s32 0, %v599
      %v601 = vrot.slane %v596, %v600
      %v619 = vunpack.c.l.b16 %v580
      %v620 = vunpack.c.l.b16 %v581
      %v621 = vunpack.c.l.b16 %v582
      %v622 = vunpack.c.l.b16 %v583
      %v623 = vunpack.c.l.b16 %v584
      %v624 = vunpack.c.l.b16 %v585
      %v625 = vunpack.c.l.b16 %v586
      %v626 = vunpack.c.l.b16 %v587
      %v627 = vunpack.c.l.b16 %v588
      %v628 = vunpack.c.l.b16 %v589
      %v629 = vunpack.c.l.b16 %v590
      %v630 = vunpack.c.l.b16 %v591
      %v631 = vunpack.c.l.b16 %v592
      %v632 = vunpack.c.l.b16 %v593
      %v633 = vunpack.c.l.b16 %v594
      %v634 = vunpack.c.l.b16 %v595
      %v635 = vpack.c.b16 %v620, %v619
      %v636 = vpack.c.b16 %v622, %v621
      %v637 = vpack.c.b16 %v624, %v623
      %v638 = vpack.c.b16 %v626, %v625
      %v639 = vpack.c.b16 %v628, %v627
      %v640 = vpack.c.b16 %v630, %v629
      %v641 = vpack.c.b16 %v632, %v631
      %v642 = vpack.c.b16 %v634, %v633
      %651 = vmatprep.subr.bf16.mxu0 0
      %652 = vmatpush1.bf16.msra.mxu0 %v642
      %653 = vmatprep.subr.bf16.mxu0 0
      %654 = vmatpush1.bf16.msra.mxu0 %v641
      %655 = vmatprep.subr.bf16.mxu0 0
      %656 = vmatpush1.bf16.msra.mxu0 %v640
      %657 = vmatprep.subr.bf16.mxu0 0
      %658 = vmatpush1.bf16.msra.mxu0 %v639
      %659 = vmatprep.subr.bf16.mxu0 0
      %660 = vmatpush1.bf16.msra.mxu0 %v638
      %661 = vmatprep.subr.bf16.mxu0 0
      %662 = vmatpush1.bf16.msra.mxu0 %v637
      %663 = vmatprep.subr.bf16.mxu0 0
      %664 = vmatpush1.bf16.msra.mxu0 %v636
      %665 = vmatprep.subr.bf16.mxu0 0
      %666 = vmatpush1.bf16.msra.mxu0 %v635
      %667 = vmatprep.subr.bf16.mxu0 0
      %668 = vmatpush2.bf16.msra.mxu0 0
      %669 = vmatprep.subr.bf16.mxu0 0
      %670 = vmatpush2.bf16.msra.mxu0 0
      %671 = vmatprep.subr.bf16.mxu0 0
      %672 = vmatpush2.bf16.msra.mxu0 0
      %673 = vmatprep.subr.bf16.mxu0 0
      %674 = vmatpush2.bf16.msra.mxu0 0
      %675 = vmatprep.subr.bf16.mxu0 0
      %676 = vmatpush2.bf16.msra.mxu0 0
      %677 = vmatprep.subr.bf16.mxu0 0
      %678 = vmatpush2.bf16.msra.mxu0 0
      %679 = vmatprep.subr.bf16.mxu0 0
      %680 = vmatpush2.bf16.msra.mxu0 0
      %681 = vmatprep.subr.bf16.mxu0 0
      %682 = vmatpush2.bf16.msra.mxu0 0
      %683 = vmatprep.mubr.bf16.mxu0 0
      %684 = vmatmul.mubr.bf16.gmra.mxu0 %v579
      %v685 = vpop.f32.mrf.mxu0
      %v686 = vadd.f32 %v601, %v685
      %v687 = vpop.f32.mrf.mxu0
      %v688 = vpop.f32.mrf.mxu0
      %v689 = vpop.f32.mrf.mxu0
      %690 = vdwg.mxu0
      %v691 = vmul.f32 %v686, 0.17677669
      %v692 = vpack.c.bf16 %v547, %v546
      %v693 = vld [vmem:[%s7] sm:$0xff]
      %v694 = vld [vmem:[%s7 + $0x8] sm:$0xff]
      %v695 = vld [vmem:[%s7 + $0x10] sm:$0xff]
      %v696 = vld [vmem:[%s7 + $0x18] sm:$0xff]
      %v697 = vld [vmem:[%s7 + $0x20] sm:$0xff]
      %v698 = vld [vmem:[%s7 + $0x28] sm:$0xff]
      %v699 = vld [vmem:[%s7 + $0x30] sm:$0xff]
      %v700 = vld [vmem:[%s7 + $0x38] sm:$0xff]
      %v701 = vld [vmem:[%s7 + $0x40] sm:$0xff]
      %v702 = vld [vmem:[%s7 + $0x48] sm:$0xff]
      %v703 = vld [vmem:[%s7 + $0x50] sm:$0xff]
      %v704 = vld [vmem:[%s7 + $0x58] sm:$0xff]
      %v705 = vld [vmem:[%s7 + $0x60] sm:$0xff]
      %v706 = vld [vmem:[%s7 + $0x68] sm:$0xff]
      %v707 = vld [vmem:[%s7 + $0x70] sm:$0xff]
      %v708 = vld [vmem:[%s7 + $0x78] sm:$0xff]
      %v709 = vld [vmem:[%s8] sm:$0x3]
      %v711 = vlaneseq
      %v712 = vshrl.u32 %v711, 7
      %v713 = vsub.s32 0, %v712
      %v714 = vrot.slane %v709, %v713
      %v715 = vlaneseq
      %v716 = vshrl.u32 %v715, 7
      %v717 = vsub.s32 1, %v716
      %v718 = vrot.slane %v709, %v717
      %v737 = vunpack.c.l.b16 %v693
      %v738 = vunpack.c.h.b16 %v693
      %v739 = vunpack.c.l.b16 %v694
      %v740 = vunpack.c.h.b16 %v694
      %v741 = vunpack.c.l.b16 %v695
      %v742 = vunpack.c.h.b16 %v695
      %v743 = vunpack.c.l.b16 %v696
      %v744 = vunpack.c.h.b16 %v696
      %v745 = vunpack.c.l.b16 %v697
      %v746 = vunpack.c.h.b16 %v697
      %v747 = vunpack.c.l.b16 %v698
      %v748 = vunpack.c.h.b16 %v698
      %v749 = vunpack.c.l.b16 %v699
      %v750 = vunpack.c.h.b16 %v699
      %v751 = vunpack.c.l.b16 %v700
      %v752 = vunpack.c.h.b16 %v700
      %v753 = vunpack.c.l.b16 %v701
      %v754 = vunpack.c.h.b16 %v701
      %v755 = vunpack.c.l.b16 %v702
      %v756 = vunpack.c.h.b16 %v702
      %v757 = vunpack.c.l.b16 %v703
      %v758 = vunpack.c.h.b16 %v703
      %v759 = vunpack.c.l.b16 %v704
      %v760 = vunpack.c.h.b16 %v704
      %v761 = vunpack.c.l.b16 %v705
      %v762 = vunpack.c.h.b16 %v705
      %v763 = vunpack.c.l.b16 %v706
      %v764 = vunpack.c.h.b16 %v706
      %v765 = vunpack.c.l.b16 %v707
      %v766 = vunpack.c.h.b16 %v707
      %v767 = vunpack.c.l.b16 %v708
      %v768 = vunpack.c.h.b16 %v708
      %v769 = vpack.c.b16 %v739, %v737
      %v770 = vpack.c.b16 %v740, %v738
      %v771 = vpack.c.b16 %v743, %v741
      %v772 = vpack.c.b16 %v744, %v742
      %v773 = vpack.c.b16 %v747, %v745
      %v774 = vpack.c.b16 %v748, %v746
      %v775 = vpack.c.b16 %v751, %v749
      %v776 = vpack.c.b16 %v752, %v750
      %v777 = vpack.c.b16 %v755, %v753
      %v778 = vpack.c.b16 %v756, %v754
      %v779 = vpack.c.b16 %v759, %v757
      %v780 = vpack.c.b16 %v760, %v758
      %v781 = vpack.c.b16 %v763, %v761
      %v782 = vpack.c.b16 %v764, %v762
      %v783 = vpack.c.b16 %v767, %v765
      %v784 = vpack.c.b16 %v768, %v766
      %801 = vmatprep.subr.bf16.mxu0 %v784
      %802 = vmatpush1.bf16.msra.mxu0 %v783
      %803 = vmatprep.subr.bf16.mxu0 %v782
      %804 = vmatpush1.bf16.msra.mxu0 %v781
      %805 = vmatprep.subr.bf16.mxu0 %v780
      %806 = vmatpush1.bf16.msra.mxu0 %v779
      %807 = vmatprep.subr.bf16.mxu0 %v778
      %808 = vmatpush1.bf16.msra.mxu0 %v777
      %809 = vmatprep.subr.bf16.mxu0 %v776
      %810 = vmatpush1.bf16.msra.mxu0 %v775
      %811 = vmatprep.subr.bf16.mxu0 %v774
      %812 = vmatpush1.bf16.msra.mxu0 %v773
      %813 = vmatprep.subr.bf16.mxu0 %v772
      %814 = vmatpush1.bf16.msra.mxu0 %v771
      %815 = vmatprep.subr.bf16.mxu0 %v770
      %816 = vmatpush1.bf16.msra.mxu0 %v769
      %817 = vmatprep.subr.bf16.mxu0 0
      %818 = vmatpush2.bf16.msra.mxu0 0
      %819 = vmatprep.subr.bf16.mxu0 0
      %820 = vmatpush2.bf16.msra.mxu0 0
      %821 = vmatprep.subr.bf16.mxu0 0
      %822 = vmatpush2.bf16.msra.mxu0 0
      %823 = vmatprep.subr.bf16.mxu0 0
      %824 = vmatpush2.bf16.msra.mxu0 0
      %825 = vmatprep.subr.bf16.mxu0 0
      %826 = vmatpush2.bf16.msra.mxu0 0
      %827 = vmatprep.subr.bf16.mxu0 0
      %828 = vmatpush2.bf16.msra.mxu0 0
      %829 = vmatprep.subr.bf16.mxu0 0
      %830 = vmatpush2.bf16.msra.mxu0 0
      %831 = vmatprep.subr.bf16.mxu0 0
      %832 = vmatpush2.bf16.msra.mxu0 0
      %833 = vmatprep.mubr.bf16.mxu0 0
      %834 = vmatmul.mubr.bf16.gmra.mxu0 %v692
      %v835 = vpop.f32.mrf.mxu0
      %v836 = vadd.f32 %v714, %v835
      %v837 = vpop.f32.mrf.mxu0
      %v838 = vadd.f32 %v718, %v837
      %v839 = vpop.f32.mrf.mxu0
      %v840 = vadd.f32 %v714, %v839
      %v841 = vpop.f32.mrf.mxu0
      %v842 = vadd.f32 %v718, %v841
      %843 = vdwg.mxu0
      %v844 = vpack.c.bf16 %v691, %v691
      %v845 = vpack.c.bf16 %v840, %v836
      %v846 = vpack.c.bf16 %v842, %v838
      %v847 = vld [vmem:[%s2] sm:$0x1]
      %v849 = vlaneseq
      %v850 = vshrl.u32 %v849, 7
      %v851 = vsub.s32 0, %v850
      %v852 = vrot.slane %v847, %v851
      %v854 = vld [vmem:[%s9] sm:$0xf]
      %v855 = vld [vmem:[%s9 + $0x4] sm:$0xf]
      %v856 = vld [vmem:[%s9 + $0x8] sm:$0xf]
      %v857 = vld [vmem:[%s9 + $0xc] sm:$0xf]
      %v858 = vld [vmem:[%s9 + $0x10] sm:$0xf]
      %v859 = vld [vmem:[%s9 + $0x14] sm:$0xf]
      %v860 = vld [vmem:[%s9 + $0x18] sm:$0xf]
      %v861 = vld [vmem:[%s9 + $0x1c] sm:$0xf]
      %v862 = vld [vmem:[%s9 + $0x20] sm:$0xf]
      %v863 = vld [vmem:[%s9 + $0x24] sm:$0xf]
      %v864 = vld [vmem:[%s9 + $0x28] sm:$0xf]
      %v865 = vld [vmem:[%s9 + $0x2c] sm:$0xf]
      %v866 = vld [vmem:[%s9 + $0x30] sm:$0xf]
      %v867 = vld [vmem:[%s9 + $0x34] sm:$0xf]
      %v868 = vld [vmem:[%s9 + $0x38] sm:$0xf]
      %v869 = vld [vmem:[%s9 + $0x3c] sm:$0xf]
      %vm870 = vcmask 261120
      %v872 = vsel %vm870, %v844, 0
      %v875 = vsel %vm870, %v845, 0
      %877 = vmatprep.subr.bf16.mxu0 0
      %878 = vmatpush1.bf16.xpose.msra.mxu0 0
      %879 = vmatprep.subr.bf16.mxu0 0
      %880 = vmatpush1.bf16.xpose.msra.mxu0 0
      %881 = vmatprep.subr.bf16.mxu0 0
      %882 = vmatpush1.bf16.xpose.msra.mxu0 0
      %883 = vmatprep.subr.bf16.mxu0 0
      %884 = vmatpush1.bf16.xpose.msra.mxu0 0
      %885 = vmatprep.subr.bf16.mxu0 0
      %886 = vmatpush1.bf16.xpose.msra.mxu0 0
      %887 = vmatprep.subr.bf16.mxu0 0
      %888 = vmatpush1.bf16.xpose.msra.mxu0 0
      %889 = vmatprep.subr.bf16.mxu0 0
      %890 = vmatpush1.bf16.xpose.msra.mxu0 0
      %891 = vmatprep.subr.bf16.mxu0 0
      %892 = vmatpush1.bf16.xpose.msra.mxu0 %v875
      %893 = vmatprep.subr.bf16.mxu0 0
      %894 = vmatpush2.bf16.xpose.msra.mxu0 0
      %895 = vmatprep.subr.bf16.mxu0 0
      %896 = vmatpush2.bf16.xpose.msra.mxu0 0
      %897 = vmatprep.subr.bf16.mxu0 0
      %898 = vmatpush2.bf16.xpose.msra.mxu0 0
      %899 = vmatprep.subr.bf16.mxu0 0
      %900 = vmatpush2.bf16.xpose.msra.mxu0 0
      %901 = vmatprep.subr.bf16.mxu0 0
      %902 = vmatpush2.bf16.xpose.msra.mxu0 0
      %903 = vmatprep.subr.bf16.mxu0 0
      %904 = vmatpush2.bf16.xpose.msra.mxu0 0
      %905 = vmatprep.subr.bf16.mxu0 0
      %906 = vmatpush2.bf16.xpose.msra.mxu0 0
      %907 = vmatprep.subr.bf16.mxu0 0
      %908 = vmatpush2.bf16.xpose.msra.mxu0 0
      %909 = vmatprep.mubr.bf16.mxu0 0
      %910 = vmatmul.mubr.bf16.gmra.mxu0 %v872
      %v911 = vpop.f32.mrf.mxu0
      %v912 = vadd.f32 %v852, %v911
      %v913 = vpop.f32.mrf.mxu0
      %v914 = vpop.f32.mrf.mxu0
      %v915 = vpop.f32.mrf.mxu0
      %916 = vdwg.mxu0
      %vm917 = vcmask 123904
      %v918 = vsel %vm917, %v912, -inf
      %919 = vmax.xlane.f32.xlu0 %v918
      %v920 = vpop.xlane.xlu0 %919
      %v921 = vsub.f32 %v912, %v920
      %v922 = vmul.f32 %v921, 1.442695
      %v923 = vpow.pop %v922
      %v924 = vsel %vm917, %v923, 0.0
      %925 = vadd.xlane.f32.xlu0 %v924
      %v926 = vpop.xlane.xlu0 %925
      %v927 = vrcp.pop %v926
      %v928 = vmul.f32 %v923, %v927
      %v929 = vpack.c.bf16 %v928, %v928
      %vm930 = vcmask 130048
      %v932 = vsel %vm930, %v929, 0
      %934 = vmatprep.subr.bf16.mxu0 0
      %935 = vmatpush1.bf16.msra.mxu0 0
      %936 = vmatprep.subr.bf16.mxu0 0
      %937 = vmatpush1.bf16.msra.mxu0 0
      %938 = vmatprep.subr.bf16.mxu0 0
      %939 = vmatpush1.bf16.msra.mxu0 0
      %940 = vmatprep.subr.bf16.mxu0 0
      %941 = vmatpush1.bf16.msra.mxu0 0
      %942 = vmatprep.subr.bf16.mxu0 0
      %943 = vmatpush1.bf16.msra.mxu0 0
      %944 = vmatprep.subr.bf16.mxu0 0
      %945 = vmatpush1.bf16.msra.mxu0 0
      %946 = vmatprep.subr.bf16.mxu0 0
      %947 = vmatpush1.bf16.msra.mxu0 0
      %948 = vmatprep.subr.bf16.mxu0 0
      %949 = vmatpush1.bf16.msra.mxu0 %v846
      %950 = vmatprep.subr.bf16.mxu0 0
      %951 = vmatpush2.bf16.msra.mxu0 0
      %952 = vmatprep.subr.bf16.mxu0 0
      %953 = vmatpush2.bf16.msra.mxu0 0
      %954 = vmatprep.subr.bf16.mxu0 0
      %955 = vmatpush2.bf16.msra.mxu0 0
      %956 = vmatprep.subr.bf16.mxu0 0
      %957 = vmatpush2.bf16.msra.mxu0 0
      %958 = vmatprep.subr.bf16.mxu0 0
      %959 = vmatpush2.bf16.msra.mxu0 0
      %960 = vmatprep.subr.bf16.mxu0 0
      %961 = vmatpush2.bf16.msra.mxu0 0
      %962 = vmatprep.subr.bf16.mxu0 0
      %963 = vmatpush2.bf16.msra.mxu0 0
      %964 = vmatprep.subr.bf16.mxu0 0
      %965 = vmatpush2.bf16.msra.mxu0 0
      %966 = vmatprep.mubr.bf16.mxu0 0
      %967 = vmatmul.mubr.bf16.gmra.mxu0 %v932
      %v968 = vpop.f32.mrf.mxu0
      %v969 = vadd.f32 0.0, %v968
      %v970 = vpop.f32.mrf.mxu0
      %v971 = vpop.f32.mrf.mxu0
      %v972 = vpop.f32.mrf.mxu0
      %973 = vdwg.mxu0
      %v974 = vpack.c.bf16 %v969, %v969
      %976 = vrot.lane.b32.xlu0 %v844, 96
      %v977 = vpop.permute.xlu0 %976
      %979 = vrot.lane.b32.xlu0 %v845, 96
      %v980 = vpop.permute.xlu0 %979
      %v982 = vsel %vm870, %v977, 0
      %v985 = vsel %vm870, %v980, 0
      %987 = vmatprep.subr.bf16.mxu0 0
      %988 = vmatpush1.bf16.xpose.msra.mxu0 0
      %989 = vmatprep.subr.bf16.mxu0 0
      %990 = vmatpush1.bf16.xpose.msra.mxu0 0
      %991 = vmatprep.subr.bf16.mxu0 0
      %992 = vmatpush1.bf16.xpose.msra.mxu0 0
      %993 = vmatprep.subr.bf16.mxu0 0
      %994 = vmatpush1.bf16.xpose.msra.mxu0 0
      %995 = vmatprep.subr.bf16.mxu0 0
      %996 = vmatpush1.bf16.xpose.msra.mxu0 0
      %997 = vmatprep.subr.bf16.mxu0 0
      %998 = vmatpush1.bf16.xpose.msra.mxu0 0
      %999 = vmatprep.subr.bf16.mxu0 0
      %1000 = vmatpush1.bf16.xpose.msra.mxu0 0
      %1001 = vmatprep.subr.bf16.mxu0 0
      %1002 = vmatpush1.bf16.xpose.msra.mxu0 %v985
      %1003 = vmatprep.subr.bf16.mxu0 0
      %1004 = vmatpush2.bf16.xpose.msra.mxu0 0
      %1005 = vmatprep.subr.bf16.mxu0 0
      %1006 = vmatpush2.bf16.xpose.msra.mxu0 0
      %1007 = vmatprep.subr.bf16.mxu0 0
      %1008 = vmatpush2.bf16.xpose.msra.mxu0 0
      %1009 = vmatprep.subr.bf16.mxu0 0
      %1010 = vmatpush2.bf16.xpose.msra.mxu0 0
      %1011 = vmatprep.subr.bf16.mxu0 0
      %1012 = vmatpush2.bf16.xpose.msra.mxu0 0
      %1013 = vmatprep.subr.bf16.mxu0 0
      %1014 = vmatpush2.bf16.xpose.msra.mxu0 0
      %1015 = vmatprep.subr.bf16.mxu0 0
      %1016 = vmatpush2.bf16.xpose.msra.mxu0 0
      %1017 = vmatprep.subr.bf16.mxu0 0
      %1018 = vmatpush2.bf16.xpose.msra.mxu0 0
      %1019 = vmatprep.mubr.bf16.mxu0 0
      %1020 = vmatmul.mubr.bf16.gmra.mxu0 %v982
      %v1021 = vpop.f32.mrf.mxu0
      %v1022 = vadd.f32 %v852, %v1021
      %v1023 = vpop.f32.mrf.mxu0
      %v1024 = vpop.f32.mrf.mxu0
      %v1025 = vpop.f32.mrf.mxu0
      %1026 = vdwg.mxu0
      %v1027 = vsel %vm917, %v1022, -inf
      %1028 = vmax.xlane.f32.xlu0 %v1027
      %v1029 = vpop.xlane.xlu0 %1028
      %v1030 = vsub.f32 %v1022, %v1029
      %v1031 = vmul.f32 %v1030, 1.442695
      %v1032 = vpow.pop %v1031
      %v1033 = vsel %vm917, %v1032, 0.0
      %1034 = vadd.xlane.f32.xlu0 %v1033
      %v1035 = vpop.xlane.xlu0 %1034
      %v1036 = vrcp.pop %v1035
      %v1037 = vmul.f32 %v1032, %v1036
      %v1038 = vpack.c.bf16 %v1037, %v1037
      %1040 = vrot.lane.b32.xlu0 %v846, 96
      %v1041 = vpop.permute.xlu0 %1040
      %v1044 = vsel %vm930, %v1038, 0
      %1046 = vmatprep.subr.bf16.mxu0 0
      %1047 = vmatpush1.bf16.msra.mxu0 0
      %1048 = vmatprep.subr.bf16.mxu0 0
      %1049 = vmatpush1.bf16.msra.mxu0 0
      %1050 = vmatprep.subr.bf16.mxu0 0
      %1051 = vmatpush1.bf16.msra.mxu0 0
      %1052 = vmatprep.subr.bf16.mxu0 0
      %1053 = vmatpush1.bf16.msra.mxu0 0
      %1054 = vmatprep.subr.bf16.mxu0 0
      %1055 = vmatpush1.bf16.msra.mxu0 0
      %1056 = vmatprep.subr.bf16.mxu0 0
      %1057 = vmatpush1.bf16.msra.mxu0 0
      %1058 = vmatprep.subr.bf16.mxu0 0
      %1059 = vmatpush1.bf16.msra.mxu0 0
      %1060 = vmatprep.subr.bf16.mxu0 0
      %1061 = vmatpush1.bf16.msra.mxu0 %v1041
      %1062 = vmatprep.subr.bf16.mxu0 0
      %1063 = vmatpush2.bf16.msra.mxu0 0
      %1064 = vmatprep.subr.bf16.mxu0 0
      %1065 = vmatpush2.bf16.msra.mxu0 0
      %1066 = vmatprep.subr.bf16.mxu0 0
      %1067 = vmatpush2.bf16.msra.mxu0 0
      %1068 = vmatprep.subr.bf16.mxu0 0
      %1069 = vmatpush2.bf16.msra.mxu0 0
      %1070 = vmatprep.subr.bf16.mxu0 0
      %1071 = vmatpush2.bf16.msra.mxu0 0
      %1072 = vmatprep.subr.bf16.mxu0 0
      %1073 = vmatpush2.bf16.msra.mxu0 0
      %1074 = vmatprep.subr.bf16.mxu0 0
      %1075 = vmatpush2.bf16.msra.mxu0 0
      %1076 = vmatprep.subr.bf16.mxu0 0
      %1077 = vmatpush2.bf16.msra.mxu0 0
      %1078 = vmatprep.mubr.bf16.mxu0 0
      %1079 = vmatmul.mubr.bf16.gmra.mxu0 %v1044
      %v1080 = vpop.f32.mrf.mxu0
      %v1081 = vadd.f32 0.0, %v1080
      %v1082 = vpop.f32.mrf.mxu0
      %v1083 = vpop.f32.mrf.mxu0
      %v1084 = vpop.f32.mrf.mxu0
      %1085 = vdwg.mxu0
      %v1086 = vpack.c.bf16 %v1081, %v1081
      %v1091 = vunpack.c.l.b16 %v858
      %v1092 = vunpack.c.l.b16 %v859
      %v1093 = vunpack.c.l.b16 %v860
      %v1094 = vunpack.c.l.b16 %v861
      %v1095 = vpack.c.b16 %v1092, %v1091
      %v1096 = vpack.c.b16 %v1094, %v1093
      %v1100 = vsel %vm870, %v1086, 0
      %1102 = vmatprep.subr.bf16.mxu0 0
      %1103 = vmatpush1.bf16.msra.mxu0 0
      %1104 = vmatprep.subr.bf16.mxu0 0
      %1105 = vmatpush1.bf16.msra.mxu0 0
      %1106 = vmatprep.subr.bf16.mxu0 0
      %1107 = vmatpush1.bf16.msra.mxu0 0
      %1108 = vmatprep.subr.bf16.mxu0 0
      %1109 = vmatpush1.bf16.msra.mxu0 0
      %1110 = vmatprep.subr.bf16.mxu0 0
      %1111 = vmatpush1.bf16.msra.mxu0 0
      %1112 = vmatprep.subr.bf16.mxu0 0
      %1113 = vmatpush1.bf16.msra.mxu0 0
      %1114 = vmatprep.subr.bf16.mxu0 0
      %1115 = vmatpush1.bf16.msra.mxu0 %v1096
      %1116 = vmatprep.subr.bf16.mxu0 0
      %1117 = vmatpush1.bf16.msra.mxu0 %v1095
      %1118 = vmatprep.subr.bf16.mxu0 0
      %1119 = vmatpush2.bf16.msra.mxu0 0
      %1120 = vmatprep.subr.bf16.mxu0 0
      %1121 = vmatpush2.bf16.msra.mxu0 0
      %1122 = vmatprep.subr.bf16.mxu0 0
      %1123 = vmatpush2.bf16.msra.mxu0 0
      %1124 = vmatprep.subr.bf16.mxu0 0
      %1125 = vmatpush2.bf16.msra.mxu0 0
      %1126 = vmatprep.subr.bf16.mxu0 0
      %1127 = vmatpush2.bf16.msra.mxu0 0
      %1128 = vmatprep.subr.bf16.mxu0 0
      %1129 = vmatpush2.bf16.msra.mxu0 0
      %1130 = vmatprep.subr.bf16.mxu0 0
      %1131 = vmatpush2.bf16.msra.mxu0 0
      %1132 = vmatprep.subr.bf16.mxu0 0
      %1133 = vmatpush2.bf16.msra.mxu0 0
      %1134 = vmatprep.mubr.bf16.mxu0 0
      %1135 = vmatmul.mubr.bf16.gmra.mxu0 %v1100
      %v1136 = vpop.f32.mrf.mxu0
      %v1137 = vadd.f32 0.0, %v1136
      %v1138 = vpop.f32.mrf.mxu0
      %v1139 = vpop.f32.mrf.mxu0
      %v1140 = vpop.f32.mrf.mxu0
      %1141 = vdwg.mxu0
      %v1146 = vunpack.c.l.b16 %v854
      %v1147 = vunpack.c.l.b16 %v855
      %v1148 = vunpack.c.l.b16 %v856
      %v1149 = vunpack.c.l.b16 %v857
      %v1150 = vpack.c.b16 %v1147, %v1146
      %v1151 = vpack.c.b16 %v1149, %v1148
      %v1155 = vsel %vm870, %v974, 0
      %1157 = vmatprep.subr.bf16.mxu0 0
      %1158 = vmatpush1.bf16.msra.mxu0 0
      %1159 = vmatprep.subr.bf16.mxu0 0
      %1160 = vmatpush1.bf16.msra.mxu0 0
      %1161 = vmatprep.subr.bf16.mxu0 0
      %1162 = vmatpush1.bf16.msra.mxu0 0
      %1163 = vmatprep.subr.bf16.mxu0 0
      %1164 = vmatpush1.bf16.msra.mxu0 0
      %1165 = vmatprep.subr.bf16.mxu0 0
      %1166 = vmatpush1.bf16.msra.mxu0 0
      %1167 = vmatprep.subr.bf16.mxu0 0
      %1168 = vmatpush1.bf16.msra.mxu0 0
      %1169 = vmatprep.subr.bf16.mxu0 0
      %1170 = vmatpush1.bf16.msra.mxu0 %v1151
      %1171 = vmatprep.subr.bf16.mxu0 0
      %1172 = vmatpush1.bf16.msra.mxu0 %v1150
      %1173 = vmatprep.subr.bf16.mxu0 0
      %1174 = vmatpush2.bf16.msra.mxu0 0
      %1175 = vmatprep.subr.bf16.mxu0 0
      %1176 = vmatpush2.bf16.msra.mxu0 0
      %1177 = vmatprep.subr.bf16.mxu0 0
      %1178 = vmatpush2.bf16.msra.mxu0 0
      %1179 = vmatprep.subr.bf16.mxu0 0
      %1180 = vmatpush2.bf16.msra.mxu0 0
      %1181 = vmatprep.subr.bf16.mxu0 0
      %1182 = vmatpush2.bf16.msra.mxu0 0
      %1183 = vmatprep.subr.bf16.mxu0 0
      %1184 = vmatpush2.bf16.msra.mxu0 0
      %1185 = vmatprep.subr.bf16.mxu0 0
      %1186 = vmatpush2.bf16.msra.mxu0 0
      %1187 = vmatprep.subr.bf16.mxu0 0
      %1188 = vmatpush2.bf16.msra.mxu0 0
      %1189 = vmatprep.mubr.bf16.mxu0 0
      %1190 = vmatmul.mubr.bf16.gmra.mxu0 %v1155
      %v1191 = vpop.f32.mrf.mxu0
      %v1192 = vadd.f32 %v1137, %v1191
      %v1193 = vpop.f32.mrf.mxu0
      %v1194 = vpop.f32.mrf.mxu0
      %v1195 = vpop.f32.mrf.mxu0
      %1196 = vdwg.mxu0
      %1197 = vrot.lane.b32.xlu0 %v844, 64
      %v1198 = vpop.permute.xlu0 %1197
      %1199 = vrot.lane.b32.xlu0 %v845, 64
      %v1200 = vpop.permute.xlu0 %1199
      %v1202 = vsel %vm870, %v1198, 0
      %v1205 = vsel %vm870, %v1200, 0
      %1207 = vmatprep.subr.bf16.mxu0 0
      %1208 = vmatpush1.bf16.xpose.msra.mxu0 0
      %1209 = vmatprep.subr.bf16.mxu0 0
      %1210 = vmatpush1.bf16.xpose.msra.mxu0 0
      %1211 = vmatprep.subr.bf16.mxu0 0
      %1212 = vmatpush1.bf16.xpose.msra.mxu0 0
      %1213 = vmatprep.subr.bf16.mxu0 0
      %1214 = vmatpush1.bf16.xpose.msra.mxu0 0
      %1215 = vmatprep.subr.bf16.mxu0 0
      %1216 = vmatpush1.bf16.xpose.msra.mxu0 0
      %1217 = vmatprep.subr.bf16.mxu0 0
      %1218 = vmatpush1.bf16.xpose.msra.mxu0 0
      %1219 = vmatprep.subr.bf16.mxu0 0
      %1220 = vmatpush1.bf16.xpose.msra.mxu0 0
      %1221 = vmatprep.subr.bf16.mxu0 0
      %1222 = vmatpush1.bf16.xpose.msra.mxu0 %v1205
      %1223 = vmatprep.subr.bf16.mxu0 0
      %1224 = vmatpush2.bf16.xpose.msra.mxu0 0
      %1225 = vmatprep.subr.bf16.mxu0 0
      %1226 = vmatpush2.bf16.xpose.msra.mxu0 0
      %1227 = vmatprep.subr.bf16.mxu0 0
      %1228 = vmatpush2.bf16.xpose.msra.mxu0 0
      %1229 = vmatprep.subr.bf16.mxu0 0
      %1230 = vmatpush2.bf16.xpose.msra.mxu0 0
      %1231 = vmatprep.subr.bf16.mxu0 0
      %1232 = vmatpush2.bf16.xpose.msra.mxu0 0
      %1233 = vmatprep.subr.bf16.mxu0 0
      %1234 = vmatpush2.bf16.xpose.msra.mxu0 0
      %1235 = vmatprep.subr.bf16.mxu0 0
      %1236 = vmatpush2.bf16.xpose.msra.mxu0 0
      %1237 = vmatprep.subr.bf16.mxu0 0
      %1238 = vmatpush2.bf16.xpose.msra.mxu0 0
      %1239 = vmatprep.mubr.bf16.mxu0 0
      %1240 = vmatmul.mubr.bf16.gmra.mxu0 %v1202
      %v1241 = vpop.f32.mrf.mxu0
      %v1242 = vadd.f32 %v852, %v1241
      %v1243 = vpop.f32.mrf.mxu0
      %v1244 = vpop.f32.mrf.mxu0
      %v1245 = vpop.f32.mrf.mxu0
      %1246 = vdwg.mxu0
      %v1247 = vsel %vm917, %v1242, -inf
      %1248 = vmax.xlane.f32.xlu0 %v1247
      %v1249 = vpop.xlane.xlu0 %1248
      %v1250 = vsub.f32 %v1242, %v1249
      %v1251 = vmul.f32 %v1250, 1.442695
      %v1252 = vpow.pop %v1251
      %v1253 = vsel %vm917, %v1252, 0.0
      %1254 = vadd.xlane.f32.xlu0 %v1253
      %v1255 = vpop.xlane.xlu0 %1254
      %v1256 = vrcp.pop %v1255
      %v1257 = vmul.f32 %v1252, %v1256
      %v1258 = vpack.c.bf16 %v1257, %v1257
      %1259 = vrot.lane.b32.xlu0 %v846, 64
      %v1260 = vpop.permute.xlu0 %1259
      %v1263 = vsel %vm930, %v1258, 0
      %1265 = vmatprep.subr.bf16.mxu0 0
      %1266 = vmatpush1.bf16.msra.mxu0 0
      %1267 = vmatprep.subr.bf16.mxu0 0
      %1268 = vmatpush1.bf16.msra.mxu0 0
      %1269 = vmatprep.subr.bf16.mxu0 0
      %1270 = vmatpush1.bf16.msra.mxu0 0
      %1271 = vmatprep.subr.bf16.mxu0 0
      %1272 = vmatpush1.bf16.msra.mxu0 0
      %1273 = vmatprep.subr.bf16.mxu0 0
      %1274 = vmatpush1.bf16.msra.mxu0 0
      %1275 = vmatprep.subr.bf16.mxu0 0
      %1276 = vmatpush1.bf16.msra.mxu0 0
      %1277 = vmatprep.subr.bf16.mxu0 0
      %1278 = vmatpush1.bf16.msra.mxu0 0
      %1279 = vmatprep.subr.bf16.mxu0 0
      %1280 = vmatpush1.bf16.msra.mxu0 %v1260
      %1281 = vmatprep.subr.bf16.mxu0 0
      %1282 = vmatpush2.bf16.msra.mxu0 0
      %1283 = vmatprep.subr.bf16.mxu0 0
      %1284 = vmatpush2.bf16.msra.mxu0 0
      %1285 = vmatprep.subr.bf16.mxu0 0
      %1286 = vmatpush2.bf16.msra.mxu0 0
      %1287 = vmatprep.subr.bf16.mxu0 0
      %1288 = vmatpush2.bf16.msra.mxu0 0
      %1289 = vmatprep.subr.bf16.mxu0 0
      %1290 = vmatpush2.bf16.msra.mxu0 0
      %1291 = vmatprep.subr.bf16.mxu0 0
      %1292 = vmatpush2.bf16.msra.mxu0 0
      %1293 = vmatprep.subr.bf16.mxu0 0
      %1294 = vmatpush2.bf16.msra.mxu0 0
      %1295 = vmatprep.subr.bf16.mxu0 0
      %1296 = vmatpush2.bf16.msra.mxu0 0
      %1297 = vmatprep.mubr.bf16.mxu0 0
      %1298 = vmatmul.mubr.bf16.gmra.mxu0 %v1263
      %v1299 = vpop.f32.mrf.mxu0
      %v1300 = vadd.f32 0.0, %v1299
      %v1301 = vpop.f32.mrf.mxu0
      %v1302 = vpop.f32.mrf.mxu0
      %v1303 = vpop.f32.mrf.mxu0
      %1304 = vdwg.mxu0
      %v1305 = vpack.c.bf16 %v1300, %v1300
      %v1310 = vunpack.c.l.b16 %v862
      %v1311 = vunpack.c.l.b16 %v863
      %v1312 = vunpack.c.l.b16 %v864
      %v1313 = vunpack.c.l.b16 %v865
      %v1314 = vpack.c.b16 %v1311, %v1310
      %v1315 = vpack.c.b16 %v1313, %v1312
      %v1319 = vsel %vm870, %v1305, 0
      %1321 = vmatprep.subr.bf16.mxu0 0
      %1322 = vmatpush1.bf16.msra.mxu0 0
      %1323 = vmatprep.subr.bf16.mxu0 0
      %1324 = vmatpush1.bf16.msra.mxu0 0
      %1325 = vmatprep.subr.bf16.mxu0 0
      %1326 = vmatpush1.bf16.msra.mxu0 0
      %1327 = vmatprep.subr.bf16.mxu0 0
      %1328 = vmatpush1.bf16.msra.mxu0 0
      %1329 = vmatprep.subr.bf16.mxu0 0
      %1330 = vmatpush1.bf16.msra.mxu0 0
      %1331 = vmatprep.subr.bf16.mxu0 0
      %1332 = vmatpush1.bf16.msra.mxu0 0
      %1333 = vmatprep.subr.bf16.mxu0 0
      %1334 = vmatpush1.bf16.msra.mxu0 %v1315
      %1335 = vmatprep.subr.bf16.mxu0 0
      %1336 = vmatpush1.bf16.msra.mxu0 %v1314
      %1337 = vmatprep.subr.bf16.mxu0 0
      %1338 = vmatpush2.bf16.msra.mxu0 0
      %1339 = vmatprep.subr.bf16.mxu0 0
      %1340 = vmatpush2.bf16.msra.mxu0 0
      %1341 = vmatprep.subr.bf16.mxu0 0
      %1342 = vmatpush2.bf16.msra.mxu0 0
      %1343 = vmatprep.subr.bf16.mxu0 0
      %1344 = vmatpush2.bf16.msra.mxu0 0
      %1345 = vmatprep.subr.bf16.mxu0 0
      %1346 = vmatpush2.bf16.msra.mxu0 0
      %1347 = vmatprep.subr.bf16.mxu0 0
      %1348 = vmatpush2.bf16.msra.mxu0 0
      %1349 = vmatprep.subr.bf16.mxu0 0
      %1350 = vmatpush2.bf16.msra.mxu0 0
      %1351 = vmatprep.subr.bf16.mxu0 0
      %1352 = vmatpush2.bf16.msra.mxu0 0
      %1353 = vmatprep.mubr.bf16.mxu0 0
      %1354 = vmatmul.mubr.bf16.gmra.mxu0 %v1319
      %v1355 = vpop.f32.mrf.mxu0
      %v1356 = vadd.f32 0.0, %v1355
      %v1357 = vpop.f32.mrf.mxu0
      %v1358 = vpop.f32.mrf.mxu0
      %v1359 = vpop.f32.mrf.mxu0
      %1360 = vdwg.mxu0
      %v1361 = vadd.f32 %v1192, %v1356
      %1362 = vrot.lane.b32.xlu0 %v844, 32
      %v1363 = vpop.permute.xlu0 %1362
      %1364 = vrot.lane.b32.xlu0 %v845, 32
      %v1365 = vpop.permute.xlu0 %1364
      %v1367 = vsel %vm870, %v1363, 0
      %v1370 = vsel %vm870, %v1365, 0
      %1372 = vmatprep.subr.bf16.mxu0 0
      %1373 = vmatpush1.bf16.xpose.msra.mxu0 0
      %1374 = vmatprep.subr.bf16.mxu0 0
      %1375 = vmatpush1.bf16.xpose.msra.mxu0 0
      %1376 = vmatprep.subr.bf16.mxu0 0
      %1377 = vmatpush1.bf16.xpose.msra.mxu0 0
      %1378 = vmatprep.subr.bf16.mxu0 0
      %1379 = vmatpush1.bf16.xpose.msra.mxu0 0
      %1380 = vmatprep.subr.bf16.mxu0 0
      %1381 = vmatpush1.bf16.xpose.msra.mxu0 0
      %1382 = vmatprep.subr.bf16.mxu0 0
      %1383 = vmatpush1.bf16.xpose.msra.mxu0 0
      %1384 = vmatprep.subr.bf16.mxu0 0
      %1385 = vmatpush1.bf16.xpose.msra.mxu0 0
      %1386 = vmatprep.subr.bf16.mxu0 0
      %1387 = vmatpush1.bf16.xpose.msra.mxu0 %v1370
      %1388 = vmatprep.subr.bf16.mxu0 0
      %1389 = vmatpush2.bf16.xpose.msra.mxu0 0
      %1390 = vmatprep.subr.bf16.mxu0 0
      %1391 = vmatpush2.bf16.xpose.msra.mxu0 0
      %1392 = vmatprep.subr.bf16.mxu0 0
      %1393 = vmatpush2.bf16.xpose.msra.mxu0 0
      %1394 = vmatprep.subr.bf16.mxu0 0
      %1395 = vmatpush2.bf16.xpose.msra.mxu0 0
      %1396 = vmatprep.subr.bf16.mxu0 0
      %1397 = vmatpush2.bf16.xpose.msra.mxu0 0
      %1398 = vmatprep.subr.bf16.mxu0 0
      %1399 = vmatpush2.bf16.xpose.msra.mxu0 0
      %1400 = vmatprep.subr.bf16.mxu0 0
      %1401 = vmatpush2.bf16.xpose.msra.mxu0 0
      %1402 = vmatprep.subr.bf16.mxu0 0
      %1403 = vmatpush2.bf16.xpose.msra.mxu0 0
      %1404 = vmatprep.mubr.bf16.mxu0 0
      %1405 = vmatmul.mubr.bf16.gmra.mxu0 %v1367
      %v1406 = vpop.f32.mrf.mxu0
      %v1407 = vadd.f32 %v852, %v1406
      %v1408 = vpop.f32.mrf.mxu0
      %v1409 = vpop.f32.mrf.mxu0
      %v1410 = vpop.f32.mrf.mxu0
      %1411 = vdwg.mxu0
      %v1412 = vsel %vm917, %v1407, -inf
      %1413 = vmax.xlane.f32.xlu0 %v1412
      %v1414 = vpop.xlane.xlu0 %1413
      %v1415 = vsub.f32 %v1407, %v1414
      %v1416 = vmul.f32 %v1415, 1.442695
      %v1417 = vpow.pop %v1416
      %v1418 = vsel %vm917, %v1417, 0.0
      %1419 = vadd.xlane.f32.xlu0 %v1418
      %v1420 = vpop.xlane.xlu0 %1419
      %v1421 = vrcp.pop %v1420
      %v1422 = vmul.f32 %v1417, %v1421
      %v1423 = vpack.c.bf16 %v1422, %v1422
      %1424 = vrot.lane.b32.xlu0 %v846, 32
      %v1425 = vpop.permute.xlu0 %1424
      %v1428 = vsel %vm930, %v1423, 0
      %1430 = vmatprep.subr.bf16.mxu0 0
      %1431 = vmatpush1.bf16.msra.mxu0 0
      %1432 = vmatprep.subr.bf16.mxu0 0
      %1433 = vmatpush1.bf16.msra.mxu0 0
      %1434 = vmatprep.subr.bf16.mxu0 0
      %1435 = vmatpush1.bf16.msra.mxu0 0
      %1436 = vmatprep.subr.bf16.mxu0 0
      %1437 = vmatpush1.bf16.msra.mxu0 0
      %1438 = vmatprep.subr.bf16.mxu0 0
      %1439 = vmatpush1.bf16.msra.mxu0 0
      %1440 = vmatprep.subr.bf16.mxu0 0
      %1441 = vmatpush1.bf16.msra.mxu0 0
      %1442 = vmatprep.subr.bf16.mxu0 0
      %1443 = vmatpush1.bf16.msra.mxu0 0
      %1444 = vmatprep.subr.bf16.mxu0 0
      %1445 = vmatpush1.bf16.msra.mxu0 %v1425
      %1446 = vmatprep.subr.bf16.mxu0 0
      %1447 = vmatpush2.bf16.msra.mxu0 0
      %1448 = vmatprep.subr.bf16.mxu0 0
      %1449 = vmatpush2.bf16.msra.mxu0 0
      %1450 = vmatprep.subr.bf16.mxu0 0
      %1451 = vmatpush2.bf16.msra.mxu0 0
      %1452 = vmatprep.subr.bf16.mxu0 0
      %1453 = vmatpush2.bf16.msra.mxu0 0
      %1454 = vmatprep.subr.bf16.mxu0 0
      %1455 = vmatpush2.bf16.msra.mxu0 0
      %1456 = vmatprep.subr.bf16.mxu0 0
      %1457 = vmatpush2.bf16.msra.mxu0 0
      %1458 = vmatprep.subr.bf16.mxu0 0
      %1459 = vmatpush2.bf16.msra.mxu0 0
      %1460 = vmatprep.subr.bf16.mxu0 0
      %1461 = vmatpush2.bf16.msra.mxu0 0
      %1462 = vmatprep.mubr.bf16.mxu0 0
      %1463 = vmatmul.mubr.bf16.gmra.mxu0 %v1428
      %v1464 = vpop.f32.mrf.mxu0
      %v1465 = vadd.f32 0.0, %v1464
      %v1466 = vpop.f32.mrf.mxu0
      %v1467 = vpop.f32.mrf.mxu0
      %v1468 = vpop.f32.mrf.mxu0
      %1469 = vdwg.mxu0
      %v1470 = vpack.c.bf16 %v1465, %v1465
      %v1475 = vunpack.c.l.b16 %v866
      %v1476 = vunpack.c.l.b16 %v867
      %v1477 = vunpack.c.l.b16 %v868
      %v1478 = vunpack.c.l.b16 %v869
      %v1479 = vpack.c.b16 %v1476, %v1475
      %v1480 = vpack.c.b16 %v1478, %v1477
      %v1484 = vsel %vm870, %v1470, 0
      %1486 = vmatprep.subr.bf16.mxu0 0
      %1487 = vmatpush1.bf16.msra.mxu0 0
      %1488 = vmatprep.subr.bf16.mxu0 0
      %1489 = vmatpush1.bf16.msra.mxu0 0
      %1490 = vmatprep.subr.bf16.mxu0 0
      %1491 = vmatpush1.bf16.msra.mxu0 0
      %1492 = vmatprep.subr.bf16.mxu0 0
      %1493 = vmatpush1.bf16.msra.mxu0 0
      %1494 = vmatprep.subr.bf16.mxu0 0
      %1495 = vmatpush1.bf16.msra.mxu0 0
      %1496 = vmatprep.subr.bf16.mxu0 0
      %1497 = vmatpush1.bf16.msra.mxu0 0
      %1498 = vmatprep.subr.bf16.mxu0 0
      %1499 = vmatpush1.bf16.msra.mxu0 %v1480
      %1500 = vmatprep.subr.bf16.mxu0 0
      %1501 = vmatpush1.bf16.msra.mxu0 %v1479
      %1502 = vmatprep.subr.bf16.mxu0 0
      %1503 = vmatpush2.bf16.msra.mxu0 0
      %1504 = vmatprep.subr.bf16.mxu0 0
      %1505 = vmatpush2.bf16.msra.mxu0 0
      %1506 = vmatprep.subr.bf16.mxu0 0
      %1507 = vmatpush2.bf16.msra.mxu0 0
      %1508 = vmatprep.subr.bf16.mxu0 0
      %1509 = vmatpush2.bf16.msra.mxu0 0
      %1510 = vmatprep.subr.bf16.mxu0 0
      %1511 = vmatpush2.bf16.msra.mxu0 0
      %1512 = vmatprep.subr.bf16.mxu0 0
      %1513 = vmatpush2.bf16.msra.mxu0 0
      %1514 = vmatprep.subr.bf16.mxu0 0
      %1515 = vmatpush2.bf16.msra.mxu0 0
      %1516 = vmatprep.subr.bf16.mxu0 0
      %1517 = vmatpush2.bf16.msra.mxu0 0
      %1518 = vmatprep.mubr.bf16.mxu0 0
      %1519 = vmatmul.mubr.bf16.gmra.mxu0 %v1484
      %v1520 = vpop.f32.mrf.mxu0
      %v1521 = vadd.f32 0.0, %v1520
      %v1522 = vpop.f32.mrf.mxu0
      %v1523 = vpop.f32.mrf.mxu0
      %v1524 = vpop.f32.mrf.mxu0
      %1525 = vdwg.mxu0
      %v1526 = vadd.f32 %v1361, %v1521
      %v1527 = vadd.f32 %v545, %v1526
      %v1528 = vld [vmem:[%s10] sm:$0x1]
      %v1530 = vlaneseq
      %v1531 = vshrl.u32 %v1530, 7
      %v1532 = vsub.s32 0, %v1531
      %v1533 = vrot.slane %v1528, %v1532
      %v1535 = vadd.f32 %v1527, %v1533
      %v1536 = vsel %vm548, %v1535, 0.0
      %1537 = vadd.xlane.f32.xlu0 %v1536
      %v1538 = vpop.xlane.xlu0 %1537
      %v1539 = vmul.f32 %v1538, %v552
      %v1540 = vsub.f32 %v1535, %v1539
      %v1541 = vmul.f32 %v1540, %v1540
      %v1542 = vsel %vm548, %v1541, 0.0
      %1543 = vadd.xlane.f32.xlu0 %v1542
      %v1544 = vpop.xlane.xlu0 %1543
      %v1545 = vmul.f32 %v1544, %v552
      %v1546 = vadd.f32 %v1545, 1e-06
      %v1547 = vrsqrt.pop %v1546
      %v1548 = vmul.f32 %v1540, %v1547
      %v1549 = vld [vmem:[%s11] sm:$0x1]
      %v1551 = vlaneseq
      %v1552 = vshrl.u32 %v1551, 7
      %v1553 = vsub.s32 0, %v1552
      %v1554 = vrot.slane %v1549, %v1553
      %v1556 = vmul.f32 %v1548, %v1554
      %v1557 = vld [vmem:[%s12] sm:$0x1]
      %v1559 = vlaneseq
      %v1560 = vshrl.u32 %v1559, 7
      %v1561 = vsub.s32 0, %v1560
      %v1562 = vrot.slane %v1557, %v1561
      %v1564 = vadd.f32 %v1556, %v1562
      %v1565 = vpack.c.bf16 %v1564, %v1564
      %v1566 = vld [vmem:[%s13] sm:$0xff]
      %v1567 = vld [vmem:[%s13 + $0x8] sm:$0xff]
      %v1568 = vld [vmem:[%s13 + $0x10] sm:$0xff]
      %v1569 = vld [vmem:[%s13 + $0x18] sm:$0xff]
      %v1570 = vld [vmem:[%s13 + $0x20] sm:$0xff]
      %v1571 = vld [vmem:[%s13 + $0x28] sm:$0xff]
      %v1572 = vld [vmem:[%s13 + $0x30] sm:$0xff]
      %v1573 = vld [vmem:[%s13 + $0x38] sm:$0xff]
      %v1574 = vld [vmem:[%s13 + $0x40] sm:$0xff]
      %v1575 = vld [vmem:[%s13 + $0x48] sm:$0xff]
      %v1576 = vld [vmem:[%s13 + $0x50] sm:$0xff]
      %v1577 = vld [vmem:[%s13 + $0x58] sm:$0xff]
      %v1578 = vld [vmem:[%s13 + $0x60] sm:$0xff]
      %v1579 = vld [vmem:[%s13 + $0x68] sm:$0xff]
      %v1580 = vld [vmem:[%s13 + $0x70] sm:$0xff]
      %v1581 = vld [vmem:[%s13 + $0x78] sm:$0xff]
      %v1582 = vld [vmem:[%s14] sm:$0x3]
      %v1584 = vlaneseq
      %v1585 = vshrl.u32 %v1584, 7
      %v1586 = vsub.s32 0, %v1585
      %v1587 = vrot.slane %v1582, %v1586
      %v1588 = vlaneseq
      %v1589 = vshrl.u32 %v1588, 7
      %v1590 = vsub.s32 1, %v1589
      %v1591 = vrot.slane %v1582, %v1590
      %v1610 = vunpack.c.l.b16 %v1566
      %v1611 = vunpack.c.h.b16 %v1566
      %v1612 = vunpack.c.l.b16 %v1567
      %v1613 = vunpack.c.h.b16 %v1567
      %v1614 = vunpack.c.l.b16 %v1568
      %v1615 = vunpack.c.h.b16 %v1568
      %v1616 = vunpack.c.l.b16 %v1569
      %v1617 = vunpack.c.h.b16 %v1569
      %v1618 = vunpack.c.l.b16 %v1570
      %v1619 = vunpack.c.h.b16 %v1570
      %v1620 = vunpack.c.l.b16 %v1571
      %v1621 = vunpack.c.h.b16 %v1571
      %v1622 = vunpack.c.l.b16 %v1572
      %v1623 = vunpack.c.h.b16 %v1572
      %v1624 = vunpack.c.l.b16 %v1573
      %v1625 = vunpack.c.h.b16 %v1573
      %v1626 = vunpack.c.l.b16 %v1574
      %v1627 = vunpack.c.h.b16 %v1574
      %v1628 = vunpack.c.l.b16 %v1575
      %v1629 = vunpack.c.h.b16 %v1575
      %v1630 = vunpack.c.l.b16 %v1576
      %v1631 = vunpack.c.h.b16 %v1576
      %v1632 = vunpack.c.l.b16 %v1577
      %v1633 = vunpack.c.h.b16 %v1577
      %v1634 = vunpack.c.l.b16 %v1578
      %v1635 = vunpack.c.h.b16 %v1578
      %v1636 = vunpack.c.l.b16 %v1579
      %v1637 = vunpack.c.h.b16 %v1579
      %v1638 = vunpack.c.l.b16 %v1580
      %v1639 = vunpack.c.h.b16 %v1580
      %v1640 = vunpack.c.l.b16 %v1581
      %v1641 = vunpack.c.h.b16 %v1581
      %v1642 = vpack.c.b16 %v1612, %v1610
      %v1643 = vpack.c.b16 %v1613, %v1611
      %v1644 = vpack.c.b16 %v1616, %v1614
      %v1645 = vpack.c.b16 %v1617, %v1615
      %v1646 = vpack.c.b16 %v1620, %v1618
      %v1647 = vpack.c.b16 %v1621, %v1619
      %v1648 = vpack.c.b16 %v1624, %v1622
      %v1649 = vpack.c.b16 %v1625, %v1623
      %v1650 = vpack.c.b16 %v1628, %v1626
      %v1651 = vpack.c.b16 %v1629, %v1627
      %v1652 = vpack.c.b16 %v1632, %v1630
      %v1653 = vpack.c.b16 %v1633, %v1631
      %v1654 = vpack.c.b16 %v1636, %v1634
      %v1655 = vpack.c.b16 %v1637, %v1635
      %v1656 = vpack.c.b16 %v1640, %v1638
      %v1657 = vpack.c.b16 %v1641, %v1639
      %1674 = vmatprep.subr.bf16.mxu0 %v1657
      %1675 = vmatpush1.bf16.msra.mxu0 %v1656
      %1676 = vmatprep.subr.bf16.mxu0 %v1655
      %1677 = vmatpush1.bf16.msra.mxu0 %v1654
      %1678 = vmatprep.subr.bf16.mxu0 %v1653
      %1679 = vmatpush1.bf16.msra.mxu0 %v1652
      %1680 = vmatprep.subr.bf16.mxu0 %v1651
      %1681 = vmatpush1.bf16.msra.mxu0 %v1650
      %1682 = vmatprep.subr.bf16.mxu0 %v1649
      %1683 = vmatpush1.bf16.msra.mxu0 %v1648
      %1684 = vmatprep.subr.bf16.mxu0 %v1647
      %1685 = vmatpush1.bf16.msra.mxu0 %v1646
      %1686 = vmatprep.subr.bf16.mxu0 %v1645
      %1687 = vmatpush1.bf16.msra.mxu0 %v1644
      %1688 = vmatprep.subr.bf16.mxu0 %v1643
      %1689 = vmatpush1.bf16.msra.mxu0 %v1642
      %1690 = vmatprep.subr.bf16.mxu0 0
      %1691 = vmatpush2.bf16.msra.mxu0 0
      %1692 = vmatprep.subr.bf16.mxu0 0
      %1693 = vmatpush2.bf16.msra.mxu0 0
      %1694 = vmatprep.subr.bf16.mxu0 0
      %1695 = vmatpush2.bf16.msra.mxu0 0
      %1696 = vmatprep.subr.bf16.mxu0 0
      %1697 = vmatpush2.bf16.msra.mxu0 0
      %1698 = vmatprep.subr.bf16.mxu0 0
      %1699 = vmatpush2.bf16.msra.mxu0 0
      %1700 = vmatprep.subr.bf16.mxu0 0
      %1701 = vmatpush2.bf16.msra.mxu0 0
      %1702 = vmatprep.subr.bf16.mxu0 0
      %1703 = vmatpush2.bf16.msra.mxu0 0
      %1704 = vmatprep.subr.bf16.mxu0 0
      %1705 = vmatpush2.bf16.msra.mxu0 0
      %1706 = vmatprep.mubr.bf16.mxu0 0
      %1707 = vmatmul.mubr.bf16.gmra.mxu0 %v1565
      %v1708 = vpop.f32.mrf.mxu0
      %v1709 = vadd.f32 %v1587, %v1708
      %v1710 = vpop.f32.mrf.mxu0
      %v1711 = vadd.f32 %v1591, %v1710
      %v1712 = vpop.f32.mrf.mxu0
      %v1713 = vpop.f32.mrf.mxu0
      %1714 = vdwg.mxu0
      %v1715 = vmax.f32 %v1709, 0.0
      %v1716 = vmax.f32 %v1711, 0.0
      %v1717 = vpack.c.bf16 %v1715, %v1715
      %v1718 = vpack.c.bf16 %v1716, %v1716
      %v1719 = vld [vmem:[%s15] sm:$0xf]
      %v1720 = vld [vmem:[%s15 + $0x4] sm:$0xf]
      %v1721 = vld [vmem:[%s15 + $0x8] sm:$0xf]
      %v1722 = vld [vmem:[%s15 + $0xc] sm:$0xf]
      %v1723 = vld [vmem:[%s15 + $0x10] sm:$0xf]
      %v1724 = vld [vmem:[%s15 + $0x14] sm:$0xf]
      %v1725 = vld [vmem:[%s15 + $0x18] sm:$0xf]
      %v1726 = vld [vmem:[%s15 + $0x1c] sm:$0xf]
      %v1727 = vld [vmem:[%s15 + $0x20] sm:$0xf]
      %v1728 = vld [vmem:[%s15 + $0x24] sm:$0xf]
      %v1729 = vld [vmem:[%s15 + $0x28] sm:$0xf]
      %v1730 = vld [vmem:[%s15 + $0x2c] sm:$0xf]
      %v1731 = vld [vmem:[%s15 + $0x30] sm:$0xf]
      %v1732 = vld [vmem:[%s15 + $0x34] sm:$0xf]
      %v1733 = vld [vmem:[%s15 + $0x38] sm:$0xf]
      %v1734 = vld [vmem:[%s15 + $0x3c] sm:$0xf]
      %v1735 = vld [vmem:[%s15 + $0x40] sm:$0xf]
      %v1736 = vld [vmem:[%s15 + $0x44] sm:$0xf]
      %v1737 = vld [vmem:[%s15 + $0x48] sm:$0xf]
      %v1738 = vld [vmem:[%s15 + $0x4c] sm:$0xf]
      %v1739 = vld [vmem:[%s15 + $0x50] sm:$0xf]
      %v1740 = vld [vmem:[%s15 + $0x54] sm:$0xf]
      %v1741 = vld [vmem:[%s15 + $0x58] sm:$0xf]
      %v1742 = vld [vmem:[%s15 + $0x5c] sm:$0xf]
      %v1743 = vld [vmem:[%s15 + $0x60] sm:$0xf]
      %v1744 = vld [vmem:[%s15 + $0x64] sm:$0xf]
      %v1745 = vld [vmem:[%s15 + $0x68] sm:$0xf]
      %v1746 = vld [vmem:[%s15 + $0x6c] sm:$0xf]
      %v1747 = vld [vmem:[%s15 + $0x70] sm:$0xf]
      %v1748 = vld [vmem:[%s15 + $0x74] sm:$0xf]
      %v1749 = vld [vmem:[%s15 + $0x78] sm:$0xf]
      %v1750 = vld [vmem:[%s15 + $0x7c] sm:$0xf]
      %v1783 = vunpack.c.l.b16 %v1719
      %v1784 = vunpack.c.l.b16 %v1720
      %v1785 = vunpack.c.l.b16 %v1721
      %v1786 = vunpack.c.l.b16 %v1722
      %v1787 = vunpack.c.l.b16 %v1723
      %v1788 = vunpack.c.l.b16 %v1724
      %v1789 = vunpack.c.l.b16 %v1725
      %v1790 = vunpack.c.l.b16 %v1726
      %v1791 = vunpack.c.l.b16 %v1727
      %v1792 = vunpack.c.l.b16 %v1728
      %v1793 = vunpack.c.l.b16 %v1729
      %v1794 = vunpack.c.l.b16 %v1730
      %v1795 = vunpack.c.l.b16 %v1731
      %v1796 = vunpack.c.l.b16 %v1732
      %v1797 = vunpack.c.l.b16 %v1733
      %v1798 = vunpack.c.l.b16 %v1734
      %v1799 = vunpack.c.l.b16 %v1735
      %v1800 = vunpack.c.l.b16 %v1736
      %v1801 = vunpack.c.l.b16 %v1737
      %v1802 = vunpack.c.l.b16 %v1738
      %v1803 = vunpack.c.l.b16 %v1739
      %v1804 = vunpack.c.l.b16 %v1740
      %v1805 = vunpack.c.l.b16 %v1741
      %v1806 = vunpack.c.l.b16 %v1742
      %v1807 = vunpack.c.l.b16 %v1743
      %v1808 = vunpack.c.l.b16 %v1744
      %v1809 = vunpack.c.l.b16 %v1745
      %v1810 = vunpack.c.l.b16 %v1746
      %v1811 = vunpack.c.l.b16 %v1747
      %v1812 = vunpack.c.l.b16 %v1748
      %v1813 = vunpack.c.l.b16 %v1749
      %v1814 = vunpack.c.l.b16 %v1750
      %v1815 = vpack.c.b16 %v1784, %v1783
      %v1816 = vpack.c.b16 %v1786, %v1785
      %v1817 = vpack.c.b16 %v1788, %v1787
      %v1818 = vpack.c.b16 %v1790, %v1789
      %v1819 = vpack.c.b16 %v1792, %v1791
      %v1820 = vpack.c.b16 %v1794, %v1793
      %v1821 = vpack.c.b16 %v1796, %v1795
      %v1822 = vpack.c.b16 %v1798, %v1797
      %v1823 = vpack.c.b16 %v1800, %v1799
      %v1824 = vpack.c.b16 %v1802, %v1801
      %v1825 = vpack.c.b16 %v1804, %v1803
      %v1826 = vpack.c.b16 %v1806, %v1805
      %v1827 = vpack.c.b16 %v1808, %v1807
      %v1828 = vpack.c.b16 %v1810, %v1809
      %v1829 = vpack.c.b16 %v1812, %v1811
      %v1830 = vpack.c.b16 %v1814, %v1813
      %1847 = vmatprep.subr.bf16.mxu0 0
      %1848 = vmatpush1.bf16.msra.mxu0 %v1822
      %1849 = vmatprep.subr.bf16.mxu0 0
      %1850 = vmatpush1.bf16.msra.mxu0 %v1821
      %1851 = vmatprep.subr.bf16.mxu0 0
      %1852 = vmatpush1.bf16.msra.mxu0 %v1820
      %1853 = vmatprep.subr.bf16.mxu0 0
      %1854 = vmatpush1.bf16.msra.mxu0 %v1819
      %1855 = vmatprep.subr.bf16.mxu0 0
      %1856 = vmatpush1.bf16.msra.mxu0 %v1818
      %1857 = vmatprep.subr.bf16.mxu0 0
      %1858 = vmatpush1.bf16.msra.mxu0 %v1817
      %1859 = vmatprep.subr.bf16.mxu0 0
      %1860 = vmatpush1.bf16.msra.mxu0 %v1816
      %1861 = vmatprep.subr.bf16.mxu0 0
      %1862 = vmatpush1.bf16.msra.mxu0 %v1815
      %1863 = vmatprep.subr.bf16.mxu0 0
      %1864 = vmatpush2.bf16.msra.mxu0 %v1830
      %1865 = vmatprep.subr.bf16.mxu0 0
      %1866 = vmatpush2.bf16.msra.mxu0 %v1829
      %1867 = vmatprep.subr.bf16.mxu0 0
      %1868 = vmatpush2.bf16.msra.mxu0 %v1828
      %1869 = vmatprep.subr.bf16.mxu0 0
      %1870 = vmatpush2.bf16.msra.mxu0 %v1827
      %1871 = vmatprep.subr.bf16.mxu0 0
      %1872 = vmatpush2.bf16.msra.mxu0 %v1826
      %1873 = vmatprep.subr.bf16.mxu0 0
      %1874 = vmatpush2.bf16.msra.mxu0 %v1825
      %1875 = vmatprep.subr.bf16.mxu0 0
      %1876 = vmatpush2.bf16.msra.mxu0 %v1824
      %1877 = vmatprep.subr.bf16.mxu0 0
      %1878 = vmatpush2.bf16.msra.mxu0 %v1823
      %1879 = vmatprep.mubr.bf16.mxu0 %v1718
      %1880 = vmatmul.mubr.bf16.gmra.mxu0 %v1717
      %v1881 = vpop.f32.mrf.mxu0
      %v1882 = vadd.f32 0.0, %v1881
      %v1883 = vpop.f32.mrf.mxu0
      %v1884 = vpop.f32.mrf.mxu0
      %v1885 = vpop.f32.mrf.mxu0
      %1886 = vdwg.mxu0
      %v1887 = vadd.f32 %v1535, %v1882
      %v1888 = vld [vmem:[%s16] sm:$0x1]
      %v1890 = vlaneseq
      %v1891 = vshrl.u32 %v1890, 7
      %v1892 = vsub.s32 0, %v1891
      %v1893 = vrot.slane %v1888, %v1892
      %v1895 = vadd.f32 %v1887, %v1893
      %1896 = vst [vmem:[%s543] sm:$0x3] %v1895
      %p1897 = scmp.lt.s32.totalorder %s28, 1
      %s1898 = scalar_select %p1897, %s28, 1
      %s1899 = smul.addr %s1898, 2
      %s1900 = scalar_lea.vmem %s17, %s1899
      // Predicated region
      $region89: #{kgmodel_vwmha_forward.9} parent=87 // pred_check
        %p1901 = pneg %p408
      $region90: #{kgmodel_vwmha_forward.9} parent=87 // pred_check_branch
        %1903 = sbr.rel (%p1901) target = $region92
      $region91: #{kgmodel_vwmha_forward.9} parent=87 // pred_region
        _
      $region92: #{kgmodel_vwmha_forward.9} parent=87 // pred_fallthru
        _
    $region88: #{kgmodel_vwmha_forward.9} parent=5 // pred_fallthru
      _
    %p1904 = scmp.le.s32.totalorder 2, %s23
    // Predicated region
    $region93: #{kgmodel_vwmha_forward.9} parent=5 // pred_check
      %p1905 = pneg %p1904
    $region94: #{kgmodel_vwmha_forward.9} parent=5 // pred_check_branch
      %1907 = sbr.rel (%p1905) target = $region96
    $region95: #{kgmodel_vwmha_forward.9} parent=5 // pred_region
      %s1908 = ssub.s32 %s23, 2
      // Predicated region
      $region97: #{kgmodel_vwmha_forward.9} parent=95 // pred_check
        %p1909 = pneg %p414
      $region98: #{kgmodel_vwmha_forward.9} parent=95 // pred_check_branch
        %1911 = sbr.rel (%p1909) target = $region100
      $region99: #{kgmodel_vwmha_forward.9} parent=95 // pred_region
        %p1912 = scmp.lt.s32.totalorder %s29, 1
        %s1913 = scalar_select %p1912, %s29, 1
        %s1914 = smul.addr %s1913, 2
        %s1915 = scalar_lea.vmem %s17, %s1914
      $region100: #{kgmodel_vwmha_forward.9} parent=95 // pred_fallthru
        _
    $region96: #{kgmodel_vwmha_forward.9} parent=5 // pred_fallthru
      _
  $region6: #{kgmodel_vwmha_forward.9} parent=0 // loop_footer
    %s27 = sadd.s32 1, %s23
  $region7: #{kgmodel_vwmha_forward.9} parent=0 // loop_footer_branch
    %22 = sbr.rel target = $region3
  $region8: #{kgmodel_vwmha_forward.9} parent=0 // loop_exit
    _

</llo_original>
